<compile_context>
chip_gen: v7x
topology: tpu7x:2x2x1
jax: 0.10.0
libtpu: 0.0.40
codegen_flags: <defaults>
</compile_context>

<pallas_src>
import numpy as np
import jax
import jax.numpy as jnp
from jax import lax
from jax.experimental import pallas as pl
from jax.experimental.pallas import tpu as pltpu

_EPS = 1e-5

_TAPS_W = ((0, -1), (0, 0), (0, 1))      # (1,3) conv, padding (0,1)
_TAPS_H = ((-1, 0), (0, 0), (1, 0))      # (3,1) conv, padding (1,0)
_TAPS_33 = tuple((dh, dw) for dh in (-1, 0, 1) for dw in (-1, 0, 1))   # 3x3, padding (1,1)
_OFF_TAPS = tuple(t for t in _TAPS_33 if t != (0, 0))                  # 8 non-center taps


def _make_kernel(H, W, widths):
    c1, c2r, c2, c3r, c3, c4 = widths
    cf = c1 + c2r + c3r                                    # fused 1x1 output width
    st_seg = (cf, c2, c2, c3, c3, c3, c4)                  # fused, b2a, b2b, b33, b3a, b3b, b4
    st_off = tuple(int(v) for v in np.cumsum((0,) + st_seg))
    out_seg = (c1, c2, c2, c3, c3, c4)                     # out1, x21, x22, x31, x32, out4
    o_off = tuple(int(v) for v in np.cumsum((0,) + out_seg))

    def kernel(x_ref, msk_ref, wf_ref, w2a_ref, w2b_ref, w33_ref,
               w3a_ref, w3b_ref, w4_ref, st_ref, o_ref):
        M = x_ref.shape[0]
        x = x_ref[...]                                     # (M, Cin) f32, rows = (b, h, w)
        msk = msk_ref[...]                                 # (M, 8) f32 per-tap row validity
        mcols = {t: msk[:, j:j + 1] for j, t in enumerate(_OFF_TAPS)}

        def rolled(v, dh, dw):
            # shifted[r] = v[r + dh*W + dw]  (== np.roll(v, -delta)); rows whose source is
            # out of the image (incl. wrap-around) are always masked out by the caller.
            delta = dh * W + dw
            return pltpu.roll(v, (-delta) % M, axis=0) if delta else v

        def shift0(v, dh, dw):
            # zero-padded spatial shift for conv im2col patches
            if dh == 0 and dw == 0:
                return v
            return mcols[(dh, dw)] * rolled(v, dh, dw)

        def patches(v, taps):
            # im2col along the lane axis (fine for these narrow demo channels);
            # at production widths (C >= 128) prefer per-tap accumulation:
            #   y += dot(shift0(v, dh, dw), W_tap)
            return jnp.concatenate([shift0(v, dh, dw) for dh, dw in taps], axis=-1)

        def cbr(inp, w_ref, seg):
            # Conv as one bf16 MXU matmul + folded eval-mode BatchNorm + ReLU6 (f32 epilogue)
            lo, hi = st_off[seg], st_off[seg + 1]
            y = jnp.dot(inp.astype(jnp.bfloat16), w_ref[...],
                        preferred_element_type=jnp.float32)
            y = y * st_ref[0:1, lo:hi] + st_ref[1:2, lo:hi]
            return jnp.clip(y, 0.0, 6.0)

        # fused 1x1 convs: branch1 | branch2-reduce | branch3-reduce in one matmul
        y0 = cbr(x, wf_ref, 0)
        o_ref[:, o_off[0]:o_off[1]] = y0[:, 0:c1]                              # out1
        x2 = y0[:, c1:c1 + c2r]
        x3r = y0[:, c1 + c2r:cf]

        # branch 2: (1,3) and (3,1)
        o_ref[:, o_off[1]:o_off[2]] = cbr(patches(x2, _TAPS_W), w2a_ref, 1)    # x21
        o_ref[:, o_off[2]:o_off[3]] = cbr(patches(x2, _TAPS_H), w2b_ref, 2)    # x22

        # branch 3: 3x3 then (3,1) and (1,3)
        x3 = cbr(patches(x3r, _TAPS_33), w33_ref, 3)
        o_ref[:, o_off[3]:o_off[4]] = cbr(patches(x3, _TAPS_H), w3a_ref, 4)    # x31
        o_ref[:, o_off[4]:o_off[5]] = cbr(patches(x3, _TAPS_W), w3b_ref, 5)    # x32

        # branch 4: 3x3/s1 maxpool (PyTorch -inf padding; center tap always valid) -> 1x1
        neg = jnp.float32(-1e30)
        pooled = x
        for dh, dw in _OFF_TAPS:
            cand = jnp.where(mcols[(dh, dw)] > 0.0, rolled(x, dh, dw), neg)
            pooled = jnp.maximum(pooled, cand)
        o_ref[:, o_off[5]:o_off[6]] = cbr(pooled, w4_ref, 6)                   # out4

    return kernel


def _make_tap_masks(H, W, TB):
    """(TB*H*W, 8) f32 validity mask per non-center tap; pattern repeats per image."""
    HW = H * W
    cols = np.zeros((HW, len(_OFF_TAPS)), np.float32)
    for j, (dh, dw) in enumerate(_OFF_TAPS):
        for h in range(H):
            for w in range(W):
                if 0 <= h + dh < H and 0 <= w + dw < W:
                    cols[h * W + w, j] = 1.0
    return jnp.asarray(np.tile(cols, (TB, 1)))


def _make_conv_bn(key, cin, cout, kh, kw):
    k = jax.random.split(key, 6)
    fan_in = cin * kh * kw
    return {
        "w": jax.random.normal(k[0], (cout, cin, kh, kw), jnp.float32) / np.sqrt(fan_in),
        "b": 0.1 * jax.random.normal(k[1], (cout,), jnp.float32),
        "gamma": 1.0 + 0.1 * jax.random.normal(k[2], (cout,), jnp.float32),
        "beta": 0.1 * jax.random.normal(k[3], (cout,), jnp.float32),
        "mean": 0.1 * jax.random.normal(k[4], (cout,), jnp.float32),
        "var": jnp.abs(1.0 + 0.1 * jax.random.normal(k[5], (cout,), jnp.float32)),
    }


def _flat_w(w):
    # (O, I, KH, KW) -> (KH*KW*I, O): tap-major / input-channel-minor along K,
    # matching the in-kernel patch concatenation order.
    o, i, kh, kw = w.shape
    return jnp.transpose(w, (2, 3, 1, 0)).reshape(kh * kw * i, o)


def _fold(p):
    # Conv bias + eval-mode BatchNorm folded into a per-channel scale/shift pair.
    scale = p["gamma"] / jnp.sqrt(p["var"] + _EPS)
    shift = p["beta"] + (p["b"] - p["mean"]) * scale
    return jnp.stack([scale, shift], axis=0)   # (2, O)


def init_params(key, in_channels, c1, c2r, c2, c3r, c3, c4):
    shapes = {
        "b1": (in_channels, c1, 1, 1),
        "b2r": (in_channels, c2r, 1, 1),
        "b2a": (c2r, c2, 1, 3),
        "b2b": (c2r, c2, 3, 1),
        "b3r": (in_channels, c3r, 1, 1),
        "b33": (c3r, c3, 3, 3),
        "b3a": (c3, c3, 3, 1),
        "b3b": (c3, c3, 1, 3),
        "b4": (in_channels, c4, 1, 1),
    }
    keys = jax.random.split(key, len(shapes))
    raw = {name: _make_conv_bn(k, ci, co, kh, kw)
           for k, (name, (ci, co, kh, kw)) in zip(keys, shapes.items())}

    bf = jnp.bfloat16
    kp = {
        # fused 1x1: [branch1 | branch2-reduce | branch3-reduce] along the output axis
        "wf": jnp.concatenate([_flat_w(raw["b1"]["w"]), _flat_w(raw["b2r"]["w"]),
                               _flat_w(raw["b3r"]["w"])], axis=1).astype(bf),
        "w2a": _flat_w(raw["b2a"]["w"]).astype(bf),
        "w2b": _flat_w(raw["b2b"]["w"]).astype(bf),
        "w33": _flat_w(raw["b33"]["w"]).astype(bf),
        "w3a": _flat_w(raw["b3a"]["w"]).astype(bf),
        "w3b": _flat_w(raw["b3b"]["w"]).astype(bf),
        "w4": _flat_w(raw["b4"]["w"]).astype(bf),
        # packed BN scale/shift (f32): [b1|b2r|b3r | b2a | b2b | b33 | b3a | b3b | b4]
        "st": jnp.concatenate(
            [_fold(raw[n]) for n in
             ("b1", "b2r", "b3r", "b2a", "b2b", "b33", "b3a", "b3b", "b4")], axis=1),
    }
    return raw, kp


def _pick_tb(N, HW, target_rows=1024):
    # Keep >= 2 grid steps when N allows (v7x has 2 TensorCores) while making the per-step
    # row block as large as the target allows (amortizes per-step overhead on v5e/v6e).
    cap = max(1, min(N // 2 if N >= 2 else 1, max(1, target_rows // HW)))
    tb = 1
    for d in range(1, cap + 1):
        if N % d == 0:
            tb = d
    return tb


def inception_c_forward(x_nchw, kp, widths):
    c1, c2r, c2, c3r, c3, c4 = widths
    N, Cin, H, W = x_nchw.shape
    HW = H * W
    TB = _pick_tb(N, HW)
    M = TB * HW
    assert M % 8 == 0, "row block must stay sublane-aligned"
    cout = c1 + 2 * c2 + 2 * c3 + c4

    xf = jnp.transpose(x_nchw, (0, 2, 3, 1)).reshape(N * HW, Cin).astype(jnp.float32)
    msk = _make_tap_masks(H, W, TB)
    kernel = _make_kernel(H, W, widths)

    weight_args = [kp[n] for n in ("wf", "w2a", "w2b", "w33", "w3a", "w3b", "w4")]

    def const_spec(arr):
        # grid-invariant operand: constant index map -> DMA'd once. Small at demo size;
        # at production widths use pipeline_mode=pl.Buffered(1) / stage once into scratch.
        return pl.BlockSpec(arr.shape, lambda n: (0, 0))

    in_specs = ([pl.BlockSpec((M, Cin), lambda n: (n, 0)), const_spec(msk)]
                + [const_spec(a) for a in weight_args]
                + [const_spec(kp["st"])])

    out = pl.pallas_call(
        kernel,
        out_shape=jax.ShapeDtypeStruct((N * HW, cout), jnp.float32),
        grid_spec=pltpu.PrefetchScalarGridSpec(
            num_scalar_prefetch=0,
            grid=(N // TB,),
            in_specs=in_specs,
            out_specs=pl.BlockSpec((M, cout), lambda n: (n, 0)),
        ),
        compiler_params=pltpu.CompilerParams(
            dimension_semantics=("parallel",),
            vmem_limit_bytes=32 * 1024 * 1024,
        ),
    )(xf, msk, *weight_args, kp["st"])

    return jnp.transpose(out.reshape(N, H, W, cout), (0, 3, 1, 2))   # back to NCHW


def reference_forward(x, raw):
    # Independent pure-JAX (f32) reference: lax convolutions + reduce_window.
    def cbr(v, p, pad):
        y = lax.conv_general_dilated(v, p["w"], (1, 1), pad,
                                     dimension_numbers=("NCHW", "OIHW", "NCHW"))
        y = y + p["b"][None, :, None, None]
        s = p["gamma"] / jnp.sqrt(p["var"] + _EPS)
        y = (y - p["mean"][None, :, None, None]) * s[None, :, None, None] \
            + p["beta"][None, :, None, None]
        return jnp.clip(y, 0.0, 6.0)

    out1 = cbr(x, raw["b1"], [(0, 0), (0, 0)])
    x2 = cbr(x, raw["b2r"], [(0, 0), (0, 0)])
    x21 = cbr(x2, raw["b2a"], [(0, 0), (1, 1)])
    x22 = cbr(x2, raw["b2b"], [(1, 1), (0, 0)])
    x3 = cbr(cbr(x, raw["b3r"], [(0, 0), (0, 0)]), raw["b33"], [(1, 1), (1, 1)])
    x31 = cbr(x3, raw["b3a"], [(1, 1), (0, 0)])
    x32 = cbr(x3, raw["b3b"], [(0, 0), (1, 1)])
    pooled = lax.reduce_window(x, -jnp.inf, lax.max, (1, 1, 3, 3), (1, 1, 1, 1),
                               [(0, 0), (0, 0), (1, 1), (1, 1)])
    out4 = cbr(pooled, raw["b4"], [(0, 0), (0, 0)])
    return jnp.concatenate([out1, x21, x22, x31, x32, out4], axis=1)


if __name__ == "__main__":
    # Small demo shapes; branch widths chosen so the concatenated output is 128 channels
    # (lane-dense output block). 8x8 spatial matches the real Module-C feature map size.
    N, Cin, H, W = 2, 64, 8, 8
    widths = (16, 16, 24, 16, 24, 16)   # c1, c2r, c2, c3r, c3, c4  -> Cout = 128

    key = jax.random.PRNGKey(0)
    kx, kparam = jax.random.split(key)
    x = jax.random.normal(kx, (N, Cin, H, W), jnp.float32)   # NCHW (PyTorch convention)

    raw, kp = init_params(kparam, Cin, *widths)

    out = jax.block_until_ready(inception_c_forward(x, kp, widths))
    ref = jax.block_until_ready(reference_forward(x, raw))
    # Kernel uses bf16 MXU operands with f32 accumulation/epilogue; reference is pure f32,
    # so the tolerance accounts for bf16 rounding compounding through the 3-conv branch.
    np.testing.assert_allclose(np.asarray(out), np.asarray(ref), rtol=5e-2, atol=5e-2)

    print("KERNEL_OK")
</pallas_src>

<mosaic_0001>
module attributes {stable_mosaic.version = 11 : i64} {
  func.func @kernel(%arg0: i32, %arg1: memref<64x64xf32, #tpu.memory_space<vmem>>, %arg2: memref<64x8xf32, #tpu.memory_space<vmem>>, %arg3: memref<64x48xbf16, #tpu.memory_space<vmem>>, %arg4: memref<48x24xbf16, #tpu.memory_space<vmem>>, %arg5: memref<48x24xbf16, #tpu.memory_space<vmem>>, %arg6: memref<144x24xbf16, #tpu.memory_space<vmem>>, %arg7: memref<72x24xbf16, #tpu.memory_space<vmem>>, %arg8: memref<72x24xbf16, #tpu.memory_space<vmem>>, %arg9: memref<64x16xbf16, #tpu.memory_space<vmem>>, %arg10: memref<2x184xf32, #tpu.memory_space<vmem>>, %arg11: memref<64x128xf32, #tpu.memory_space<vmem>>) attributes {dimension_semantics = [#tpu.dimension_semantics<parallel>], iteration_bounds = array<i64: 2>, scalar_prefetch = 0 : i64, scratch_operands = 0 : i64, tpu.core_type = #tpu.core_type<tc>, window_params = [{transform_indices = @transform_0, window_bounds = array<i64: 64, 64>}, {pipeline_mode = #tpu.pipeline_mode<synchronous>, transform_indices = @transform_1, window_bounds = array<i64: 64, 8>}, {pipeline_mode = #tpu.pipeline_mode<synchronous>, transform_indices = @transform_2, window_bounds = array<i64: 64, 48>}, {pipeline_mode = #tpu.pipeline_mode<synchronous>, transform_indices = @transform_3, window_bounds = array<i64: 48, 24>}, {pipeline_mode = #tpu.pipeline_mode<synchronous>, transform_indices = @transform_4, window_bounds = array<i64: 48, 24>}, {pipeline_mode = #tpu.pipeline_mode<synchronous>, transform_indices = @transform_5, window_bounds = array<i64: 144, 24>}, {pipeline_mode = #tpu.pipeline_mode<synchronous>, transform_indices = @transform_6, window_bounds = array<i64: 72, 24>}, {pipeline_mode = #tpu.pipeline_mode<synchronous>, transform_indices = @transform_7, window_bounds = array<i64: 72, 24>}, {pipeline_mode = #tpu.pipeline_mode<synchronous>, transform_indices = @transform_8, window_bounds = array<i64: 64, 16>}, {pipeline_mode = #tpu.pipeline_mode<synchronous>, transform_indices = @transform_9, window_bounds = array<i64: 2, 184>}, {transform_indices = @transform_10, window_bounds = array<i64: 64, 128>}]} {
    %c0 = arith.constant 0 : index
    %c0_0 = arith.constant 0 : index
    %0 = vector.load %arg1[%c0, %c0_0] : memref<64x64xf32, #tpu.memory_space<vmem>>, vector<64x64xf32>
    %c0_1 = arith.constant 0 : index
    %c0_2 = arith.constant 0 : index
    %1 = vector.load %arg2[%c0_1, %c0_2] : memref<64x8xf32, #tpu.memory_space<vmem>>, vector<64x8xf32>
    %2 = vector.extract_strided_slice %1 {offsets = [0, 0], sizes = [64, 1], strides = [1, 1]} : vector<64x8xf32> to vector<64x1xf32>
    %3 = vector.extract_strided_slice %1 {offsets = [0, 1], sizes = [64, 1], strides = [1, 1]} : vector<64x8xf32> to vector<64x1xf32>
    %4 = vector.extract_strided_slice %1 {offsets = [0, 2], sizes = [64, 1], strides = [1, 1]} : vector<64x8xf32> to vector<64x1xf32>
    %5 = vector.extract_strided_slice %1 {offsets = [0, 3], sizes = [64, 1], strides = [1, 1]} : vector<64x8xf32> to vector<64x1xf32>
    %6 = vector.extract_strided_slice %1 {offsets = [0, 4], sizes = [64, 1], strides = [1, 1]} : vector<64x8xf32> to vector<64x1xf32>
    %7 = vector.extract_strided_slice %1 {offsets = [0, 5], sizes = [64, 1], strides = [1, 1]} : vector<64x8xf32> to vector<64x1xf32>
    %8 = vector.extract_strided_slice %1 {offsets = [0, 6], sizes = [64, 1], strides = [1, 1]} : vector<64x8xf32> to vector<64x1xf32>
    %9 = vector.extract_strided_slice %1 {offsets = [0, 7], sizes = [64, 1], strides = [1, 1]} : vector<64x8xf32> to vector<64x1xf32>
    %10 = arith.truncf %0 : vector<64x64xf32> to vector<64x64xbf16>
    %c0_3 = arith.constant 0 : index
    %c0_4 = arith.constant 0 : index
    %11 = vector.load %arg3[%c0_3, %c0_4] : memref<64x48xbf16, #tpu.memory_space<vmem>>, vector<64x48xbf16>
    %cst = arith.constant dense<0.000000e+00> : vector<64x48xf32>
    %12 = tpu.matmul %10, %11, %cst {dimension_numbers = #tpu.dot_dimension_numbers<[1], [0], [0], [1], [0, 0, 1, 1], [], []>} : vector<64x64xbf16>, vector<64x48xbf16>, vector<64x48xf32> -> vector<64x48xf32>
    %c0_5 = arith.constant 0 : index
    %c0_6 = arith.constant 0 : index
    %13 = vector.load %arg10[%c0_5, %c0_6] : memref<2x184xf32, #tpu.memory_space<vmem>>, vector<1x48xf32>
    %14 = vector.broadcast %13 : vector<1x48xf32> to vector<64x48xf32>
    %15 = arith.mulf %12, %14 : vector<64x48xf32>
    %c1 = arith.constant 1 : index
    %c0_7 = arith.constant 0 : index
    %16 = vector.load %arg10[%c1, %c0_7] : memref<2x184xf32, #tpu.memory_space<vmem>>, vector<1x48xf32>
    %17 = vector.broadcast %16 : vector<1x48xf32> to vector<64x48xf32>
    %18 = arith.addf %15, %17 : vector<64x48xf32>
    %cst_8 = arith.constant 0.000000e+00 : f32
    %cst_9 = arith.constant 6.000000e+00 : f32
    %19 = vector.broadcast %cst_8 : f32 to vector<64x48xf32>
    %20 = arith.maximumf %19, %18 : vector<64x48xf32>
    %21 = vector.broadcast %cst_9 : f32 to vector<64x48xf32>
    %22 = arith.minimumf %21, %20 : vector<64x48xf32>
    %23 = vector.extract_strided_slice %22 {offsets = [0, 0], sizes = [64, 16], strides = [1, 1]} : vector<64x48xf32> to vector<64x16xf32>
    %c0_10 = arith.constant 0 : index
    %c0_11 = arith.constant 0 : index
    %24 = vector.load %arg11[%c0_10, %c0_11] : memref<64x128xf32, #tpu.memory_space<vmem>>, vector<64x16xf32>
    tpu.vector_store %arg11[%c0_10, %c0_11], %23 {strides = array<i32>} : memref<64x128xf32, #tpu.memory_space<vmem>>, vector<64x16xf32>,
    %25 = vector.extract_strided_slice %22 {offsets = [0, 16], sizes = [64, 16], strides = [1, 1]} : vector<64x48xf32> to vector<64x16xf32>
    %26 = vector.extract_strided_slice %22 {offsets = [0, 32], sizes = [64, 16], strides = [1, 1]} : vector<64x48xf32> to vector<64x16xf32>
    %c1_i32 = arith.constant 1 : i32
    %27 = tpu.dynamic_rotate %25 by %c1_i32 dim 0 : vector<64x16xf32>, i32 -> vector<64x16xf32>
    %28 = vector.broadcast %5 : vector<64x1xf32> to vector<64x16xf32>
    %29 = arith.mulf %28, %27 : vector<64x16xf32>
    %c63_i32 = arith.constant 63 : i32
    %30 = tpu.dynamic_rotate %25 by %c63_i32 dim 0 : vector<64x16xf32>, i32 -> vector<64x16xf32>
    %31 = vector.broadcast %6 : vector<64x1xf32> to vector<64x16xf32>
    %32 = arith.mulf %31, %30 : vector<64x16xf32>
    %33 = tpu.concatenate %29, %25, %32 in 1 : vector<64x16xf32>, vector<64x16xf32>, vector<64x16xf32> -> vector<64x48xf32>
    %34 = arith.truncf %33 : vector<64x48xf32> to vector<64x48xbf16>
    %c0_12 = arith.constant 0 : index
    %c0_13 = arith.constant 0 : index
    %35 = vector.load %arg4[%c0_12, %c0_13] : memref<48x24xbf16, #tpu.memory_space<vmem>>, vector<48x24xbf16>
    %cst_14 = arith.constant dense<0.000000e+00> : vector<64x24xf32>
    %36 = tpu.matmul %34, %35, %cst_14 {dimension_numbers = #tpu.dot_dimension_numbers<[1], [0], [0], [1], [0, 0, 1, 1], [], []>} : vector<64x48xbf16>, vector<48x24xbf16>, vector<64x24xf32> -> vector<64x24xf32>
    %c0_15 = arith.constant 0 : index
    %c48 = arith.constant 48 : index
    %37 = vector.load %arg10[%c0_15, %c48] : memref<2x184xf32, #tpu.memory_space<vmem>>, vector<1x24xf32>
    %38 = vector.broadcast %37 : vector<1x24xf32> to vector<64x24xf32>
    %39 = arith.mulf %36, %38 : vector<64x24xf32>
    %c1_16 = arith.constant 1 : index
    %c48_17 = arith.constant 48 : index
    %40 = vector.load %arg10[%c1_16, %c48_17] : memref<2x184xf32, #tpu.memory_space<vmem>>, vector<1x24xf32>
    %41 = vector.broadcast %40 : vector<1x24xf32> to vector<64x24xf32>
    %42 = arith.addf %39, %41 : vector<64x24xf32>
    %cst_18 = arith.constant 0.000000e+00 : f32
    %cst_19 = arith.constant 6.000000e+00 : f32
    %43 = vector.broadcast %cst_18 : f32 to vector<64x24xf32>
    %44 = arith.maximumf %43, %42 : vector<64x24xf32>
    %45 = vector.broadcast %cst_19 : f32 to vector<64x24xf32>
    %46 = arith.minimumf %45, %44 : vector<64x24xf32>
    %c0_20 = arith.constant 0 : index
    %c16 = arith.constant 16 : index
    %47 = vector.load %arg11[%c0_20, %c16] : memref<64x128xf32, #tpu.memory_space<vmem>>, vector<64x24xf32>
    tpu.vector_store %arg11[%c0_20, %c16], %46 {strides = array<i32>} : memref<64x128xf32, #tpu.memory_space<vmem>>, vector<64x24xf32>,
    %c8_i32 = arith.constant 8 : i32
    %48 = tpu.dynamic_rotate %25 by %c8_i32 dim 0 : vector<64x16xf32>, i32 -> vector<64x16xf32>
    %49 = vector.broadcast %3 : vector<64x1xf32> to vector<64x16xf32>
    %50 = arith.mulf %49, %48 : vector<64x16xf32>
    %c56_i32 = arith.constant 56 : i32
    %51 = tpu.dynamic_rotate %25 by %c56_i32 dim 0 : vector<64x16xf32>, i32 -> vector<64x16xf32>
    %52 = vector.broadcast %8 : vector<64x1xf32> to vector<64x16xf32>
    %53 = arith.mulf %52, %51 : vector<64x16xf32>
    %54 = tpu.concatenate %50, %25, %53 in 1 : vector<64x16xf32>, vector<64x16xf32>, vector<64x16xf32> -> vector<64x48xf32>
    %55 = arith.truncf %54 : vector<64x48xf32> to vector<64x48xbf16>
    %c0_21 = arith.constant 0 : index
    %c0_22 = arith.constant 0 : index
    %56 = vector.load %arg5[%c0_21, %c0_22] : memref<48x24xbf16, #tpu.memory_space<vmem>>, vector<48x24xbf16>
    %cst_23 = arith.constant dense<0.000000e+00> : vector<64x24xf32>
    %57 = tpu.matmul %55, %56, %cst_23 {dimension_numbers = #tpu.dot_dimension_numbers<[1], [0], [0], [1], [0, 0, 1, 1], [], []>} : vector<64x48xbf16>, vector<48x24xbf16>, vector<64x24xf32> -> vector<64x24xf32>
    %c0_24 = arith.constant 0 : index
    %c72 = arith.constant 72 : index
    %58 = vector.load %arg10[%c0_24, %c72] : memref<2x184xf32, #tpu.memory_space<vmem>>, vector<1x24xf32>
    %59 = vector.broadcast %58 : vector<1x24xf32> to vector<64x24xf32>
    %60 = arith.mulf %57, %59 : vector<64x24xf32>
    %c1_25 = arith.constant 1 : index
    %c72_26 = arith.constant 72 : index
    %61 = vector.load %arg10[%c1_25, %c72_26] : memref<2x184xf32, #tpu.memory_space<vmem>>, vector<1x24xf32>
    %62 = vector.broadcast %61 : vector<1x24xf32> to vector<64x24xf32>
    %63 = arith.addf %60, %62 : vector<64x24xf32>
    %cst_27 = arith.constant 0.000000e+00 : f32
    %cst_28 = arith.constant 6.000000e+00 : f32
    %64 = vector.broadcast %cst_27 : f32 to vector<64x24xf32>
    %65 = arith.maximumf %64, %63 : vector<64x24xf32>
    %66 = vector.broadcast %cst_28 : f32 to vector<64x24xf32>
    %67 = arith.minimumf %66, %65 : vector<64x24xf32>
    %c0_29 = arith.constant 0 : index
    %c40 = arith.constant 40 : index
    %68 = vector.load %arg11[%c0_29, %c40] : memref<64x128xf32, #tpu.memory_space<vmem>>, vector<64x24xf32>
    tpu.vector_store %arg11[%c0_29, %c40], %67 {strides = array<i32>} : memref<64x128xf32, #tpu.memory_space<vmem>>, vector<64x24xf32>,
    %c9_i32 = arith.constant 9 : i32
    %69 = tpu.dynamic_rotate %26 by %c9_i32 dim 0 : vector<64x16xf32>, i32 -> vector<64x16xf32>
    %70 = vector.broadcast %2 : vector<64x1xf32> to vector<64x16xf32>
    %71 = arith.mulf %70, %69 : vector<64x16xf32>
    %c8_i32_30 = arith.constant 8 : i32
    %72 = tpu.dynamic_rotate %26 by %c8_i32_30 dim 0 : vector<64x16xf32>, i32 -> vector<64x16xf32>
    %73 = vector.broadcast %3 : vector<64x1xf32> to vector<64x16xf32>
    %74 = arith.mulf %73, %72 : vector<64x16xf32>
    %c7_i32 = arith.constant 7 : i32
    %75 = tpu.dynamic_rotate %26 by %c7_i32 dim 0 : vector<64x16xf32>, i32 -> vector<64x16xf32>
    %76 = vector.broadcast %4 : vector<64x1xf32> to vector<64x16xf32>
    %77 = arith.mulf %76, %75 : vector<64x16xf32>
    %c1_i32_31 = arith.constant 1 : i32
    %78 = tpu.dynamic_rotate %26 by %c1_i32_31 dim 0 : vector<64x16xf32>, i32 -> vector<64x16xf32>
    %79 = vector.broadcast %5 : vector<64x1xf32> to vector<64x16xf32>
    %80 = arith.mulf %79, %78 : vector<64x16xf32>
    %c63_i32_32 = arith.constant 63 : i32
    %81 = tpu.dynamic_rotate %26 by %c63_i32_32 dim 0 : vector<64x16xf32>, i32 -> vector<64x16xf32>
    %82 = vector.broadcast %6 : vector<64x1xf32> to vector<64x16xf32>
    %83 = arith.mulf %82, %81 : vector<64x16xf32>
    %c57_i32 = arith.constant 57 : i32
    %84 = tpu.dynamic_rotate %26 by %c57_i32 dim 0 : vector<64x16xf32>, i32 -> vector<64x16xf32>
    %85 = vector.broadcast %7 : vector<64x1xf32> to vector<64x16xf32>
    %86 = arith.mulf %85, %84 : vector<64x16xf32>
    %c56_i32_33 = arith.constant 56 : i32
    %87 = tpu.dynamic_rotate %26 by %c56_i32_33 dim 0 : vector<64x16xf32>, i32 -> vector<64x16xf32>
    %88 = vector.broadcast %8 : vector<64x1xf32> to vector<64x16xf32>
    %89 = arith.mulf %88, %87 : vector<64x16xf32>
    %c55_i32 = arith.constant 55 : i32
    %90 = tpu.dynamic_rotate %26 by %c55_i32 dim 0 : vector<64x16xf32>, i32 -> vector<64x16xf32>
    %91 = vector.broadcast %9 : vector<64x1xf32> to vector<64x16xf32>
    %92 = arith.mulf %91, %90 : vector<64x16xf32>
    %93 = tpu.concatenate %71, %74, %77, %80, %26, %83, %86, %89, %92 in 1 : vector<64x16xf32>, vector<64x16xf32>, vector<64x16xf32>, vector<64x16xf32>, vector<64x16xf32>, vector<64x16xf32>, vector<64x16xf32>, vector<64x16xf32>, vector<64x16xf32> -> vector<64x144xf32>
    %94 = arith.truncf %93 : vector<64x144xf32> to vector<64x144xbf16>
    %c0_34 = arith.constant 0 : index
    %c0_35 = arith.constant 0 : index
    %95 = vector.load %arg6[%c0_34, %c0_35] : memref<144x24xbf16, #tpu.memory_space<vmem>>, vector<144x24xbf16>
    %cst_36 = arith.constant dense<0.000000e+00> : vector<64x24xf32>
    %96 = tpu.matmul %94, %95, %cst_36 {dimension_numbers = #tpu.dot_dimension_numbers<[1], [0], [0], [1], [0, 0, 1, 1], [], []>} : vector<64x144xbf16>, vector<144x24xbf16>, vector<64x24xf32> -> vector<64x24xf32>
    %c0_37 = arith.constant 0 : index
    %c96 = arith.constant 96 : index
    %97 = vector.load %arg10[%c0_37, %c96] : memref<2x184xf32, #tpu.memory_space<vmem>>, vector<1x24xf32>
    %98 = vector.broadcast %97 : vector<1x24xf32> to vector<64x24xf32>
    %99 = arith.mulf %96, %98 : vector<64x24xf32>
    %c1_38 = arith.constant 1 : index
    %c96_39 = arith.constant 96 : index
    %100 = vector.load %arg10[%c1_38, %c96_39] : memref<2x184xf32, #tpu.memory_space<vmem>>, vector<1x24xf32>
    %101 = vector.broadcast %100 : vector<1x24xf32> to vector<64x24xf32>
    %102 = arith.addf %99, %101 : vector<64x24xf32>
    %cst_40 = arith.constant 0.000000e+00 : f32
    %cst_41 = arith.constant 6.000000e+00 : f32
    %103 = vector.broadcast %cst_40 : f32 to vector<64x24xf32>
    %104 = arith.maximumf %103, %102 : vector<64x24xf32>
    %105 = vector.broadcast %cst_41 : f32 to vector<64x24xf32>
    %106 = arith.minimumf %105, %104 : vector<64x24xf32>
    %c8_i32_42 = arith.constant 8 : i32
    %107 = tpu.dynamic_rotate %106 by %c8_i32_42 dim 0 : vector<64x24xf32>, i32 -> vector<64x24xf32>
    %108 = vector.broadcast %3 : vector<64x1xf32> to vector<64x24xf32>
    %109 = arith.mulf %108, %107 : vector<64x24xf32>
    %c56_i32_43 = arith.constant 56 : i32
    %110 = tpu.dynamic_rotate %106 by %c56_i32_43 dim 0 : vector<64x24xf32>, i32 -> vector<64x24xf32>
    %111 = vector.broadcast %8 : vector<64x1xf32> to vector<64x24xf32>
    %112 = arith.mulf %111, %110 : vector<64x24xf32>
    %113 = tpu.concatenate %109, %106, %112 in 1 : vector<64x24xf32>, vector<64x24xf32>, vector<64x24xf32> -> vector<64x72xf32>
    %114 = arith.truncf %113 : vector<64x72xf32> to vector<64x72xbf16>
    %c0_44 = arith.constant 0 : index
    %c0_45 = arith.constant 0 : index
    %115 = vector.load %arg7[%c0_44, %c0_45] : memref<72x24xbf16, #tpu.memory_space<vmem>>, vector<72x24xbf16>
    %cst_46 = arith.constant dense<0.000000e+00> : vector<64x24xf32>
    %116 = tpu.matmul %114, %115, %cst_46 {dimension_numbers = #tpu.dot_dimension_numbers<[1], [0], [0], [1], [0, 0, 1, 1], [], []>} : vector<64x72xbf16>, vector<72x24xbf16>, vector<64x24xf32> -> vector<64x24xf32>
    %c0_47 = arith.constant 0 : index
    %c120 = arith.constant 120 : index
    %117 = vector.load %arg10[%c0_47, %c120] : memref<2x184xf32, #tpu.memory_space<vmem>>, vector<1x24xf32>
    %118 = vector.broadcast %117 : vector<1x24xf32> to vector<64x24xf32>
    %119 = arith.mulf %116, %118 : vector<64x24xf32>
    %c1_48 = arith.constant 1 : index
    %c120_49 = arith.constant 120 : index
    %120 = vector.load %arg10[%c1_48, %c120_49] : memref<2x184xf32, #tpu.memory_space<vmem>>, vector<1x24xf32>
    %121 = vector.broadcast %120 : vector<1x24xf32> to vector<64x24xf32>
    %122 = arith.addf %119, %121 : vector<64x24xf32>
    %cst_50 = arith.constant 0.000000e+00 : f32
    %cst_51 = arith.constant 6.000000e+00 : f32
    %123 = vector.broadcast %cst_50 : f32 to vector<64x24xf32>
    %124 = arith.maximumf %123, %122 : vector<64x24xf32>
    %125 = vector.broadcast %cst_51 : f32 to vector<64x24xf32>
    %126 = arith.minimumf %125, %124 : vector<64x24xf32>
    %c0_52 = arith.constant 0 : index
    %c64 = arith.constant 64 : index
    %127 = vector.load %arg11[%c0_52, %c64] : memref<64x128xf32, #tpu.memory_space<vmem>>, vector<64x24xf32>
    tpu.vector_store %arg11[%c0_52, %c64], %126 {strides = array<i32>} : memref<64x128xf32, #tpu.memory_space<vmem>>, vector<64x24xf32>,
    %c1_i32_53 = arith.constant 1 : i32
    %128 = tpu.dynamic_rotate %106 by %c1_i32_53 dim 0 : vector<64x24xf32>, i32 -> vector<64x24xf32>
    %129 = vector.broadcast %5 : vector<64x1xf32> to vector<64x24xf32>
    %130 = arith.mulf %129, %128 : vector<64x24xf32>
    %c63_i32_54 = arith.constant 63 : i32
    %131 = tpu.dynamic_rotate %106 by %c63_i32_54 dim 0 : vector<64x24xf32>, i32 -> vector<64x24xf32>
    %132 = vector.broadcast %6 : vector<64x1xf32> to vector<64x24xf32>
    %133 = arith.mulf %132, %131 : vector<64x24xf32>
    %134 = tpu.concatenate %130, %106, %133 in 1 : vector<64x24xf32>, vector<64x24xf32>, vector<64x24xf32> -> vector<64x72xf32>
    %135 = arith.truncf %134 : vector<64x72xf32> to vector<64x72xbf16>
    %c0_55 = arith.constant 0 : index
    %c0_56 = arith.constant 0 : index
    %136 = vector.load %arg8[%c0_55, %c0_56] : memref<72x24xbf16, #tpu.memory_space<vmem>>, vector<72x24xbf16>
    %cst_57 = arith.constant dense<0.000000e+00> : vector<64x24xf32>
    %137 = tpu.matmul %135, %136, %cst_57 {dimension_numbers = #tpu.dot_dimension_numbers<[1], [0], [0], [1], [0, 0, 1, 1], [], []>} : vector<64x72xbf16>, vector<72x24xbf16>, vector<64x24xf32> -> vector<64x24xf32>
    %c0_58 = arith.constant 0 : index
    %c144 = arith.constant 144 : index
    %138 = vector.load %arg10[%c0_58, %c144] : memref<2x184xf32, #tpu.memory_space<vmem>>, vector<1x24xf32>
    %139 = vector.broadcast %138 : vector<1x24xf32> to vector<64x24xf32>
    %140 = arith.mulf %137, %139 : vector<64x24xf32>
    %c1_59 = arith.constant 1 : index
    %c144_60 = arith.constant 144 : index
    %141 = vector.load %arg10[%c1_59, %c144_60] : memref<2x184xf32, #tpu.memory_space<vmem>>, vector<1x24xf32>
    %142 = vector.broadcast %141 : vector<1x24xf32> to vector<64x24xf32>
    %143 = arith.addf %140, %142 : vector<64x24xf32>
    %cst_61 = arith.constant 0.000000e+00 : f32
    %cst_62 = arith.constant 6.000000e+00 : f32
    %144 = vector.broadcast %cst_61 : f32 to vector<64x24xf32>
    %145 = arith.maximumf %144, %143 : vector<64x24xf32>
    %146 = vector.broadcast %cst_62 : f32 to vector<64x24xf32>
    %147 = arith.minimumf %146, %145 : vector<64x24xf32>
    %c0_63 = arith.constant 0 : index
    %c88 = arith.constant 88 : index
    %148 = vector.load %arg11[%c0_63, %c88] : memref<64x128xf32, #tpu.memory_space<vmem>>, vector<64x24xf32>
    tpu.vector_store %arg11[%c0_63, %c88], %147 {strides = array<i32>} : memref<64x128xf32, #tpu.memory_space<vmem>>, vector<64x24xf32>,
    %cst_64 = arith.constant 0.000000e+00 : f32
    %149 = vector.broadcast %cst_64 : f32 to vector<64x1xf32>
    %150 = arith.cmpf ogt, %2, %149 : vector<64x1xf32>
    %c9_i32_65 = arith.constant 9 : i32
    %151 = tpu.dynamic_rotate %0 by %c9_i32_65 dim 0 : vector<64x64xf32>, i32 -> vector<64x64xf32>
    %cst_66 = arith.constant -1.000000e+30 : f32
    %152 = vector.shape_cast %150 : vector<64x1xi1> to vector<64x1xi1>
    %153 = vector.broadcast %152 : vector<64x1xi1> to vector<64x64xi1>
    %154 = vector.broadcast %cst_66 : f32 to vector<64x64xf32>
    %155 = arith.select %153, %151, %154 : vector<64x64xi1>, vector<64x64xf32>
    %156 = arith.maximumf %0, %155 : vector<64x64xf32>
    %cst_67 = arith.constant 0.000000e+00 : f32
    %157 = vector.broadcast %cst_67 : f32 to vector<64x1xf32>
    %158 = arith.cmpf ogt, %3, %157 : vector<64x1xf32>
    %c8_i32_68 = arith.constant 8 : i32
    %159 = tpu.dynamic_rotate %0 by %c8_i32_68 dim 0 : vector<64x64xf32>, i32 -> vector<64x64xf32>
    %cst_69 = arith.constant -1.000000e+30 : f32
    %160 = vector.shape_cast %158 : vector<64x1xi1> to vector<64x1xi1>
    %161 = vector.broadcast %160 : vector<64x1xi1> to vector<64x64xi1>
    %162 = vector.broadcast %cst_69 : f32 to vector<64x64xf32>
    %163 = arith.select %161, %159, %162 : vector<64x64xi1>, vector<64x64xf32>
    %164 = arith.maximumf %156, %163 : vector<64x64xf32>
    %cst_70 = arith.constant 0.000000e+00 : f32
    %165 = vector.broadcast %cst_70 : f32 to vector<64x1xf32>
    %166 = arith.cmpf ogt, %4, %165 : vector<64x1xf32>
    %c7_i32_71 = arith.constant 7 : i32
    %167 = tpu.dynamic_rotate %0 by %c7_i32_71 dim 0 : vector<64x64xf32>, i32 -> vector<64x64xf32>
    %cst_72 = arith.constant -1.000000e+30 : f32
    %168 = vector.shape_cast %166 : vector<64x1xi1> to vector<64x1xi1>
    %169 = vector.broadcast %168 : vector<64x1xi1> to vector<64x64xi1>
    %170 = vector.broadcast %cst_72 : f32 to vector<64x64xf32>
    %171 = arith.select %169, %167, %170 : vector<64x64xi1>, vector<64x64xf32>
    %172 = arith.maximumf %164, %171 : vector<64x64xf32>
    %cst_73 = arith.constant 0.000000e+00 : f32
    %173 = vector.broadcast %cst_73 : f32 to vector<64x1xf32>
    %174 = arith.cmpf ogt, %5, %173 : vector<64x1xf32>
    %c1_i32_74 = arith.constant 1 : i32
    %175 = tpu.dynamic_rotate %0 by %c1_i32_74 dim 0 : vector<64x64xf32>, i32 -> vector<64x64xf32>
    %cst_75 = arith.constant -1.000000e+30 : f32
    %176 = vector.shape_cast %174 : vector<64x1xi1> to vector<64x1xi1>
    %177 = vector.broadcast %176 : vector<64x1xi1> to vector<64x64xi1>
    %178 = vector.broadcast %cst_75 : f32 to vector<64x64xf32>
    %179 = arith.select %177, %175, %178 : vector<64x64xi1>, vector<64x64xf32>
    %180 = arith.maximumf %172, %179 : vector<64x64xf32>
    %cst_76 = arith.constant 0.000000e+00 : f32
    %181 = vector.broadcast %cst_76 : f32 to vector<64x1xf32>
    %182 = arith.cmpf ogt, %6, %181 : vector<64x1xf32>
    %c63_i32_77 = arith.constant 63 : i32
    %183 = tpu.dynamic_rotate %0 by %c63_i32_77 dim 0 : vector<64x64xf32>, i32 -> vector<64x64xf32>
    %cst_78 = arith.constant -1.000000e+30 : f32
    %184 = vector.shape_cast %182 : vector<64x1xi1> to vector<64x1xi1>
    %185 = vector.broadcast %184 : vector<64x1xi1> to vector<64x64xi1>
    %186 = vector.broadcast %cst_78 : f32 to vector<64x64xf32>
    %187 = arith.select %185, %183, %186 : vector<64x64xi1>, vector<64x64xf32>
    %188 = arith.maximumf %180, %187 : vector<64x64xf32>
    %cst_79 = arith.constant 0.000000e+00 : f32
    %189 = vector.broadcast %cst_79 : f32 to vector<64x1xf32>
    %190 = arith.cmpf ogt, %7, %189 : vector<64x1xf32>
    %c57_i32_80 = arith.constant 57 : i32
    %191 = tpu.dynamic_rotate %0 by %c57_i32_80 dim 0 : vector<64x64xf32>, i32 -> vector<64x64xf32>
    %cst_81 = arith.constant -1.000000e+30 : f32
    %192 = vector.shape_cast %190 : vector<64x1xi1> to vector<64x1xi1>
    %193 = vector.broadcast %192 : vector<64x1xi1> to vector<64x64xi1>
    %194 = vector.broadcast %cst_81 : f32 to vector<64x64xf32>
    %195 = arith.select %193, %191, %194 : vector<64x64xi1>, vector<64x64xf32>
    %196 = arith.maximumf %188, %195 : vector<64x64xf32>
    %cst_82 = arith.constant 0.000000e+00 : f32
    %197 = vector.broadcast %cst_82 : f32 to vector<64x1xf32>
    %198 = arith.cmpf ogt, %8, %197 : vector<64x1xf32>
    %c56_i32_83 = arith.constant 56 : i32
    %199 = tpu.dynamic_rotate %0 by %c56_i32_83 dim 0 : vector<64x64xf32>, i32 -> vector<64x64xf32>
    %cst_84 = arith.constant -1.000000e+30 : f32
    %200 = vector.shape_cast %198 : vector<64x1xi1> to vector<64x1xi1>
    %201 = vector.broadcast %200 : vector<64x1xi1> to vector<64x64xi1>
    %202 = vector.broadcast %cst_84 : f32 to vector<64x64xf32>
    %203 = arith.select %201, %199, %202 : vector<64x64xi1>, vector<64x64xf32>
    %204 = arith.maximumf %196, %203 : vector<64x64xf32>
    %cst_85 = arith.constant 0.000000e+00 : f32
    %205 = vector.broadcast %cst_85 : f32 to vector<64x1xf32>
    %206 = arith.cmpf ogt, %9, %205 : vector<64x1xf32>
    %c55_i32_86 = arith.constant 55 : i32
    %207 = tpu.dynamic_rotate %0 by %c55_i32_86 dim 0 : vector<64x64xf32>, i32 -> vector<64x64xf32>
    %cst_87 = arith.constant -1.000000e+30 : f32
    %208 = vector.shape_cast %206 : vector<64x1xi1> to vector<64x1xi1>
    %209 = vector.broadcast %208 : vector<64x1xi1> to vector<64x64xi1>
    %210 = vector.broadcast %cst_87 : f32 to vector<64x64xf32>
    %211 = arith.select %209, %207, %210 : vector<64x64xi1>, vector<64x64xf32>
    %212 = arith.maximumf %204, %211 : vector<64x64xf32>
    %213 = arith.truncf %212 : vector<64x64xf32> to vector<64x64xbf16>
    %c0_88 = arith.constant 0 : index
    %c0_89 = arith.constant 0 : index
    %214 = vector.load %arg9[%c0_88, %c0_89] : memref<64x16xbf16, #tpu.memory_space<vmem>>, vector<64x16xbf16>
    %cst_90 = arith.constant dense<0.000000e+00> : vector<64x16xf32>
    %215 = tpu.matmul %213, %214, %cst_90 {dimension_numbers = #tpu.dot_dimension_numbers<[1], [0], [0], [1], [0, 0, 1, 1], [], []>} : vector<64x64xbf16>, vector<64x16xbf16>, vector<64x16xf32> -> vector<64x16xf32>
    %c0_91 = arith.constant 0 : index
    %c168 = arith.constant 168 : index
    %216 = vector.load %arg10[%c0_91, %c168] : memref<2x184xf32, #tpu.memory_space<vmem>>, vector<1x16xf32>
    %217 = vector.broadcast %216 : vector<1x16xf32> to vector<64x16xf32>
    %218 = arith.mulf %215, %217 : vector<64x16xf32>
    %c1_92 = arith.constant 1 : index
    %c168_93 = arith.constant 168 : index
    %219 = vector.load %arg10[%c1_92, %c168_93] : memref<2x184xf32, #tpu.memory_space<vmem>>, vector<1x16xf32>
    %220 = vector.broadcast %219 : vector<1x16xf32> to vector<64x16xf32>
    %221 = arith.addf %218, %220 : vector<64x16xf32>
    %cst_94 = arith.constant 0.000000e+00 : f32
    %cst_95 = arith.constant 6.000000e+00 : f32
    %222 = vector.broadcast %cst_94 : f32 to vector<64x16xf32>
    %223 = arith.maximumf %222, %221 : vector<64x16xf32>
    %224 = vector.broadcast %cst_95 : f32 to vector<64x16xf32>
    %225 = arith.minimumf %224, %223 : vector<64x16xf32>
    %c0_96 = arith.constant 0 : index
    %c112 = arith.constant 112 : index
    %226 = vector.load %arg11[%c0_96, %c112] : memref<64x128xf32, #tpu.memory_space<vmem>>, vector<64x16xf32>
    tpu.vector_store %arg11[%c0_96, %c112], %225 {strides = array<i32>} : memref<64x128xf32, #tpu.memory_space<vmem>>, vector<64x16xf32>,
    return
  }
  func.func @transform_0(%arg0: i32) -> (i32, i32) {
    %c0_i32 = arith.constant 0 : i32
    %c0_i32_0 = arith.constant 0 : i32
    return %arg0, %c0_i32 : i32, i32
  }
  func.func @transform_1(%arg0: i32) -> (i32, i32) {
    %c0_i32 = arith.constant 0 : i32
    %c0_i32_0 = arith.constant 0 : i32
    %c0_i32_1 = arith.constant 0 : i32
    return %c0_i32, %c0_i32_0 : i32, i32
  }
  func.func @transform_2(%arg0: i32) -> (i32, i32) {
    %c0_i32 = arith.constant 0 : i32
    %c0_i32_0 = arith.constant 0 : i32
    %c0_i32_1 = arith.constant 0 : i32
    return %c0_i32, %c0_i32_0 : i32, i32
  }
  func.func @transform_3(%arg0: i32) -> (i32, i32) {
    %c0_i32 = arith.constant 0 : i32
    %c0_i32_0 = arith.constant 0 : i32
    %c0_i32_1 = arith.constant 0 : i32
    return %c0_i32, %c0_i32_0 : i32, i32
  }
  func.func @transform_4(%arg0: i32) -> (i32, i32) {
    %c0_i32 = arith.constant 0 : i32
    %c0_i32_0 = arith.constant 0 : i32
    %c0_i32_1 = arith.constant 0 : i32
    return %c0_i32, %c0_i32_0 : i32, i32
  }
  func.func @transform_5(%arg0: i32) -> (i32, i32) {
    %c0_i32 = arith.constant 0 : i32
    %c0_i32_0 = arith.constant 0 : i32
    %c0_i32_1 = arith.constant 0 : i32
    return %c0_i32, %c0_i32_0 : i32, i32
  }
  func.func @transform_6(%arg0: i32) -> (i32, i32) {
    %c0_i32 = arith.constant 0 : i32
    %c0_i32_0 = arith.constant 0 : i32
    %c0_i32_1 = arith.constant 0 : i32
    return %c0_i32, %c0_i32_0 : i32, i32
  }
  func.func @transform_7(%arg0: i32) -> (i32, i32) {
    %c0_i32 = arith.constant 0 : i32
    %c0_i32_0 = arith.constant 0 : i32
    %c0_i32_1 = arith.constant 0 : i32
    return %c0_i32, %c0_i32_0 : i32, i32
  }
  func.func @transform_8(%arg0: i32) -> (i32, i32) {
    %c0_i32 = arith.constant 0 : i32
    %c0_i32_0 = arith.constant 0 : i32
    %c0_i32_1 = arith.constant 0 : i32
    return %c0_i32, %c0_i32_0 : i32, i32
  }
  func.func @transform_9(%arg0: i32) -> (i32, i32) {
    %c0_i32 = arith.constant 0 : i32
    %c0_i32_0 = arith.constant 0 : i32
    %c0_i32_1 = arith.constant 0 : i32
    return %c0_i32, %c0_i32_0 : i32, i32
  }
  func.func @transform_10(%arg0: i32) -> (i32, i32) {
    %c0_i32 = arith.constant 0 : i32
    %c0_i32_0 = arith.constant 0 : i32
    return %arg0, %c0_i32 : i32, i32
  }
}

</mosaic_0001>

<llo_original>
// kernel: tpu_custom_call.1
$region0: #{tpu_custom_call.1}
  #allocation0 [shape = 'u32[]', space=smem, size = 0x4, offset = 0x4, fixed_abs, tag = 'smem constant byte address 0x4 - core index']
  #allocation1 [shape = 'u32[144,128]{1,0:T(1,128)}', space=vmem, size = 0x12000, scoped, tag = 'internal scratch']
  %s0 = inlined_call_operand.vmem [shape: f32[128,64], index: 0, kind: input, shape index: {}]
  %s1 = inlined_call_operand.vmem [shape: f32[64,8], index: 1, kind: input, shape index: {}]
  %s2 = inlined_call_operand.vmem [shape: bf16[64,48], index: 2, kind: input, shape index: {}]
  %s3 = inlined_call_operand.vmem [shape: bf16[48,24], index: 3, kind: input, shape index: {}]
  %s4 = inlined_call_operand.vmem [shape: bf16[48,24], index: 4, kind: input, shape index: {}]
  %s5 = inlined_call_operand.vmem [shape: bf16[144,24], index: 5, kind: input, shape index: {}]
  %s6 = inlined_call_operand.vmem [shape: bf16[72,24], index: 6, kind: input, shape index: {}]
  %s7 = inlined_call_operand.vmem [shape: bf16[72,24], index: 7, kind: input, shape index: {}]
  %s8 = inlined_call_operand.vmem [shape: bf16[64,16], index: 8, kind: input, shape index: {}]
  %s9 = inlined_call_operand.vmem [shape: f32[2,184], index: 9, kind: input, shape index: {}]
  %s10 = inlined_call_operand.hbm [shape: f32[128,128], index: 10, kind: output, shape index: {}]
  %s11 = sld [smem:[#allocation0]]
  $region73: #{tpu_custom_call.1} parent=0
    _
  %s13 = ssub.s32 1, %s11
  %s14 = scalar_select 0, %s13, %s11
  $region1: #{tpu_custom_call.1} parent=0
    #allocation2 [shape = 'u8[65536]{0}', space=vmem, size = 0x10000, scoped, tag = 'output window, operand 0']
    #allocation3 [shape = 's32[2]{0}', space=sflag, size = 0x8, scoped, tag = 'scoped memory for tpu_custom_call.1']
    %15 = vsyncpa [#allocation3], 0
    %s16 = scalar_lea.sflag [#allocation3], 1
    %17 = vsyncpa %s16, 0
    loop: start=0, step=1, limit=4
    $region2: #{tpu_custom_call.1} parent=1 // loop_pre_header
      _
    $region3: #{tpu_custom_call.1} parent=1 // loop_header
      %s19 = sphi 0, %s23
      %p20 = scmp.ge.s32.totalorder %s19, 4
      %s29 = sphi 0, %s31
      %s32 = sphi 0, %s29
      %s33 = sphi 0, %s32
      %s49 = sphi 0, %s33
      %s53 = sphi 0, %s53
      %s55 = sphi 0, %s53
      %s56 = sphi 0, %s55
      %s70 = sphi 0, %s56
      %s74 = sphi 0, %s74
      %s76 = sphi 0, %s74
      %s77 = sphi 0, %s76
      %s91 = sphi 0, %s77
      %s95 = sphi 0, %s95
      %s97 = sphi 0, %s95
      %s98 = sphi 0, %s97
      %s112 = sphi 0, %s98
      %s116 = sphi 0, %s116
      %s118 = sphi 0, %s116
      %s119 = sphi 0, %s118
      %s133 = sphi 0, %s119
      %s137 = sphi 0, %s137
      %s139 = sphi 0, %s137
      %s140 = sphi 0, %s139
      %s154 = sphi 0, %s140
      %s158 = sphi 0, %s158
      %s160 = sphi 0, %s158
      %s161 = sphi 0, %s160
      %s175 = sphi 0, %s161
      %s179 = sphi 0, %s179
      %s181 = sphi 0, %s179
      %s182 = sphi 0, %s181
      %s196 = sphi 0, %s182
      %s200 = sphi 0, %s200
      %s202 = sphi 0, %s200
      %s203 = sphi 0, %s202
      %s217 = sphi 0, %s203
      %s221 = sphi 0, %s221
      %s223 = sphi 0, %s221
      %s224 = sphi 0, %s223
      %s238 = sphi 0, %s224
      %s244 = sphi 0, %s246
      %s247 = sphi 0, %s244
      %s248 = sphi 0, %s247
      %s264 = sphi 0, %s248
    $region4: #{tpu_custom_call.1} parent=1 // loop_header_branch
      %22 = sbr.rel (%p20) target = $region8
    $region5: #{tpu_custom_call.1} parent=1 // loop_body
      %s24 = ssub.s32 %s19, 1
      %s25 = ssub.s32 %s19, 2
      %s26 = sadd.s32 %s19, 1
      %s27 = ssub.s32 %s19, %s26
      %p28 = scmp.eq.s32.totalorder %s27, 0
      %s30 = sadd.s32 %s29, 1
      %s31 = scalar_select %p28, %s29, %s30
      %p34 = pneg %p28
      %p35 = scmp.eq.s32.totalorder %s19, 1
      %p36 = por %p34, %p35
      %p37 = scmp.ne.s32.totalorder %s29, %s32
      %p38 = scmp.eq.s32.totalorder %s19, 0
      %p39 = por %p37, %p38
      %p40 = scmp.ne.s32.totalorder %s29, %s32
      %p41 = scmp.eq.s32.totalorder %s24, 1
      %p42 = por %p40, %p41
      %p43 = scmp.ne.s32.totalorder %s32, %s33
      %p44 = scmp.eq.s32.totalorder %s24, 0
      %p45 = por %p43, %p44
      %p46 = scmp.ne.s32.totalorder %s32, %s33
      %p47 = scmp.eq.s32.totalorder %s25, 1
      %p48 = por %p46, %p47
      %p50 = scmp.ne.s32.totalorder %s33, %s49
      %p51 = scmp.eq.s32.totalorder %s25, 0
      %p52 = por %p50, %p51
      %s54 = sadd.s32 %s53, 1
      %p57 = scmp.eq.s32.totalorder %s19, 1
      %p58 = scmp.ne.s32.totalorder %s53, %s55
      %p59 = scmp.eq.s32.totalorder %s19, 0
      %p60 = por %p58, %p59
      %p61 = scmp.ne.s32.totalorder %s53, %s55
      %p62 = scmp.eq.s32.totalorder %s24, 1
      %p63 = por %p61, %p62
      %p64 = scmp.ne.s32.totalorder %s55, %s56
      %p65 = scmp.eq.s32.totalorder %s24, 0
      %p66 = por %p64, %p65
      %p67 = scmp.ne.s32.totalorder %s55, %s56
      %p68 = scmp.eq.s32.totalorder %s25, 1
      %p69 = por %p67, %p68
      %p71 = scmp.ne.s32.totalorder %s56, %s70
      %p72 = scmp.eq.s32.totalorder %s25, 0
      %p73 = por %p71, %p72
      %s75 = sadd.s32 %s74, 1
      %p78 = scmp.eq.s32.totalorder %s19, 1
      %p79 = scmp.ne.s32.totalorder %s74, %s76
      %p80 = scmp.eq.s32.totalorder %s19, 0
      %p81 = por %p79, %p80
      %p82 = scmp.ne.s32.totalorder %s74, %s76
      %p83 = scmp.eq.s32.totalorder %s24, 1
      %p84 = por %p82, %p83
      %p85 = scmp.ne.s32.totalorder %s76, %s77
      %p86 = scmp.eq.s32.totalorder %s24, 0
      %p87 = por %p85, %p86
      %p88 = scmp.ne.s32.totalorder %s76, %s77
      %p89 = scmp.eq.s32.totalorder %s25, 1
      %p90 = por %p88, %p89
      %p92 = scmp.ne.s32.totalorder %s77, %s91
      %p93 = scmp.eq.s32.totalorder %s25, 0
      %p94 = por %p92, %p93
      %s96 = sadd.s32 %s95, 1
      %p99 = scmp.eq.s32.totalorder %s19, 1
      %p100 = scmp.ne.s32.totalorder %s95, %s97
      %p101 = scmp.eq.s32.totalorder %s19, 0
      %p102 = por %p100, %p101
      %p103 = scmp.ne.s32.totalorder %s95, %s97
      %p104 = scmp.eq.s32.totalorder %s24, 1
      %p105 = por %p103, %p104
      %p106 = scmp.ne.s32.totalorder %s97, %s98
      %p107 = scmp.eq.s32.totalorder %s24, 0
      %p108 = por %p106, %p107
      %p109 = scmp.ne.s32.totalorder %s97, %s98
      %p110 = scmp.eq.s32.totalorder %s25, 1
      %p111 = por %p109, %p110
      %p113 = scmp.ne.s32.totalorder %s98, %s112
      %p114 = scmp.eq.s32.totalorder %s25, 0
      %p115 = por %p113, %p114
      %s117 = sadd.s32 %s116, 1
      %p120 = scmp.eq.s32.totalorder %s19, 1
      %p121 = scmp.ne.s32.totalorder %s116, %s118
      %p122 = scmp.eq.s32.totalorder %s19, 0
      %p123 = por %p121, %p122
      %p124 = scmp.ne.s32.totalorder %s116, %s118
      %p125 = scmp.eq.s32.totalorder %s24, 1
      %p126 = por %p124, %p125
      %p127 = scmp.ne.s32.totalorder %s118, %s119
      %p128 = scmp.eq.s32.totalorder %s24, 0
      %p129 = por %p127, %p128
      %p130 = scmp.ne.s32.totalorder %s118, %s119
      %p131 = scmp.eq.s32.totalorder %s25, 1
      %p132 = por %p130, %p131
      %p134 = scmp.ne.s32.totalorder %s119, %s133
      %p135 = scmp.eq.s32.totalorder %s25, 0
      %p136 = por %p134, %p135
      %s138 = sadd.s32 %s137, 1
      %p141 = scmp.eq.s32.totalorder %s19, 1
      %p142 = scmp.ne.s32.totalorder %s137, %s139
      %p143 = scmp.eq.s32.totalorder %s19, 0
      %p144 = por %p142, %p143
      %p145 = scmp.ne.s32.totalorder %s137, %s139
      %p146 = scmp.eq.s32.totalorder %s24, 1
      %p147 = por %p145, %p146
      %p148 = scmp.ne.s32.totalorder %s139, %s140
      %p149 = scmp.eq.s32.totalorder %s24, 0
      %p150 = por %p148, %p149
      %p151 = scmp.ne.s32.totalorder %s139, %s140
      %p152 = scmp.eq.s32.totalorder %s25, 1
      %p153 = por %p151, %p152
      %p155 = scmp.ne.s32.totalorder %s140, %s154
      %p156 = scmp.eq.s32.totalorder %s25, 0
      %p157 = por %p155, %p156
      %s159 = sadd.s32 %s158, 1
      %p162 = scmp.eq.s32.totalorder %s19, 1
      %p163 = scmp.ne.s32.totalorder %s158, %s160
      %p164 = scmp.eq.s32.totalorder %s19, 0
      %p165 = por %p163, %p164
      %p166 = scmp.ne.s32.totalorder %s158, %s160
      %p167 = scmp.eq.s32.totalorder %s24, 1
      %p168 = por %p166, %p167
      %p169 = scmp.ne.s32.totalorder %s160, %s161
      %p170 = scmp.eq.s32.totalorder %s24, 0
      %p171 = por %p169, %p170
      %p172 = scmp.ne.s32.totalorder %s160, %s161
      %p173 = scmp.eq.s32.totalorder %s25, 1
      %p174 = por %p172, %p173
      %p176 = scmp.ne.s32.totalorder %s161, %s175
      %p177 = scmp.eq.s32.totalorder %s25, 0
      %p178 = por %p176, %p177
      %s180 = sadd.s32 %s179, 1
      %p183 = scmp.eq.s32.totalorder %s19, 1
      %p184 = scmp.ne.s32.totalorder %s179, %s181
      %p185 = scmp.eq.s32.totalorder %s19, 0
      %p186 = por %p184, %p185
      %p187 = scmp.ne.s32.totalorder %s179, %s181
      %p188 = scmp.eq.s32.totalorder %s24, 1
      %p189 = por %p187, %p188
      %p190 = scmp.ne.s32.totalorder %s181, %s182
      %p191 = scmp.eq.s32.totalorder %s24, 0
      %p192 = por %p190, %p191
      %p193 = scmp.ne.s32.totalorder %s181, %s182
      %p194 = scmp.eq.s32.totalorder %s25, 1
      %p195 = por %p193, %p194
      %p197 = scmp.ne.s32.totalorder %s182, %s196
      %p198 = scmp.eq.s32.totalorder %s25, 0
      %p199 = por %p197, %p198
      %s201 = sadd.s32 %s200, 1
      %p204 = scmp.eq.s32.totalorder %s19, 1
      %p205 = scmp.ne.s32.totalorder %s200, %s202
      %p206 = scmp.eq.s32.totalorder %s19, 0
      %p207 = por %p205, %p206
      %p208 = scmp.ne.s32.totalorder %s200, %s202
      %p209 = scmp.eq.s32.totalorder %s24, 1
      %p210 = por %p208, %p209
      %p211 = scmp.ne.s32.totalorder %s202, %s203
      %p212 = scmp.eq.s32.totalorder %s24, 0
      %p213 = por %p211, %p212
      %p214 = scmp.ne.s32.totalorder %s202, %s203
      %p215 = scmp.eq.s32.totalorder %s25, 1
      %p216 = por %p214, %p215
      %p218 = scmp.ne.s32.totalorder %s203, %s217
      %p219 = scmp.eq.s32.totalorder %s25, 0
      %p220 = por %p218, %p219
      %s222 = sadd.s32 %s221, 1
      %p225 = scmp.eq.s32.totalorder %s19, 1
      %p226 = scmp.ne.s32.totalorder %s221, %s223
      %p227 = scmp.eq.s32.totalorder %s19, 0
      %p228 = por %p226, %p227
      %p229 = scmp.ne.s32.totalorder %s221, %s223
      %p230 = scmp.eq.s32.totalorder %s24, 1
      %p231 = por %p229, %p230
      %p232 = scmp.ne.s32.totalorder %s223, %s224
      %p233 = scmp.eq.s32.totalorder %s24, 0
      %p234 = por %p232, %p233
      %p235 = scmp.ne.s32.totalorder %s223, %s224
      %p236 = scmp.eq.s32.totalorder %s25, 1
      %p237 = por %p235, %p236
      %p239 = scmp.ne.s32.totalorder %s224, %s238
      %p240 = scmp.eq.s32.totalorder %s25, 0
      %p241 = por %p239, %p240
      %s242 = ssub.s32 %s19, %s26
      %p243 = scmp.eq.s32.totalorder %s242, 0
      %s245 = sadd.s32 %s244, 1
      %s246 = scalar_select %p243, %s244, %s245
      %p249 = pneg %p243
      %p250 = scmp.eq.s32.totalorder %s19, 1
      %p251 = por %p249, %p250
      %p252 = scmp.ne.s32.totalorder %s244, %s247
      %p253 = scmp.eq.s32.totalorder %s19, 0
      %p254 = por %p252, %p253
      %p255 = scmp.ne.s32.totalorder %s244, %s247
      %p256 = scmp.eq.s32.totalorder %s24, 1
      %p257 = por %p255, %p256
      %p258 = scmp.ne.s32.totalorder %s247, %s248
      %p259 = scmp.eq.s32.totalorder %s24, 0
      %p260 = por %p258, %p259
      %p261 = scmp.ne.s32.totalorder %s247, %s248
      %p262 = scmp.eq.s32.totalorder %s25, 1
      %p263 = por %p261, %p262
      %p265 = scmp.ne.s32.totalorder %s248, %s264
      %p266 = scmp.eq.s32.totalorder %s25, 0
      %p267 = por %p265, %p266
      %p268 = scmp.le.s32.totalorder 1, %s19
      %p269 = scmp.lt.s32.totalorder %s19, 3
      %p270 = pnand %p268, %p269
      %p271 = pneg %p270
      // Predicated region
      $region9: #{tpu_custom_call.1} parent=5 // pred_check
        _
      $region10: #{tpu_custom_call.1} parent=5 // pred_check_branch
        %273 = sbr.rel (%p270) target = $region12
      $region11: #{tpu_custom_call.1} parent=5 // pred_region
        %s274 = ssub.s32 %s19, 1
        // Predicated region
        $region13: #{tpu_custom_call.1} parent=11 // pred_check
          %p275 = pneg %p66
        $region14: #{tpu_custom_call.1} parent=11 // pred_check_branch
          %277 = sbr.rel (%p275) target = $region16
        $region15: #{tpu_custom_call.1} parent=11 // pred_region
          _
        $region16: #{tpu_custom_call.1} parent=11 // pred_fallthru
          _
        // Predicated region
        $region17: #{tpu_custom_call.1} parent=11 // pred_check
          %p278 = pneg %p87
        $region18: #{tpu_custom_call.1} parent=11 // pred_check_branch
          %280 = sbr.rel (%p278) target = $region20
        $region19: #{tpu_custom_call.1} parent=11 // pred_region
          _
        $region20: #{tpu_custom_call.1} parent=11 // pred_fallthru
          _
        // Predicated region
        $region21: #{tpu_custom_call.1} parent=11 // pred_check
          %p281 = pneg %p108
        $region22: #{tpu_custom_call.1} parent=11 // pred_check_branch
          %283 = sbr.rel (%p281) target = $region24
        $region23: #{tpu_custom_call.1} parent=11 // pred_region
          _
        $region24: #{tpu_custom_call.1} parent=11 // pred_fallthru
          _
        // Predicated region
        $region25: #{tpu_custom_call.1} parent=11 // pred_check
          %p284 = pneg %p129
        $region26: #{tpu_custom_call.1} parent=11 // pred_check_branch
          %286 = sbr.rel (%p284) target = $region28
        $region27: #{tpu_custom_call.1} parent=11 // pred_region
          _
        $region28: #{tpu_custom_call.1} parent=11 // pred_fallthru
          _
        // Predicated region
        $region29: #{tpu_custom_call.1} parent=11 // pred_check
          %p287 = pneg %p150
        $region30: #{tpu_custom_call.1} parent=11 // pred_check_branch
          %289 = sbr.rel (%p287) target = $region32
        $region31: #{tpu_custom_call.1} parent=11 // pred_region
          _
        $region32: #{tpu_custom_call.1} parent=11 // pred_fallthru
          _
        // Predicated region
        $region33: #{tpu_custom_call.1} parent=11 // pred_check
          %p290 = pneg %p171
        $region34: #{tpu_custom_call.1} parent=11 // pred_check_branch
          %292 = sbr.rel (%p290) target = $region36
        $region35: #{tpu_custom_call.1} parent=11 // pred_region
          _
        $region36: #{tpu_custom_call.1} parent=11 // pred_fallthru
          _
        // Predicated region
        $region37: #{tpu_custom_call.1} parent=11 // pred_check
          %p293 = pneg %p192
        $region38: #{tpu_custom_call.1} parent=11 // pred_check_branch
          %295 = sbr.rel (%p293) target = $region40
        $region39: #{tpu_custom_call.1} parent=11 // pred_region
          _
        $region40: #{tpu_custom_call.1} parent=11 // pred_fallthru
          _
        // Predicated region
        $region41: #{tpu_custom_call.1} parent=11 // pred_check
          %p296 = pneg %p213
        $region42: #{tpu_custom_call.1} parent=11 // pred_check_branch
          %298 = sbr.rel (%p296) target = $region44
        $region43: #{tpu_custom_call.1} parent=11 // pred_region
          _
        $region44: #{tpu_custom_call.1} parent=11 // pred_fallthru
          _
        // Predicated region
        $region45: #{tpu_custom_call.1} parent=11 // pred_check
          %p299 = pneg %p234
        $region46: #{tpu_custom_call.1} parent=11 // pred_check_branch
          %301 = sbr.rel (%p299) target = $region48
        $region47: #{tpu_custom_call.1} parent=11 // pred_region
          _
        $region48: #{tpu_custom_call.1} parent=11 // pred_fallthru
          _
      $region12: #{tpu_custom_call.1} parent=5 // pred_fallthru
        _
      %p302 = scmp.lt.s32.totalorder %s19, 2
      // Predicated region
      $region49: #{tpu_custom_call.1} parent=5 // pred_check
        %p303 = pneg %p302
      $region50: #{tpu_custom_call.1} parent=5 // pred_check_branch
        %305 = sbr.rel (%p303) target = $region52
      $region51: #{tpu_custom_call.1} parent=5 // pred_region
        // Predicated region
        $region53: #{tpu_custom_call.1} parent=51 // pred_check
          %p306 = pneg %p39
        $region54: #{tpu_custom_call.1} parent=51 // pred_check_branch
          %308 = sbr.rel (%p306) target = $region56
        $region55: #{tpu_custom_call.1} parent=51 // pred_region
          %s309 = smul.u32 8, %s19
          %p310 = scmp.lt.s32.totalorder %s309, 15
          %s311 = scalar_select %p310, %s309, 15
          %s312 = smul.addr %s311, 8
          %s313 = scalar_lea.vmem %s0, %s312
          %s314 = smul.u32 8, %s19
        $region56: #{tpu_custom_call.1} parent=51 // pred_fallthru
          _
      $region52: #{tpu_custom_call.1} parent=5 // pred_fallthru
        _
      %p315 = scmp.le.s32.totalorder 1, %s19
      %p316 = scmp.lt.s32.totalorder %s19, 3
      %p317 = pnand %p315, %p316
      %p318 = pneg %p317
      // Predicated region
      $region57: #{tpu_custom_call.1} parent=5 // pred_check
        _
      $region58: #{tpu_custom_call.1} parent=5 // pred_check_branch
        %320 = sbr.rel (%p317) target = $region60
      $region59: #{tpu_custom_call.1} parent=5 // pred_region
        %s321 = ssub.s32 %s19, 1
        %s322 = smul.u32 8, %s24
        %p323 = scmp.lt.s32.totalorder %s322, 15
        %s324 = scalar_select %p323, %s322, 15
        %s325 = smul.addr %s324, 8
        %s326 = scalar_lea.vmem %s0, %s325
        %p327 = pneg %p45
        %p328 = pneg %p42
        %p329 = pneg %p66
        %p330 = pneg %p63
        %p331 = pneg %p87
        %p332 = pneg %p84
        %p333 = pneg %p108
        %p334 = pneg %p105
        %p335 = pneg %p129
        %p336 = pneg %p126
        %p337 = pneg %p150
        %p338 = pneg %p147
        %p339 = pneg %p171
        %p340 = pneg %p168
        %p341 = pneg %p192
        %p342 = pneg %p189
        %p343 = pneg %p213
        %p344 = pneg %p210
        %p345 = pneg %p234
        %p346 = pneg %p231
        %p347 = pneg %p260
        %p348 = pneg %p257
        %s349 = sand.u32 %s247, 1
        %s350 = scalar_lea.sflag [#allocation3], %s349
        %s351 = sand.u32 %s247, 1
        %s352 = smul.addr %s351, 64
        %s353 = scalar_lea.vmem [#allocation2], %s352
        %s354 = smul.u32 8, %s24
        %p355 = scmp.lt.s32.totalorder %s354, 15
        %s356 = scalar_select %p355, %s354, 15
        %s357 = smul.addr %s356, 8
        %s358 = scalar_lea.vmem %s0, %s357
        %s359 = smul.u32 8, %s24
        %s360 = smul.u32 8, %s24
        %v362 = vld [vmem:[%s358] sm:$0xff]
        %v363 = vld [vmem:[%s358 + $0x8] sm:$0xff]
        %v364 = vld [vmem:[%s358 + $0x10] sm:$0xff]
        %v365 = vld [vmem:[%s358 + $0x18] sm:$0xff]
        %v366 = vld [vmem:[%s358 + $0x20] sm:$0xff]
        %v367 = vld [vmem:[%s358 + $0x28] sm:$0xff]
        %v368 = vld [vmem:[%s358 + $0x30] sm:$0xff]
        %v369 = vld [vmem:[%s358 + $0x38] sm:$0xff]
        %v370 = vld [vmem:[%s1] sm:$0xff]
        %v371 = vld [vmem:[%s1 + $0x8] sm:$0xff]
        %v372 = vld [vmem:[%s1 + $0x10] sm:$0xff]
        %v373 = vld [vmem:[%s1 + $0x18] sm:$0xff]
        %v374 = vld [vmem:[%s1 + $0x20] sm:$0xff]
        %v375 = vld [vmem:[%s1 + $0x28] sm:$0xff]
        %v376 = vld [vmem:[%s1 + $0x30] sm:$0xff]
        %v377 = vld [vmem:[%s1 + $0x38] sm:$0xff]
        %v378 = vpack.c.bf16 %v363, %v362
        %v379 = vpack.c.bf16 %v365, %v364
        %v380 = vpack.c.bf16 %v367, %v366
        %v381 = vpack.c.bf16 %v369, %v368
        %v382 = vld [vmem:[%s2] sm:$0xf]
        %v383 = vld [vmem:[%s2 + $0x4] sm:$0xf]
        %v384 = vld [vmem:[%s2 + $0x8] sm:$0xf]
        %v385 = vld [vmem:[%s2 + $0xc] sm:$0xf]
        %v386 = vld [vmem:[%s2 + $0x10] sm:$0xf]
        %v387 = vld [vmem:[%s2 + $0x14] sm:$0xf]
        %v388 = vld [vmem:[%s2 + $0x18] sm:$0xf]
        %v389 = vld [vmem:[%s2 + $0x1c] sm:$0xf]
        %v398 = vunpack.c.l.b16 %v382
        %v399 = vunpack.c.l.b16 %v383
        %v400 = vunpack.c.l.b16 %v384
        %v401 = vunpack.c.l.b16 %v385
        %v402 = vunpack.c.l.b16 %v386
        %v403 = vunpack.c.l.b16 %v387
        %v404 = vunpack.c.l.b16 %v388
        %v405 = vunpack.c.l.b16 %v389
        %v406 = vpack.c.b16 %v399, %v398
        %v407 = vpack.c.b16 %v401, %v400
        %v408 = vpack.c.b16 %v403, %v402
        %v409 = vpack.c.b16 %v405, %v404
        %vm414 = vcmask 523264
        %v416 = vsel %vm414, %v378, 0
        %v419 = vsel %vm414, %v379, 0
        %v422 = vsel %vm414, %v380, 0
        %v425 = vsel %vm414, %v381, 0
        %427 = vmatprep.subr.bf16.mxu0 0
        %428 = vmatpush1.bf16.msra.mxu0 %v406
        %429 = vmatprep.subr.bf16.mxu0 0
        %430 = vmatpush1.bf16.msra.mxu0 %v407
        %431 = vmatprep.subr.bf16.mxu0 0
        %432 = vmatpush1.bf16.msra.mxu0 %v408
        %433 = vmatprep.subr.bf16.mxu0 0
        %434 = vmatpush1.bf16.msra.mxu0 %v409
        %435 = vmatprep.subr.bf16.mxu0 0
        %436 = vmatpush1.bf16.msra.mxu0 0
        %437 = vmatprep.subr.bf16.mxu0 0
        %438 = vmatpush1.bf16.msra.mxu0 0
        %439 = vmatprep.subr.bf16.mxu0 0
        %440 = vmatpush1.bf16.msra.mxu0 0
        %441 = vmatprep.subr.bf16.mxu0 0
        %442 = vmatpush1.bf16.msra.mxu0 0
        %443 = vmatprep.subr.bf16.mxu0 0
        %444 = vmatpush1.bf16.msra.mxu0 0
        %445 = vmatprep.subr.bf16.mxu0 0
        %446 = vmatpush1.bf16.msra.mxu0 0
        %447 = vmatprep.subr.bf16.mxu0 0
        %448 = vmatpush1.bf16.msra.mxu0 0
        %449 = vmatprep.subr.bf16.mxu0 0
        %450 = vmatpush1.bf16.msra.mxu0 0
        %451 = vmatprep.subr.bf16.mxu0 0
        %452 = vmatpush1.bf16.msra.mxu0 0
        %453 = vmatprep.subr.bf16.mxu0 0
        %454 = vmatpush1.bf16.msra.mxu0 0
        %455 = vmatprep.subr.bf16.mxu0 0
        %456 = vmatpush1.bf16.msra.mxu0 0
        %457 = vmatprep.subr.bf16.mxu0 0
        %458 = vmatpush1.bf16.msra.mxu0 0
        %459 = vmatprep.mubr.bf16.mxu0 0
        %460 = vmatmul.mubr.bf16.gmra.mrb[0].mxu0 %v416
        %v461 = vpop.f32.mrb[0].mxu0
        %v462 = vadd.f32 0.0, %v461
        %v463 = vpop.f32.mrb[0].mxu0
        %v464 = vpop.f32.mrb[0].mxu0
        %v465 = vadd.f32 0.0, %v464
        %v466 = vpop.f32.mrb[0].mxu0
        %467 = vmatprep.mubr.bf16.mxu0 0
        %468 = vmatmul.mubr.bf16.gmra.mrb[0].mxu0 %v419
        %v469 = vpop.f32.mrb[0].mxu0
        %v470 = vadd.f32 0.0, %v469
        %v471 = vpop.f32.mrb[0].mxu0
        %v472 = vpop.f32.mrb[0].mxu0
        %v473 = vadd.f32 0.0, %v472
        %v474 = vpop.f32.mrb[0].mxu0
        %475 = vmatprep.mubr.bf16.mxu0 0
        %476 = vmatmul.mubr.bf16.gmra.mrb[0].mxu0 %v422
        %v477 = vpop.f32.mrb[0].mxu0
        %v478 = vadd.f32 0.0, %v477
        %v479 = vpop.f32.mrb[0].mxu0
        %v480 = vpop.f32.mrb[0].mxu0
        %v481 = vadd.f32 0.0, %v480
        %v482 = vpop.f32.mrb[0].mxu0
        %483 = vmatprep.mubr.bf16.mxu0 0
        %484 = vmatmul.mubr.bf16.gmra.mrb[0].mxu0 %v425
        %v485 = vpop.f32.mrb[0].mxu0
        %v486 = vadd.f32 0.0, %v485
        %v487 = vpop.f32.mrb[0].mxu0
        %v488 = vpop.f32.mrb[0].mxu0
        %v489 = vadd.f32 0.0, %v488
        %v490 = vpop.f32.mrb[0].mxu0
        %491 = vdwg.mxu0
        %v492 = vld [vmem:[%s9] sm:$0x1]
        %v493 = vlaneseq
        %v494 = vshrl.u32 %v493, 7
        %v495 = vsub.s32 0, %v494
        %v496 = vrot.slane %v492, %v495
        %v497 = vmul.f32 %v462, %v496
        %v498 = vmul.f32 %v465, %v496
        %v499 = vmul.f32 %v470, %v496
        %v500 = vmul.f32 %v473, %v496
        %v501 = vmul.f32 %v478, %v496
        %v502 = vmul.f32 %v481, %v496
        %v503 = vmul.f32 %v486, %v496
        %v504 = vmul.f32 %v489, %v496
        %v505 = vld [vmem:[%s9 + $0x1] sm:$0x1]
        %v506 = vlaneseq
        %v507 = vshrl.u32 %v506, 7
        %v508 = vsub.s32 0, %v507
        %v509 = vrot.slane %v505, %v508
        %v510 = vadd.f32 %v497, %v509
        %v511 = vadd.f32 %v498, %v509
        %v512 = vadd.f32 %v499, %v509
        %v513 = vadd.f32 %v500, %v509
        %v514 = vadd.f32 %v501, %v509
        %v515 = vadd.f32 %v502, %v509
        %v516 = vadd.f32 %v503, %v509
        %v517 = vadd.f32 %v504, %v509
        %v518 = vmax.f32 %v510, 0.0
        %v519 = vmax.f32 %v511, 0.0
        %v520 = vmax.f32 %v512, 0.0
        %v521 = vmax.f32 %v513, 0.0
        %v522 = vmax.f32 %v514, 0.0
        %v523 = vmax.f32 %v515, 0.0
        %v524 = vmax.f32 %v516, 0.0
        %v525 = vmax.f32 %v517, 0.0
        %v526 = vmin.f32 %v518, 6.0
        %v527 = vmin.f32 %v519, 6.0
        %v528 = vmin.f32 %v520, 6.0
        %v529 = vmin.f32 %v521, 6.0
        %v530 = vmin.f32 %v522, 6.0
        %v531 = vmin.f32 %v523, 6.0
        %v532 = vmin.f32 %v524, 6.0
        %v533 = vmin.f32 %v525, 6.0
        %vm534 = vcmask 130048
        %535 = vst.msk [vmem:[%s353] sm:$0xff] %vm534, %v526
        %536 = vst.msk [vmem:[%s353 + $0x8] sm:$0xff] %vm534, %v527
        %537 = vst.msk [vmem:[%s353 + $0x10] sm:$0xff] %vm534, %v528
        %538 = vst.msk [vmem:[%s353 + $0x18] sm:$0xff] %vm534, %v529
        %539 = vst.msk [vmem:[%s353 + $0x20] sm:$0xff] %vm534, %v530
        %540 = vst.msk [vmem:[%s353 + $0x28] sm:$0xff] %vm534, %v531
        %541 = vst.msk [vmem:[%s353 + $0x30] sm:$0xff] %vm534, %v532
        %542 = vst.msk [vmem:[%s353 + $0x38] sm:$0xff] %vm534, %v533
        %551 = vrot.lane.b32.xlu0 %v526, 112
        %v552 = vpop.permute.xlu0 %551
        %553 = vrot.lane.b32.xlu0 %v527, 112
        %v554 = vpop.permute.xlu0 %553
        %555 = vrot.lane.b32.xlu0 %v528, 112
        %v556 = vpop.permute.xlu0 %555
        %557 = vrot.lane.b32.xlu0 %v529, 112
        %v558 = vpop.permute.xlu0 %557
        %559 = vrot.lane.b32.xlu0 %v530, 112
        %v560 = vpop.permute.xlu0 %559
        %561 = vrot.lane.b32.xlu0 %v531, 112
        %v562 = vpop.permute.xlu0 %561
        %563 = vrot.lane.b32.xlu0 %v532, 112
        %v564 = vpop.permute.xlu0 %563
        %565 = vrot.lane.b32.xlu0 %v533, 112
        %v566 = vpop.permute.xlu0 %565
        %v575 = vrot.slane %v552, 7
        %v576 = vrot.slane %v554, 7
        %v577 = vrot.slane %v556, 7
        %v578 = vrot.slane %v558, 7
        %v579 = vrot.slane %v560, 7
        %v580 = vrot.slane %v562, 7
        %v581 = vrot.slane %v564, 7
        %v582 = vrot.slane %v566, 7
        %v583 = vlaneseq
        %v584 = vshrl.u32 %v583, 7
        %vm585 = vcmp.lt.s32.totalorder %v584, 1
        %v586 = vsel %vm585, %v581, %v582
        %v587 = vsel %vm585, %v580, %v581
        %v588 = vsel %vm585, %v579, %v580
        %v589 = vsel %vm585, %v578, %v579
        %v590 = vsel %vm585, %v577, %v578
        %v591 = vsel %vm585, %v576, %v577
        %v592 = vsel %vm585, %v575, %v576
        %v593 = vsel %vm585, %v582, %v575
        %595 = vset.pattern.permute.xlu0 3
        %596 = vperm.xlu0 %595, %v370
        %v597 = vpop.permute.xlu0 %596
        %600 = vset.pattern.permute.xlu0 3
        %601 = vperm.xlu0 %600, %v371
        %v602 = vpop.permute.xlu0 %601
        %605 = vset.pattern.permute.xlu0 3
        %606 = vperm.xlu0 %605, %v372
        %v607 = vpop.permute.xlu0 %606
        %610 = vset.pattern.permute.xlu0 3
        %611 = vperm.xlu0 %610, %v373
        %v612 = vpop.permute.xlu0 %611
        %615 = vset.pattern.permute.xlu0 3
        %616 = vperm.xlu0 %615, %v374
        %v617 = vpop.permute.xlu0 %616
        %620 = vset.pattern.permute.xlu0 3
        %621 = vperm.xlu0 %620, %v375
        %v622 = vpop.permute.xlu0 %621
        %625 = vset.pattern.permute.xlu0 3
        %626 = vperm.xlu0 %625, %v376
        %v627 = vpop.permute.xlu0 %626
        %630 = vset.pattern.permute.xlu0 3
        %631 = vperm.xlu0 %630, %v377
        %v632 = vpop.permute.xlu0 %631
        %v634 = vmul.f32 %v597, %v593
        %v635 = vmul.f32 %v602, %v592
        %v636 = vmul.f32 %v607, %v591
        %v637 = vmul.f32 %v612, %v590
        %v638 = vmul.f32 %v617, %v589
        %v639 = vmul.f32 %v622, %v588
        %v640 = vmul.f32 %v627, %v587
        %v641 = vmul.f32 %v632, %v586
        %v642 = vrot.slane %v552, 1
        %v643 = vrot.slane %v554, 1
        %v644 = vrot.slane %v556, 1
        %v645 = vrot.slane %v558, 1
        %v646 = vrot.slane %v560, 1
        %v647 = vrot.slane %v562, 1
        %v648 = vrot.slane %v564, 1
        %v649 = vrot.slane %v566, 1
        %vm650 = vcmp.lt.s32.totalorder %v584, 7
        %v651 = vsel %vm650, %v648, %v649
        %v652 = vsel %vm650, %v647, %v648
        %v653 = vsel %vm650, %v646, %v647
        %v654 = vsel %vm650, %v645, %v646
        %v655 = vsel %vm650, %v644, %v645
        %v656 = vsel %vm650, %v643, %v644
        %v657 = vsel %vm650, %v642, %v643
        %v658 = vsel %vm650, %v649, %v642
        %659 = vset.pattern.permute.xlu0 4
        %660 = vperm.xlu0 %659, %v370
        %v661 = vpop.permute.xlu0 %660
        %663 = vset.pattern.permute.xlu0 4
        %664 = vperm.xlu0 %663, %v371
        %v665 = vpop.permute.xlu0 %664
        %667 = vset.pattern.permute.xlu0 4
        %668 = vperm.xlu0 %667, %v372
        %v669 = vpop.permute.xlu0 %668
        %671 = vset.pattern.permute.xlu0 4
        %672 = vperm.xlu0 %671, %v373
        %v673 = vpop.permute.xlu0 %672
        %675 = vset.pattern.permute.xlu0 4
        %676 = vperm.xlu0 %675, %v374
        %v677 = vpop.permute.xlu0 %676
        %679 = vset.pattern.permute.xlu0 4
        %680 = vperm.xlu0 %679, %v375
        %v681 = vpop.permute.xlu0 %680
        %683 = vset.pattern.permute.xlu0 4
        %684 = vperm.xlu0 %683, %v376
        %v685 = vpop.permute.xlu0 %684
        %687 = vset.pattern.permute.xlu0 4
        %688 = vperm.xlu0 %687, %v377
        %v689 = vpop.permute.xlu0 %688
        %v691 = vmul.f32 %v661, %v657
        %v692 = vmul.f32 %v665, %v656
        %v693 = vmul.f32 %v669, %v655
        %v694 = vmul.f32 %v673, %v654
        %v695 = vmul.f32 %v677, %v653
        %v696 = vmul.f32 %v681, %v652
        %v697 = vmul.f32 %v685, %v651
        %v698 = vmul.f32 %v689, %v658
        %707 = vrot.lane.b32.xlu0 %v691, 32
        %v708 = vpop.permute.xlu0 %707
        %709 = vrot.lane.b32.xlu0 %v692, 32
        %v710 = vpop.permute.xlu0 %709
        %711 = vrot.lane.b32.xlu0 %v693, 32
        %v712 = vpop.permute.xlu0 %711
        %713 = vrot.lane.b32.xlu0 %v694, 32
        %v714 = vpop.permute.xlu0 %713
        %715 = vrot.lane.b32.xlu0 %v695, 32
        %v716 = vpop.permute.xlu0 %715
        %717 = vrot.lane.b32.xlu0 %v696, 32
        %v718 = vpop.permute.xlu0 %717
        %719 = vrot.lane.b32.xlu0 %v697, 32
        %v720 = vpop.permute.xlu0 %719
        %721 = vrot.lane.b32.xlu0 %v698, 32
        %v722 = vpop.permute.xlu0 %721
        %v731 = vsel %vm534, %v634, %v526
        %v732 = vsel %vm534, %v635, %v527
        %v733 = vsel %vm534, %v636, %v528
        %v734 = vsel %vm534, %v637, %v529
        %v735 = vsel %vm534, %v638, %v530
        %v736 = vsel %vm534, %v639, %v531
        %v737 = vsel %vm534, %v640, %v532
        %v738 = vsel %vm534, %v641, %v533
        %vm739 = vcmask 261120
        %v740 = vsel %vm739, %v731, %v708
        %v741 = vsel %vm739, %v732, %v710
        %v742 = vsel %vm739, %v733, %v712
        %v743 = vsel %vm739, %v734, %v714
        %v744 = vsel %vm739, %v735, %v716
        %v745 = vsel %vm739, %v736, %v718
        %v746 = vsel %vm739, %v737, %v720
        %v747 = vsel %vm739, %v738, %v722
        %v748 = vpack.c.bf16 %v741, %v740
        %v749 = vpack.c.bf16 %v743, %v742
        %v750 = vpack.c.bf16 %v745, %v744
        %v751 = vpack.c.bf16 %v747, %v746
        %v752 = vld [vmem:[%s3] sm:$0xf]
        %v753 = vld [vmem:[%s3 + $0x4] sm:$0xf]
        %v754 = vld [vmem:[%s3 + $0x8] sm:$0xf]
        %v755 = vld [vmem:[%s3 + $0xc] sm:$0xf]
        %v756 = vld [vmem:[%s3 + $0x10] sm:$0xf]
        %v757 = vld [vmem:[%s3 + $0x14] sm:$0xf]
        %v764 = vunpack.c.l.b16 %v752
        %v765 = vunpack.c.l.b16 %v753
        %v766 = vunpack.c.l.b16 %v754
        %v767 = vunpack.c.l.b16 %v755
        %v768 = vunpack.c.l.b16 %v756
        %v769 = vunpack.c.l.b16 %v757
        %v770 = vpack.c.b16 %v765, %v764
        %v771 = vpack.c.b16 %v767, %v766
        %v772 = vpack.c.b16 %v769, %v768
        %vm776 = vcmask 392192
        %v778 = vsel %vm776, %v748, 0
        %v781 = vsel %vm776, %v749, 0
        %v784 = vsel %vm776, %v750, 0
        %v787 = vsel %vm776, %v751, 0
        %789 = vmatprep.subr.bf16.mxu0 0
        %790 = vmatpush1.bf16.msra.mxu0 %v770
        %791 = vmatprep.subr.bf16.mxu0 0
        %792 = vmatpush1.bf16.msra.mxu0 %v771
        %793 = vmatprep.subr.bf16.mxu0 0
        %794 = vmatpush1.bf16.msra.mxu0 %v772
        %795 = vmatprep.subr.bf16.mxu0 0
        %796 = vmatpush1.bf16.msra.mxu0 0
        %797 = vmatprep.subr.bf16.mxu0 0
        %798 = vmatpush1.bf16.msra.mxu0 0
        %799 = vmatprep.subr.bf16.mxu0 0
        %800 = vmatpush1.bf16.msra.mxu0 0
        %801 = vmatprep.subr.bf16.mxu0 0
        %802 = vmatpush1.bf16.msra.mxu0 0
        %803 = vmatprep.subr.bf16.mxu0 0
        %804 = vmatpush1.bf16.msra.mxu0 0
        %805 = vmatprep.subr.bf16.mxu0 0
        %806 = vmatpush1.bf16.msra.mxu0 0
        %807 = vmatprep.subr.bf16.mxu0 0
        %808 = vmatpush1.bf16.msra.mxu0 0
        %809 = vmatprep.subr.bf16.mxu0 0
        %810 = vmatpush1.bf16.msra.mxu0 0
        %811 = vmatprep.subr.bf16.mxu0 0
        %812 = vmatpush1.bf16.msra.mxu0 0
        %813 = vmatprep.subr.bf16.mxu0 0
        %814 = vmatpush1.bf16.msra.mxu0 0
        %815 = vmatprep.subr.bf16.mxu0 0
        %816 = vmatpush1.bf16.msra.mxu0 0
        %817 = vmatprep.subr.bf16.mxu0 0
        %818 = vmatpush1.bf16.msra.mxu0 0
        %819 = vmatprep.subr.bf16.mxu0 0
        %820 = vmatpush1.bf16.msra.mxu0 0
        %821 = vmatprep.mubr.bf16.mxu0 0
        %822 = vmatmul.mubr.bf16.gmra.mrb[0].mxu0 %v778
        %v823 = vpop.f32.mrb[0].mxu0
        %v824 = vadd.f32 0.0, %v823
        %v825 = vpop.f32.mrb[0].mxu0
        %v826 = vpop.f32.mrb[0].mxu0
        %v827 = vadd.f32 0.0, %v826
        %v828 = vpop.f32.mrb[0].mxu0
        %829 = vmatprep.mubr.bf16.mxu0 0
        %830 = vmatmul.mubr.bf16.gmra.mrb[0].mxu0 %v781
        %v831 = vpop.f32.mrb[0].mxu0
        %v832 = vadd.f32 0.0, %v831
        %v833 = vpop.f32.mrb[0].mxu0
        %v834 = vpop.f32.mrb[0].mxu0
        %v835 = vadd.f32 0.0, %v834
        %v836 = vpop.f32.mrb[0].mxu0
        %837 = vmatprep.mubr.bf16.mxu0 0
        %838 = vmatmul.mubr.bf16.gmra.mrb[0].mxu0 %v784
        %v839 = vpop.f32.mrb[0].mxu0
        %v840 = vadd.f32 0.0, %v839
        %v841 = vpop.f32.mrb[0].mxu0
        %v842 = vpop.f32.mrb[0].mxu0
        %v843 = vadd.f32 0.0, %v842
        %v844 = vpop.f32.mrb[0].mxu0
        %845 = vmatprep.mubr.bf16.mxu0 0
        %846 = vmatmul.mubr.bf16.gmra.mrb[0].mxu0 %v787
        %v847 = vpop.f32.mrb[0].mxu0
        %v848 = vadd.f32 0.0, %v847
        %v849 = vpop.f32.mrb[0].mxu0
        %v850 = vpop.f32.mrb[0].mxu0
        %v851 = vadd.f32 0.0, %v850
        %v852 = vpop.f32.mrb[0].mxu0
        %853 = vdwg.mxu0
        %v854 = vld [vmem:[%s9] sm:$0x1]
        %v855 = vlaneseq
        %v856 = vshrl.u32 %v855, 7
        %v857 = vsub.s32 0, %v856
        %v858 = vrot.slane %v854, %v857
        %860 = vrot.lane.b32.xlu0 %v858, 80
        %v861 = vpop.permute.xlu0 %860
        %v863 = vmul.f32 %v824, %v861
        %v864 = vmul.f32 %v827, %v861
        %v865 = vmul.f32 %v832, %v861
        %v866 = vmul.f32 %v835, %v861
        %v867 = vmul.f32 %v840, %v861
        %v868 = vmul.f32 %v843, %v861
        %v869 = vmul.f32 %v848, %v861
        %v870 = vmul.f32 %v851, %v861
        %v871 = vld [vmem:[%s9 + $0x1] sm:$0x1]
        %v872 = vlaneseq
        %v873 = vshrl.u32 %v872, 7
        %v874 = vsub.s32 0, %v873
        %v875 = vrot.slane %v871, %v874
        %877 = vrot.lane.b32.xlu0 %v875, 80
        %v878 = vpop.permute.xlu0 %877
        %v880 = vadd.f32 %v863, %v878
        %v881 = vadd.f32 %v864, %v878
        %v882 = vadd.f32 %v865, %v878
        %v883 = vadd.f32 %v866, %v878
        %v884 = vadd.f32 %v867, %v878
        %v885 = vadd.f32 %v868, %v878
        %v886 = vadd.f32 %v869, %v878
        %v887 = vadd.f32 %v870, %v878
        %v888 = vmax.f32 %v880, 0.0
        %v889 = vmax.f32 %v881, 0.0
        %v890 = vmax.f32 %v882, 0.0
        %v891 = vmax.f32 %v883, 0.0
        %v892 = vmax.f32 %v884, 0.0
        %v893 = vmax.f32 %v885, 0.0
        %v894 = vmax.f32 %v886, 0.0
        %v895 = vmax.f32 %v887, 0.0
        %v896 = vmin.f32 %v888, 6.0
        %v897 = vmin.f32 %v889, 6.0
        %v898 = vmin.f32 %v890, 6.0
        %v899 = vmin.f32 %v891, 6.0
        %v900 = vmin.f32 %v892, 6.0
        %v901 = vmin.f32 %v893, 6.0
        %v902 = vmin.f32 %v894, 6.0
        %v903 = vmin.f32 %v895, 6.0
        %912 = vrot.lane.b32.xlu0 %v896, 16
        %v913 = vpop.permute.xlu0 %912
        %914 = vrot.lane.b32.xlu0 %v897, 16
        %v915 = vpop.permute.xlu0 %914
        %916 = vrot.lane.b32.xlu0 %v898, 16
        %v917 = vpop.permute.xlu0 %916
        %918 = vrot.lane.b32.xlu0 %v899, 16
        %v919 = vpop.permute.xlu0 %918
        %920 = vrot.lane.b32.xlu0 %v900, 16
        %v921 = vpop.permute.xlu0 %920
        %922 = vrot.lane.b32.xlu0 %v901, 16
        %v923 = vpop.permute.xlu0 %922
        %924 = vrot.lane.b32.xlu0 %v902, 16
        %v925 = vpop.permute.xlu0 %924
        %926 = vrot.lane.b32.xlu0 %v903, 16
        %v927 = vpop.permute.xlu0 %926
        %vm936 = vcmask 326784
        %937 = vst.msk [vmem:[%s353] sm:$0xff] %vm936, %v913
        %938 = vst.msk [vmem:[%s353 + $0x8] sm:$0xff] %vm936, %v915
        %939 = vst.msk [vmem:[%s353 + $0x10] sm:$0xff] %vm936, %v917
        %940 = vst.msk [vmem:[%s353 + $0x18] sm:$0xff] %vm936, %v919
        %941 = vst.msk [vmem:[%s353 + $0x20] sm:$0xff] %vm936, %v921
        %942 = vst.msk [vmem:[%s353 + $0x28] sm:$0xff] %vm936, %v923
        %943 = vst.msk [vmem:[%s353 + $0x30] sm:$0xff] %vm936, %v925
        %944 = vst.msk [vmem:[%s353 + $0x38] sm:$0xff] %vm936, %v927
        %945 = vset.pattern.permute.xlu0 1
        %946 = vperm.xlu0 %945, %v370
        %v947 = vpop.permute.xlu0 %946
        %949 = vset.pattern.permute.xlu0 1
        %950 = vperm.xlu0 %949, %v371
        %v951 = vpop.permute.xlu0 %950
        %953 = vset.pattern.permute.xlu0 1
        %954 = vperm.xlu0 %953, %v372
        %v955 = vpop.permute.xlu0 %954
        %957 = vset.pattern.permute.xlu0 1
        %958 = vperm.xlu0 %957, %v373
        %v959 = vpop.permute.xlu0 %958
        %961 = vset.pattern.permute.xlu0 1
        %962 = vperm.xlu0 %961, %v374
        %v963 = vpop.permute.xlu0 %962
        %965 = vset.pattern.permute.xlu0 1
        %966 = vperm.xlu0 %965, %v375
        %v967 = vpop.permute.xlu0 %966
        %969 = vset.pattern.permute.xlu0 1
        %970 = vperm.xlu0 %969, %v376
        %v971 = vpop.permute.xlu0 %970
        %973 = vset.pattern.permute.xlu0 1
        %974 = vperm.xlu0 %973, %v377
        %v975 = vpop.permute.xlu0 %974
        %v977 = vmul.f32 %v947, %v566
        %v978 = vmul.f32 %v951, %v552
        %v979 = vmul.f32 %v955, %v554
        %v980 = vmul.f32 %v959, %v556
        %v981 = vmul.f32 %v963, %v558
        %v982 = vmul.f32 %v967, %v560
        %v983 = vmul.f32 %v971, %v562
        %v984 = vmul.f32 %v975, %v564
        %985 = vset.pattern.permute.xlu0 6
        %986 = vperm.xlu0 %985, %v370
        %v987 = vpop.permute.xlu0 %986
        %989 = vset.pattern.permute.xlu0 6
        %990 = vperm.xlu0 %989, %v371
        %v991 = vpop.permute.xlu0 %990
        %993 = vset.pattern.permute.xlu0 6
        %994 = vperm.xlu0 %993, %v372
        %v995 = vpop.permute.xlu0 %994
        %997 = vset.pattern.permute.xlu0 6
        %998 = vperm.xlu0 %997, %v373
        %v999 = vpop.permute.xlu0 %998
        %1001 = vset.pattern.permute.xlu0 6
        %1002 = vperm.xlu0 %1001, %v374
        %v1003 = vpop.permute.xlu0 %1002
        %1005 = vset.pattern.permute.xlu0 6
        %1006 = vperm.xlu0 %1005, %v375
        %v1007 = vpop.permute.xlu0 %1006
        %1009 = vset.pattern.permute.xlu0 6
        %1010 = vperm.xlu0 %1009, %v376
        %v1011 = vpop.permute.xlu0 %1010
        %1013 = vset.pattern.permute.xlu0 6
        %1014 = vperm.xlu0 %1013, %v377
        %v1015 = vpop.permute.xlu0 %1014
        %v1017 = vmul.f32 %v987, %v554
        %v1018 = vmul.f32 %v991, %v556
        %v1019 = vmul.f32 %v995, %v558
        %v1020 = vmul.f32 %v999, %v560
        %v1021 = vmul.f32 %v1003, %v562
        %v1022 = vmul.f32 %v1007, %v564
        %v1023 = vmul.f32 %v1011, %v566
        %v1024 = vmul.f32 %v1015, %v552
        %1033 = vrot.lane.b32.xlu0 %v1017, 32
        %v1034 = vpop.permute.xlu0 %1033
        %1035 = vrot.lane.b32.xlu0 %v1018, 32
        %v1036 = vpop.permute.xlu0 %1035
        %1037 = vrot.lane.b32.xlu0 %v1019, 32
        %v1038 = vpop.permute.xlu0 %1037
        %1039 = vrot.lane.b32.xlu0 %v1020, 32
        %v1040 = vpop.permute.xlu0 %1039
        %1041 = vrot.lane.b32.xlu0 %v1021, 32
        %v1042 = vpop.permute.xlu0 %1041
        %1043 = vrot.lane.b32.xlu0 %v1022, 32
        %v1044 = vpop.permute.xlu0 %1043
        %1045 = vrot.lane.b32.xlu0 %v1023, 32
        %v1046 = vpop.permute.xlu0 %1045
        %1047 = vrot.lane.b32.xlu0 %v1024, 32
        %v1048 = vpop.permute.xlu0 %1047
        %v1057 = vsel %vm534, %v977, %v526
        %v1058 = vsel %vm534, %v978, %v527
        %v1059 = vsel %vm534, %v979, %v528
        %v1060 = vsel %vm534, %v980, %v529
        %v1061 = vsel %vm534, %v981, %v530
        %v1062 = vsel %vm534, %v982, %v531
        %v1063 = vsel %vm534, %v983, %v532
        %v1064 = vsel %vm534, %v984, %v533
        %v1065 = vsel %vm739, %v1057, %v1034
        %v1066 = vsel %vm739, %v1058, %v1036
        %v1067 = vsel %vm739, %v1059, %v1038
        %v1068 = vsel %vm739, %v1060, %v1040
        %v1069 = vsel %vm739, %v1061, %v1042
        %v1070 = vsel %vm739, %v1062, %v1044
        %v1071 = vsel %vm739, %v1063, %v1046
        %v1072 = vsel %vm739, %v1064, %v1048
        %v1073 = vpack.c.bf16 %v1066, %v1065
        %v1074 = vpack.c.bf16 %v1068, %v1067
        %v1075 = vpack.c.bf16 %v1070, %v1069
        %v1076 = vpack.c.bf16 %v1072, %v1071
        %v1077 = vld [vmem:[%s4] sm:$0xf]
        %v1078 = vld [vmem:[%s4 + $0x4] sm:$0xf]
        %v1079 = vld [vmem:[%s4 + $0x8] sm:$0xf]
        %v1080 = vld [vmem:[%s4 + $0xc] sm:$0xf]
        %v1081 = vld [vmem:[%s4 + $0x10] sm:$0xf]
        %v1082 = vld [vmem:[%s4 + $0x14] sm:$0xf]
        %v1089 = vunpack.c.l.b16 %v1077
        %v1090 = vunpack.c.l.b16 %v1078
        %v1091 = vunpack.c.l.b16 %v1079
        %v1092 = vunpack.c.l.b16 %v1080
        %v1093 = vunpack.c.l.b16 %v1081
        %v1094 = vunpack.c.l.b16 %v1082
        %v1095 = vpack.c.b16 %v1090, %v1089
        %v1096 = vpack.c.b16 %v1092, %v1091
        %v1097 = vpack.c.b16 %v1094, %v1093
        %v1102 = vsel %vm776, %v1073, 0
        %v1105 = vsel %vm776, %v1074, 0
        %v1108 = vsel %vm776, %v1075, 0
        %v1111 = vsel %vm776, %v1076, 0
        %1113 = vmatprep.subr.bf16.mxu0 0
        %1114 = vmatpush1.bf16.msra.mxu0 %v1095
        %1115 = vmatprep.subr.bf16.mxu0 0
        %1116 = vmatpush1.bf16.msra.mxu0 %v1096
        %1117 = vmatprep.subr.bf16.mxu0 0
        %1118 = vmatpush1.bf16.msra.mxu0 %v1097
        %1119 = vmatprep.subr.bf16.mxu0 0
        %1120 = vmatpush1.bf16.msra.mxu0 0
        %1121 = vmatprep.subr.bf16.mxu0 0
        %1122 = vmatpush1.bf16.msra.mxu0 0
        %1123 = vmatprep.subr.bf16.mxu0 0
        %1124 = vmatpush1.bf16.msra.mxu0 0
        %1125 = vmatprep.subr.bf16.mxu0 0
        %1126 = vmatpush1.bf16.msra.mxu0 0
        %1127 = vmatprep.subr.bf16.mxu0 0
        %1128 = vmatpush1.bf16.msra.mxu0 0
        %1129 = vmatprep.subr.bf16.mxu0 0
        %1130 = vmatpush1.bf16.msra.mxu0 0
        %1131 = vmatprep.subr.bf16.mxu0 0
        %1132 = vmatpush1.bf16.msra.mxu0 0
        %1133 = vmatprep.subr.bf16.mxu0 0
        %1134 = vmatpush1.bf16.msra.mxu0 0
        %1135 = vmatprep.subr.bf16.mxu0 0
        %1136 = vmatpush1.bf16.msra.mxu0 0
        %1137 = vmatprep.subr.bf16.mxu0 0
        %1138 = vmatpush1.bf16.msra.mxu0 0
        %1139 = vmatprep.subr.bf16.mxu0 0
        %1140 = vmatpush1.bf16.msra.mxu0 0
        %1141 = vmatprep.subr.bf16.mxu0 0
        %1142 = vmatpush1.bf16.msra.mxu0 0
        %1143 = vmatprep.subr.bf16.mxu0 0
        %1144 = vmatpush1.bf16.msra.mxu0 0
        %1145 = vmatprep.mubr.bf16.mxu0 0
        %1146 = vmatmul.mubr.bf16.gmra.mrb[0].mxu0 %v1102
        %v1147 = vpop.f32.mrb[0].mxu0
        %v1148 = vadd.f32 0.0, %v1147
        %v1149 = vpop.f32.mrb[0].mxu0
        %v1150 = vpop.f32.mrb[0].mxu0
        %v1151 = vadd.f32 0.0, %v1150
        %v1152 = vpop.f32.mrb[0].mxu0
        %1153 = vmatprep.mubr.bf16.mxu0 0
        %1154 = vmatmul.mubr.bf16.gmra.mrb[0].mxu0 %v1105
        %v1155 = vpop.f32.mrb[0].mxu0
        %v1156 = vadd.f32 0.0, %v1155
        %v1157 = vpop.f32.mrb[0].mxu0
        %v1158 = vpop.f32.mrb[0].mxu0
        %v1159 = vadd.f32 0.0, %v1158
        %v1160 = vpop.f32.mrb[0].mxu0
        %1161 = vmatprep.mubr.bf16.mxu0 0
        %1162 = vmatmul.mubr.bf16.gmra.mrb[0].mxu0 %v1108
        %v1163 = vpop.f32.mrb[0].mxu0
        %v1164 = vadd.f32 0.0, %v1163
        %v1165 = vpop.f32.mrb[0].mxu0
        %v1166 = vpop.f32.mrb[0].mxu0
        %v1167 = vadd.f32 0.0, %v1166
        %v1168 = vpop.f32.mrb[0].mxu0
        %1169 = vmatprep.mubr.bf16.mxu0 0
        %1170 = vmatmul.mubr.bf16.gmra.mrb[0].mxu0 %v1111
        %v1171 = vpop.f32.mrb[0].mxu0
        %v1172 = vadd.f32 0.0, %v1171
        %v1173 = vpop.f32.mrb[0].mxu0
        %v1174 = vpop.f32.mrb[0].mxu0
        %v1175 = vadd.f32 0.0, %v1174
        %v1176 = vpop.f32.mrb[0].mxu0
        %1177 = vdwg.mxu0
        %v1178 = vld [vmem:[%s9] sm:$0x1]
        %v1179 = vlaneseq
        %v1180 = vshrl.u32 %v1179, 7
        %v1181 = vsub.s32 0, %v1180
        %v1182 = vrot.slane %v1178, %v1181
        %1184 = vrot.lane.b32.xlu0 %v1182, 56
        %v1185 = vpop.permute.xlu0 %1184
        %v1187 = vmul.f32 %v1148, %v1185
        %v1188 = vmul.f32 %v1151, %v1185
        %v1189 = vmul.f32 %v1156, %v1185
        %v1190 = vmul.f32 %v1159, %v1185
        %v1191 = vmul.f32 %v1164, %v1185
        %v1192 = vmul.f32 %v1167, %v1185
        %v1193 = vmul.f32 %v1172, %v1185
        %v1194 = vmul.f32 %v1175, %v1185
        %v1195 = vld [vmem:[%s9 + $0x1] sm:$0x1]
        %v1196 = vlaneseq
        %v1197 = vshrl.u32 %v1196, 7
        %v1198 = vsub.s32 0, %v1197
        %v1199 = vrot.slane %v1195, %v1198
        %1201 = vrot.lane.b32.xlu0 %v1199, 56
        %v1202 = vpop.permute.xlu0 %1201
        %v1204 = vadd.f32 %v1187, %v1202
        %v1205 = vadd.f32 %v1188, %v1202
        %v1206 = vadd.f32 %v1189, %v1202
        %v1207 = vadd.f32 %v1190, %v1202
        %v1208 = vadd.f32 %v1191, %v1202
        %v1209 = vadd.f32 %v1192, %v1202
        %v1210 = vadd.f32 %v1193, %v1202
        %v1211 = vadd.f32 %v1194, %v1202
        %v1212 = vmax.f32 %v1204, 0.0
        %v1213 = vmax.f32 %v1205, 0.0
        %v1214 = vmax.f32 %v1206, 0.0
        %v1215 = vmax.f32 %v1207, 0.0
        %v1216 = vmax.f32 %v1208, 0.0
        %v1217 = vmax.f32 %v1209, 0.0
        %v1218 = vmax.f32 %v1210, 0.0
        %v1219 = vmax.f32 %v1211, 0.0
        %v1220 = vmin.f32 %v1212, 6.0
        %v1221 = vmin.f32 %v1213, 6.0
        %v1222 = vmin.f32 %v1214, 6.0
        %v1223 = vmin.f32 %v1215, 6.0
        %v1224 = vmin.f32 %v1216, 6.0
        %v1225 = vmin.f32 %v1217, 6.0
        %v1226 = vmin.f32 %v1218, 6.0
        %v1227 = vmin.f32 %v1219, 6.0
        %1236 = vrot.lane.b32.xlu0 %v1220, 40
        %v1237 = vpop.permute.xlu0 %1236
        %1238 = vrot.lane.b32.xlu0 %v1221, 40
        %v1239 = vpop.permute.xlu0 %1238
        %1240 = vrot.lane.b32.xlu0 %v1222, 40
        %v1241 = vpop.permute.xlu0 %1240
        %1242 = vrot.lane.b32.xlu0 %v1223, 40
        %v1243 = vpop.permute.xlu0 %1242
        %1244 = vrot.lane.b32.xlu0 %v1224, 40
        %v1245 = vpop.permute.xlu0 %1244
        %1246 = vrot.lane.b32.xlu0 %v1225, 40
        %v1247 = vpop.permute.xlu0 %1246
        %1248 = vrot.lane.b32.xlu0 %v1226, 40
        %v1249 = vpop.permute.xlu0 %1248
        %1250 = vrot.lane.b32.xlu0 %v1227, 40
        %v1251 = vpop.permute.xlu0 %1250
        %vm1260 = vcmask 523584
        %1261 = vst.msk [vmem:[%s353] sm:$0xff] %vm1260, %v1237
        %1262 = vst.msk [vmem:[%s353 + $0x8] sm:$0xff] %vm1260, %v1239
        %1263 = vst.msk [vmem:[%s353 + $0x10] sm:$0xff] %vm1260, %v1241
        %1264 = vst.msk [vmem:[%s353 + $0x18] sm:$0xff] %vm1260, %v1243
        %1265 = vst.msk [vmem:[%s353 + $0x20] sm:$0xff] %vm1260, %v1245
        %1266 = vst.msk [vmem:[%s353 + $0x28] sm:$0xff] %vm1260, %v1247
        %1267 = vst.msk [vmem:[%s353 + $0x30] sm:$0xff] %vm1260, %v1249
        %1268 = vst.msk [vmem:[%s353 + $0x38] sm:$0xff] %vm1260, %v1251
        %1269 = vrot.lane.b32.xlu0 %v526, 96
        %v1270 = vpop.permute.xlu0 %1269
        %1271 = vrot.lane.b32.xlu0 %v527, 96
        %v1272 = vpop.permute.xlu0 %1271
        %1273 = vrot.lane.b32.xlu0 %v528, 96
        %v1274 = vpop.permute.xlu0 %1273
        %1275 = vrot.lane.b32.xlu0 %v529, 96
        %v1276 = vpop.permute.xlu0 %1275
        %1277 = vrot.lane.b32.xlu0 %v530, 96
        %v1278 = vpop.permute.xlu0 %1277
        %1279 = vrot.lane.b32.xlu0 %v531, 96
        %v1280 = vpop.permute.xlu0 %1279
        %1281 = vrot.lane.b32.xlu0 %v532, 96
        %v1282 = vpop.permute.xlu0 %1281
        %1283 = vrot.lane.b32.xlu0 %v533, 96
        %v1284 = vpop.permute.xlu0 %1283
        %v1293 = vrot.slane %v1270, 7
        %v1294 = vrot.slane %v1272, 7
        %v1295 = vrot.slane %v1274, 7
        %v1296 = vrot.slane %v1276, 7
        %v1297 = vrot.slane %v1278, 7
        %v1298 = vrot.slane %v1280, 7
        %v1299 = vrot.slane %v1282, 7
        %v1300 = vrot.slane %v1284, 7
        %v1301 = vsel %vm585, %v1299, %v1300
        %v1302 = vsel %vm585, %v1298, %v1299
        %v1303 = vsel %vm585, %v1297, %v1298
        %v1304 = vsel %vm585, %v1296, %v1297
        %v1305 = vsel %vm585, %v1295, %v1296
        %v1306 = vsel %vm585, %v1294, %v1295
        %v1307 = vsel %vm585, %v1293, %v1294
        %v1308 = vsel %vm585, %v1300, %v1293
        %1309 = vset.pattern.permute.xlu0 0
        %1310 = vperm.xlu0 %1309, %v370
        %v1311 = vpop.permute.xlu0 %1310
        %1313 = vset.pattern.permute.xlu0 0
        %1314 = vperm.xlu0 %1313, %v371
        %v1315 = vpop.permute.xlu0 %1314
        %1317 = vset.pattern.permute.xlu0 0
        %1318 = vperm.xlu0 %1317, %v372
        %v1319 = vpop.permute.xlu0 %1318
        %1321 = vset.pattern.permute.xlu0 0
        %1322 = vperm.xlu0 %1321, %v373
        %v1323 = vpop.permute.xlu0 %1322
        %1325 = vset.pattern.permute.xlu0 0
        %1326 = vperm.xlu0 %1325, %v374
        %v1327 = vpop.permute.xlu0 %1326
        %1329 = vset.pattern.permute.xlu0 0
        %1330 = vperm.xlu0 %1329, %v375
        %v1331 = vpop.permute.xlu0 %1330
        %1333 = vset.pattern.permute.xlu0 0
        %1334 = vperm.xlu0 %1333, %v376
        %v1335 = vpop.permute.xlu0 %1334
        %1337 = vset.pattern.permute.xlu0 0
        %1338 = vperm.xlu0 %1337, %v377
        %v1339 = vpop.permute.xlu0 %1338
        %v1341 = vmul.f32 %v1311, %v1301
        %v1342 = vmul.f32 %v1315, %v1308
        %v1343 = vmul.f32 %v1319, %v1307
        %v1344 = vmul.f32 %v1323, %v1306
        %v1345 = vmul.f32 %v1327, %v1305
        %v1346 = vmul.f32 %v1331, %v1304
        %v1347 = vmul.f32 %v1335, %v1303
        %v1348 = vmul.f32 %v1339, %v1302
        %v1349 = vmul.f32 %v947, %v1284
        %v1350 = vmul.f32 %v951, %v1270
        %v1351 = vmul.f32 %v955, %v1272
        %v1352 = vmul.f32 %v959, %v1274
        %v1353 = vmul.f32 %v963, %v1276
        %v1354 = vmul.f32 %v967, %v1278
        %v1355 = vmul.f32 %v971, %v1280
        %v1356 = vmul.f32 %v975, %v1282
        %v1357 = vrot.slane %v1270, 1
        %v1358 = vrot.slane %v1272, 1
        %v1359 = vrot.slane %v1274, 1
        %v1360 = vrot.slane %v1276, 1
        %v1361 = vrot.slane %v1278, 1
        %v1362 = vrot.slane %v1280, 1
        %v1363 = vrot.slane %v1282, 1
        %v1364 = vrot.slane %v1284, 1
        %v1365 = vsel %vm650, %v1363, %v1364
        %v1366 = vsel %vm650, %v1362, %v1363
        %v1367 = vsel %vm650, %v1361, %v1362
        %v1368 = vsel %vm650, %v1360, %v1361
        %v1369 = vsel %vm650, %v1359, %v1360
        %v1370 = vsel %vm650, %v1358, %v1359
        %v1371 = vsel %vm650, %v1357, %v1358
        %v1372 = vsel %vm650, %v1364, %v1357
        %1373 = vset.pattern.permute.xlu0 2
        %1374 = vperm.xlu0 %1373, %v370
        %v1375 = vpop.permute.xlu0 %1374
        %1377 = vset.pattern.permute.xlu0 2
        %1378 = vperm.xlu0 %1377, %v371
        %v1379 = vpop.permute.xlu0 %1378
        %1381 = vset.pattern.permute.xlu0 2
        %1382 = vperm.xlu0 %1381, %v372
        %v1383 = vpop.permute.xlu0 %1382
        %1385 = vset.pattern.permute.xlu0 2
        %1386 = vperm.xlu0 %1385, %v373
        %v1387 = vpop.permute.xlu0 %1386
        %1389 = vset.pattern.permute.xlu0 2
        %1390 = vperm.xlu0 %1389, %v374
        %v1391 = vpop.permute.xlu0 %1390
        %1393 = vset.pattern.permute.xlu0 2
        %1394 = vperm.xlu0 %1393, %v375
        %v1395 = vpop.permute.xlu0 %1394
        %1397 = vset.pattern.permute.xlu0 2
        %1398 = vperm.xlu0 %1397, %v376
        %v1399 = vpop.permute.xlu0 %1398
        %1401 = vset.pattern.permute.xlu0 2
        %1402 = vperm.xlu0 %1401, %v377
        %v1403 = vpop.permute.xlu0 %1402
        %v1405 = vmul.f32 %v1375, %v1372
        %v1406 = vmul.f32 %v1379, %v1371
        %v1407 = vmul.f32 %v1383, %v1370
        %v1408 = vmul.f32 %v1387, %v1369
        %v1409 = vmul.f32 %v1391, %v1368
        %v1410 = vmul.f32 %v1395, %v1367
        %v1411 = vmul.f32 %v1399, %v1366
        %v1412 = vmul.f32 %v1403, %v1365
        %v1413 = vmul.f32 %v597, %v1308
        %v1414 = vmul.f32 %v602, %v1307
        %v1415 = vmul.f32 %v607, %v1306
        %v1416 = vmul.f32 %v612, %v1305
        %v1417 = vmul.f32 %v617, %v1304
        %v1418 = vmul.f32 %v622, %v1303
        %v1419 = vmul.f32 %v627, %v1302
        %v1420 = vmul.f32 %v632, %v1301
        %v1421 = vmul.f32 %v661, %v1371
        %v1422 = vmul.f32 %v665, %v1370
        %v1423 = vmul.f32 %v669, %v1369
        %v1424 = vmul.f32 %v673, %v1368
        %v1425 = vmul.f32 %v677, %v1367
        %v1426 = vmul.f32 %v681, %v1366
        %v1427 = vmul.f32 %v685, %v1365
        %v1428 = vmul.f32 %v689, %v1372
        %1429 = vset.pattern.permute.xlu0 5
        %1430 = vperm.xlu0 %1429, %v370
        %v1431 = vpop.permute.xlu0 %1430
        %1433 = vset.pattern.permute.xlu0 5
        %1434 = vperm.xlu0 %1433, %v371
        %v1435 = vpop.permute.xlu0 %1434
        %1437 = vset.pattern.permute.xlu0 5
        %1438 = vperm.xlu0 %1437, %v372
        %v1439 = vpop.permute.xlu0 %1438
        %1441 = vset.pattern.permute.xlu0 5
        %1442 = vperm.xlu0 %1441, %v373
        %v1443 = vpop.permute.xlu0 %1442
        %1445 = vset.pattern.permute.xlu0 5
        %1446 = vperm.xlu0 %1445, %v374
        %v1447 = vpop.permute.xlu0 %1446
        %1449 = vset.pattern.permute.xlu0 5
        %1450 = vperm.xlu0 %1449, %v375
        %v1451 = vpop.permute.xlu0 %1450
        %1453 = vset.pattern.permute.xlu0 5
        %1454 = vperm.xlu0 %1453, %v376
        %v1455 = vpop.permute.xlu0 %1454
        %1457 = vset.pattern.permute.xlu0 5
        %1458 = vperm.xlu0 %1457, %v377
        %v1459 = vpop.permute.xlu0 %1458
        %v1461 = vmul.f32 %v1431, %v1307
        %v1462 = vmul.f32 %v1435, %v1306
        %v1463 = vmul.f32 %v1439, %v1305
        %v1464 = vmul.f32 %v1443, %v1304
        %v1465 = vmul.f32 %v1447, %v1303
        %v1466 = vmul.f32 %v1451, %v1302
        %v1467 = vmul.f32 %v1455, %v1301
        %v1468 = vmul.f32 %v1459, %v1308
        %v1469 = vmul.f32 %v987, %v1272
        %v1470 = vmul.f32 %v991, %v1274
        %v1471 = vmul.f32 %v995, %v1276
        %v1472 = vmul.f32 %v999, %v1278
        %v1473 = vmul.f32 %v1003, %v1280
        %v1474 = vmul.f32 %v1007, %v1282
        %v1475 = vmul.f32 %v1011, %v1284
        %v1476 = vmul.f32 %v1015, %v1270
        %1477 = vset.pattern.permute.xlu0 7
        %1478 = vperm.xlu0 %1477, %v370
        %v1479 = vpop.permute.xlu0 %1478
        %1481 = vset.pattern.permute.xlu0 7
        %1482 = vperm.xlu0 %1481, %v371
        %v1483 = vpop.permute.xlu0 %1482
        %1485 = vset.pattern.permute.xlu0 7
        %1486 = vperm.xlu0 %1485, %v372
        %v1487 = vpop.permute.xlu0 %1486
        %1489 = vset.pattern.permute.xlu0 7
        %1490 = vperm.xlu0 %1489, %v373
        %v1491 = vpop.permute.xlu0 %1490
        %1493 = vset.pattern.permute.xlu0 7
        %1494 = vperm.xlu0 %1493, %v374
        %v1495 = vpop.permute.xlu0 %1494
        %1497 = vset.pattern.permute.xlu0 7
        %1498 = vperm.xlu0 %1497, %v375
        %v1499 = vpop.permute.xlu0 %1498
        %1501 = vset.pattern.permute.xlu0 7
        %1502 = vperm.xlu0 %1501, %v376
        %v1503 = vpop.permute.xlu0 %1502
        %1505 = vset.pattern.permute.xlu0 7
        %1506 = vperm.xlu0 %1505, %v377
        %v1507 = vpop.permute.xlu0 %1506
        %v1509 = vmul.f32 %v1479, %v1370
        %v1510 = vmul.f32 %v1483, %v1369
        %v1511 = vmul.f32 %v1487, %v1368
        %v1512 = vmul.f32 %v1491, %v1367
        %v1513 = vmul.f32 %v1495, %v1366
        %v1514 = vmul.f32 %v1499, %v1365
        %v1515 = vmul.f32 %v1503, %v1372
        %v1516 = vmul.f32 %v1507, %v1371
        %1525 = vrot.lane.b32.xlu0 %v1349, 16
        %v1526 = vpop.permute.xlu0 %1525
        %1527 = vrot.lane.b32.xlu0 %v1350, 16
        %v1528 = vpop.permute.xlu0 %1527
        %1529 = vrot.lane.b32.xlu0 %v1351, 16
        %v1530 = vpop.permute.xlu0 %1529
        %1531 = vrot.lane.b32.xlu0 %v1352, 16
        %v1532 = vpop.permute.xlu0 %1531
        %1533 = vrot.lane.b32.xlu0 %v1353, 16
        %v1534 = vpop.permute.xlu0 %1533
        %1535 = vrot.lane.b32.xlu0 %v1354, 16
        %v1536 = vpop.permute.xlu0 %1535
        %1537 = vrot.lane.b32.xlu0 %v1355, 16
        %v1538 = vpop.permute.xlu0 %1537
        %1539 = vrot.lane.b32.xlu0 %v1356, 16
        %v1540 = vpop.permute.xlu0 %1539
        %1557 = vrot.lane.b32.xlu0 %v1405, 32
        %v1558 = vpop.permute.xlu0 %1557
        %1559 = vrot.lane.b32.xlu0 %v1406, 32
        %v1560 = vpop.permute.xlu0 %1559
        %1561 = vrot.lane.b32.xlu0 %v1407, 32
        %v1562 = vpop.permute.xlu0 %1561
        %1563 = vrot.lane.b32.xlu0 %v1408, 32
        %v1564 = vpop.permute.xlu0 %1563
        %1565 = vrot.lane.b32.xlu0 %v1409, 32
        %v1566 = vpop.permute.xlu0 %1565
        %1567 = vrot.lane.b32.xlu0 %v1410, 32
        %v1568 = vpop.permute.xlu0 %1567
        %1569 = vrot.lane.b32.xlu0 %v1411, 32
        %v1570 = vpop.permute.xlu0 %1569
        %1571 = vrot.lane.b32.xlu0 %v1412, 32
        %v1572 = vpop.permute.xlu0 %1571
        %1589 = vrot.lane.b32.xlu0 %v1413, 48
        %v1590 = vpop.permute.xlu0 %1589
        %1591 = vrot.lane.b32.xlu0 %v1414, 48
        %v1592 = vpop.permute.xlu0 %1591
        %1593 = vrot.lane.b32.xlu0 %v1415, 48
        %v1594 = vpop.permute.xlu0 %1593
        %1595 = vrot.lane.b32.xlu0 %v1416, 48
        %v1596 = vpop.permute.xlu0 %1595
        %1597 = vrot.lane.b32.xlu0 %v1417, 48
        %v1598 = vpop.permute.xlu0 %1597
        %1599 = vrot.lane.b32.xlu0 %v1418, 48
        %v1600 = vpop.permute.xlu0 %1599
        %1601 = vrot.lane.b32.xlu0 %v1419, 48
        %v1602 = vpop.permute.xlu0 %1601
        %1603 = vrot.lane.b32.xlu0 %v1420, 48
        %v1604 = vpop.permute.xlu0 %1603
        %1613 = vrot.lane.b32.xlu0 %v526, 32
        %v1614 = vpop.permute.xlu0 %1613
        %1615 = vrot.lane.b32.xlu0 %v527, 32
        %v1616 = vpop.permute.xlu0 %1615
        %1617 = vrot.lane.b32.xlu0 %v528, 32
        %v1618 = vpop.permute.xlu0 %1617
        %1619 = vrot.lane.b32.xlu0 %v529, 32
        %v1620 = vpop.permute.xlu0 %1619
        %1621 = vrot.lane.b32.xlu0 %v530, 32
        %v1622 = vpop.permute.xlu0 %1621
        %1623 = vrot.lane.b32.xlu0 %v531, 32
        %v1624 = vpop.permute.xlu0 %1623
        %1625 = vrot.lane.b32.xlu0 %v532, 32
        %v1626 = vpop.permute.xlu0 %1625
        %1627 = vrot.lane.b32.xlu0 %v533, 32
        %v1628 = vpop.permute.xlu0 %1627
        %1645 = vrot.lane.b32.xlu0 %v1421, 80
        %v1646 = vpop.permute.xlu0 %1645
        %1647 = vrot.lane.b32.xlu0 %v1422, 80
        %v1648 = vpop.permute.xlu0 %1647
        %1649 = vrot.lane.b32.xlu0 %v1423, 80
        %v1650 = vpop.permute.xlu0 %1649
        %1651 = vrot.lane.b32.xlu0 %v1424, 80
        %v1652 = vpop.permute.xlu0 %1651
        %1653 = vrot.lane.b32.xlu0 %v1425, 80
        %v1654 = vpop.permute.xlu0 %1653
        %1655 = vrot.lane.b32.xlu0 %v1426, 80
        %v1656 = vpop.permute.xlu0 %1655
        %1657 = vrot.lane.b32.xlu0 %v1427, 80
        %v1658 = vpop.permute.xlu0 %1657
        %1659 = vrot.lane.b32.xlu0 %v1428, 80
        %v1660 = vpop.permute.xlu0 %1659
        %1677 = vrot.lane.b32.xlu0 %v1461, 96
        %v1678 = vpop.permute.xlu0 %1677
        %1679 = vrot.lane.b32.xlu0 %v1462, 96
        %v1680 = vpop.permute.xlu0 %1679
        %1681 = vrot.lane.b32.xlu0 %v1463, 96
        %v1682 = vpop.permute.xlu0 %1681
        %1683 = vrot.lane.b32.xlu0 %v1464, 96
        %v1684 = vpop.permute.xlu0 %1683
        %1685 = vrot.lane.b32.xlu0 %v1465, 96
        %v1686 = vpop.permute.xlu0 %1685
        %1687 = vrot.lane.b32.xlu0 %v1466, 96
        %v1688 = vpop.permute.xlu0 %1687
        %1689 = vrot.lane.b32.xlu0 %v1467, 96
        %v1690 = vpop.permute.xlu0 %1689
        %1691 = vrot.lane.b32.xlu0 %v1468, 96
        %v1692 = vpop.permute.xlu0 %1691
        %1709 = vrot.lane.b32.xlu0 %v1469, 112
        %v1710 = vpop.permute.xlu0 %1709
        %1711 = vrot.lane.b32.xlu0 %v1470, 112
        %v1712 = vpop.permute.xlu0 %1711
        %1713 = vrot.lane.b32.xlu0 %v1471, 112
        %v1714 = vpop.permute.xlu0 %1713
        %1715 = vrot.lane.b32.xlu0 %v1472, 112
        %v1716 = vpop.permute.xlu0 %1715
        %1717 = vrot.lane.b32.xlu0 %v1473, 112
        %v1718 = vpop.permute.xlu0 %1717
        %1719 = vrot.lane.b32.xlu0 %v1474, 112
        %v1720 = vpop.permute.xlu0 %1719
        %1721 = vrot.lane.b32.xlu0 %v1475, 112
        %v1722 = vpop.permute.xlu0 %1721
        %1723 = vrot.lane.b32.xlu0 %v1476, 112
        %v1724 = vpop.permute.xlu0 %1723
        %v1733 = vsel %vm534, %v1341, %v1526
        %v1734 = vsel %vm534, %v1342, %v1528
        %v1735 = vsel %vm534, %v1343, %v1530
        %v1736 = vsel %vm534, %v1344, %v1532
        %v1737 = vsel %vm534, %v1345, %v1534
        %v1738 = vsel %vm534, %v1346, %v1536
        %v1739 = vsel %vm534, %v1347, %v1538
        %v1740 = vsel %vm534, %v1348, %v1540
        %v1741 = vsel %vm739, %v1733, %v1558
        %v1742 = vsel %vm739, %v1734, %v1560
        %v1743 = vsel %vm739, %v1735, %v1562
        %v1744 = vsel %vm739, %v1736, %v1564
        %v1745 = vsel %vm739, %v1737, %v1566
        %v1746 = vsel %vm739, %v1738, %v1568
        %v1747 = vsel %vm739, %v1739, %v1570
        %v1748 = vsel %vm739, %v1740, %v1572
        %v1749 = vsel %vm776, %v1741, %v1590
        %v1750 = vsel %vm776, %v1742, %v1592
        %v1751 = vsel %vm776, %v1743, %v1594
        %v1752 = vsel %vm776, %v1744, %v1596
        %v1753 = vsel %vm776, %v1745, %v1598
        %v1754 = vsel %vm776, %v1746, %v1600
        %v1755 = vsel %vm776, %v1747, %v1602
        %v1756 = vsel %vm776, %v1748, %v1604
        %v1757 = vsel %vm414, %v1749, %v1614
        %v1758 = vsel %vm414, %v1750, %v1616
        %v1759 = vsel %vm414, %v1751, %v1618
        %v1760 = vsel %vm414, %v1752, %v1620
        %v1761 = vsel %vm414, %v1753, %v1622
        %v1762 = vsel %vm414, %v1754, %v1624
        %v1763 = vsel %vm414, %v1755, %v1626
        %v1764 = vsel %vm414, %v1756, %v1628
        %vm1765 = vcmask 654336
        %v1766 = vsel %vm1765, %v1757, %v1646
        %v1767 = vsel %vm1765, %v1758, %v1648
        %v1768 = vsel %vm1765, %v1759, %v1650
        %v1769 = vsel %vm1765, %v1760, %v1652
        %v1770 = vsel %vm1765, %v1761, %v1654
        %v1771 = vsel %vm1765, %v1762, %v1656
        %v1772 = vsel %vm1765, %v1763, %v1658
        %v1773 = vsel %vm1765, %v1764, %v1660
        %vm1774 = vcmask 785408
        %v1775 = vsel %vm1774, %v1766, %v1678
        %v1776 = vsel %vm1774, %v1767, %v1680
        %v1777 = vsel %vm1774, %v1768, %v1682
        %v1778 = vsel %vm1774, %v1769, %v1684
        %v1779 = vsel %vm1774, %v1770, %v1686
        %v1780 = vsel %vm1774, %v1771, %v1688
        %v1781 = vsel %vm1774, %v1772, %v1690
        %v1782 = vsel %vm1774, %v1773, %v1692
        %vm1783 = vcmask 916480
        %v1784 = vsel %vm1783, %v1775, %v1710
        %v1785 = vsel %vm1783, %v1776, %v1712
        %v1786 = vsel %vm1783, %v1777, %v1714
        %v1787 = vsel %vm1783, %v1778, %v1716
        %v1788 = vsel %vm1783, %v1779, %v1718
        %v1789 = vsel %vm1783, %v1780, %v1720
        %v1790 = vsel %vm1783, %v1781, %v1722
        %v1791 = vsel %vm1783, %v1782, %v1724
        %v1792 = vpack.c.bf16 %v1785, %v1784
        %v1793 = vpack.c.bf16 %v1510, %v1509
        %v1794 = vpack.c.bf16 %v1787, %v1786
        %v1795 = vpack.c.bf16 %v1512, %v1511
        %v1796 = vpack.c.bf16 %v1789, %v1788
        %v1797 = vpack.c.bf16 %v1514, %v1513
        %v1798 = vpack.c.bf16 %v1791, %v1790
        %v1799 = vpack.c.bf16 %v1516, %v1515
        %v1800 = vld [vmem:[%s5] sm:$0xf]
        %v1801 = vld [vmem:[%s5 + $0x4] sm:$0xf]
        %v1802 = vld [vmem:[%s5 + $0x8] sm:$0xf]
        %v1803 = vld [vmem:[%s5 + $0xc] sm:$0xf]
        %v1804 = vld [vmem:[%s5 + $0x10] sm:$0xf]
        %v1805 = vld [vmem:[%s5 + $0x14] sm:$0xf]
        %v1806 = vld [vmem:[%s5 + $0x18] sm:$0xf]
        %v1807 = vld [vmem:[%s5 + $0x1c] sm:$0xf]
        %v1808 = vld [vmem:[%s5 + $0x20] sm:$0xf]
        %v1809 = vld [vmem:[%s5 + $0x24] sm:$0xf]
        %v1810 = vld [vmem:[%s5 + $0x28] sm:$0xf]
        %v1811 = vld [vmem:[%s5 + $0x2c] sm:$0xf]
        %v1812 = vld [vmem:[%s5 + $0x30] sm:$0xf]
        %v1813 = vld [vmem:[%s5 + $0x34] sm:$0xf]
        %v1814 = vld [vmem:[%s5 + $0x38] sm:$0xf]
        %v1815 = vld [vmem:[%s5 + $0x3c] sm:$0xf]
        %v1816 = vld [vmem:[%s5 + $0x40] sm:$0xf]
        %v1817 = vld [vmem:[%s5 + $0x44] sm:$0xf]
        %v1836 = vunpack.c.l.b16 %v1800
        %v1837 = vunpack.c.l.b16 %v1801
        %v1838 = vunpack.c.l.b16 %v1802
        %v1839 = vunpack.c.l.b16 %v1803
        %v1840 = vunpack.c.l.b16 %v1804
        %v1841 = vunpack.c.l.b16 %v1805
        %v1842 = vunpack.c.l.b16 %v1806
        %v1843 = vunpack.c.l.b16 %v1807
        %v1844 = vunpack.c.l.b16 %v1808
        %v1845 = vunpack.c.l.b16 %v1809
        %v1846 = vunpack.c.l.b16 %v1810
        %v1847 = vunpack.c.l.b16 %v1811
        %v1848 = vunpack.c.l.b16 %v1812
        %v1849 = vunpack.c.l.b16 %v1813
        %v1850 = vunpack.c.l.b16 %v1814
        %v1851 = vunpack.c.l.b16 %v1815
        %v1852 = vunpack.c.l.b16 %v1816
        %v1853 = vunpack.c.l.b16 %v1817
        %v1854 = vpack.c.b16 %v1837, %v1836
        %v1855 = vpack.c.b16 %v1839, %v1838
        %v1856 = vpack.c.b16 %v1841, %v1840
        %v1857 = vpack.c.b16 %v1843, %v1842
        %v1858 = vpack.c.b16 %v1845, %v1844
        %v1859 = vpack.c.b16 %v1847, %v1846
        %v1860 = vpack.c.b16 %v1849, %v1848
        %v1861 = vpack.c.b16 %v1851, %v1850
        %v1862 = vpack.c.b16 %v1853, %v1852
        %v1873 = vsel %vm534, %v1793, 0
        %v1876 = vsel %vm534, %v1795, 0
        %v1879 = vsel %vm534, %v1797, 0
        %v1882 = vsel %vm534, %v1799, 0
        %1884 = vmatprep.subr.bf16.mxu0 0
        %1885 = vmatpush1.bf16.msra.mxu0 %v1854
        %1886 = vmatprep.subr.bf16.mxu0 0
        %1887 = vmatpush1.bf16.msra.mxu0 %v1855
        %1888 = vmatprep.subr.bf16.mxu0 0
        %1889 = vmatpush1.bf16.msra.mxu0 %v1856
        %1890 = vmatprep.subr.bf16.mxu0 0
        %1891 = vmatpush1.bf16.msra.mxu0 %v1857
        %1892 = vmatprep.subr.bf16.mxu0 0
        %1893 = vmatpush1.bf16.msra.mxu0 %v1858
        %1894 = vmatprep.subr.bf16.mxu0 0
        %1895 = vmatpush1.bf16.msra.mxu0 %v1859
        %1896 = vmatprep.subr.bf16.mxu0 0
        %1897 = vmatpush1.bf16.msra.mxu0 %v1860
        %1898 = vmatprep.subr.bf16.mxu0 0
        %1899 = vmatpush1.bf16.msra.mxu0 %v1861
        %1900 = vmatprep.subr.bf16.mxu0 0
        %1901 = vmatpush1.bf16.msra.mxu0 %v1862
        %1902 = vmatprep.subr.bf16.mxu0 0
        %1903 = vmatpush1.bf16.msra.mxu0 0
        %1904 = vmatprep.subr.bf16.mxu0 0
        %1905 = vmatpush1.bf16.msra.mxu0 0
        %1906 = vmatprep.subr.bf16.mxu0 0
        %1907 = vmatpush1.bf16.msra.mxu0 0
        %1908 = vmatprep.subr.bf16.mxu0 0
        %1909 = vmatpush1.bf16.msra.mxu0 0
        %1910 = vmatprep.subr.bf16.mxu0 0
        %1911 = vmatpush1.bf16.msra.mxu0 0
        %1912 = vmatprep.subr.bf16.mxu0 0
        %1913 = vmatpush1.bf16.msra.mxu0 0
        %1914 = vmatprep.subr.bf16.mxu0 0
        %1915 = vmatpush1.bf16.msra.mxu0 0
        %1916 = vmatprep.mubr.bf16.mxu0 %v1873
        %1917 = vmatmul.mubr.bf16.gmra.mrb[0].mxu0 %v1792
        %v1918 = vpop.f32.mrb[0].mxu0
        %v1919 = vadd.f32 0.0, %v1918
        %v1920 = vpop.f32.mrb[0].mxu0
        %v1921 = vpop.f32.mrb[0].mxu0
        %v1922 = vadd.f32 0.0, %v1921
        %v1923 = vpop.f32.mrb[0].mxu0
        %1924 = vmatprep.mubr.bf16.mxu0 %v1876
        %1925 = vmatmul.mubr.bf16.gmra.mrb[0].mxu0 %v1794
        %v1926 = vpop.f32.mrb[0].mxu0
        %v1927 = vadd.f32 0.0, %v1926
        %v1928 = vpop.f32.mrb[0].mxu0
        %v1929 = vpop.f32.mrb[0].mxu0
        %v1930 = vadd.f32 0.0, %v1929
        %v1931 = vpop.f32.mrb[0].mxu0
        %1932 = vmatprep.mubr.bf16.mxu0 %v1879
        %1933 = vmatmul.mubr.bf16.gmra.mrb[0].mxu0 %v1796
        %v1934 = vpop.f32.mrb[0].mxu0
        %v1935 = vadd.f32 0.0, %v1934
        %v1936 = vpop.f32.mrb[0].mxu0
        %v1937 = vpop.f32.mrb[0].mxu0
        %v1938 = vadd.f32 0.0, %v1937
        %v1939 = vpop.f32.mrb[0].mxu0
        %1940 = vmatprep.mubr.bf16.mxu0 %v1882
        %1941 = vmatmul.mubr.bf16.gmra.mrb[0].mxu0 %v1798
        %v1942 = vpop.f32.mrb[0].mxu0
        %v1943 = vadd.f32 0.0, %v1942
        %v1944 = vpop.f32.mrb[0].mxu0
        %v1945 = vpop.f32.mrb[0].mxu0
        %v1946 = vadd.f32 0.0, %v1945
        %v1947 = vpop.f32.mrb[0].mxu0
        %1948 = vdwg.mxu0
        %v1949 = vld [vmem:[%s9] sm:$0x1]
        %v1950 = vlaneseq
        %v1951 = vshrl.u32 %v1950, 7
        %v1952 = vsub.s32 0, %v1951
        %v1953 = vrot.slane %v1949, %v1952
        %1955 = vrot.lane.b32.xlu0 %v1953, 32
        %v1956 = vpop.permute.xlu0 %1955
        %v1958 = vmul.f32 %v1919, %v1956
        %v1959 = vmul.f32 %v1922, %v1956
        %v1960 = vmul.f32 %v1927, %v1956
        %v1961 = vmul.f32 %v1930, %v1956
        %v1962 = vmul.f32 %v1935, %v1956
        %v1963 = vmul.f32 %v1938, %v1956
        %v1964 = vmul.f32 %v1943, %v1956
        %v1965 = vmul.f32 %v1946, %v1956
        %v1966 = vld [vmem:[%s9 + $0x1] sm:$0x1]
        %v1967 = vlaneseq
        %v1968 = vshrl.u32 %v1967, 7
        %v1969 = vsub.s32 0, %v1968
        %v1970 = vrot.slane %v1966, %v1969
        %1972 = vrot.lane.b32.xlu0 %v1970, 32
        %v1973 = vpop.permute.xlu0 %1972
        %v1975 = vadd.f32 %v1958, %v1973
        %v1976 = vadd.f32 %v1959, %v1973
        %v1977 = vadd.f32 %v1960, %v1973
        %v1978 = vadd.f32 %v1961, %v1973
        %v1979 = vadd.f32 %v1962, %v1973
        %v1980 = vadd.f32 %v1963, %v1973
        %v1981 = vadd.f32 %v1964, %v1973
        %v1982 = vadd.f32 %v1965, %v1973
        %v1983 = vmax.f32 %v1975, 0.0
        %v1984 = vmax.f32 %v1976, 0.0
        %v1985 = vmax.f32 %v1977, 0.0
        %v1986 = vmax.f32 %v1978, 0.0
        %v1987 = vmax.f32 %v1979, 0.0
        %v1988 = vmax.f32 %v1980, 0.0
        %v1989 = vmax.f32 %v1981, 0.0
        %v1990 = vmax.f32 %v1982, 0.0
        %v1991 = vmin.f32 %v1983, 6.0
        %v1992 = vmin.f32 %v1984, 6.0
        %v1993 = vmin.f32 %v1985, 6.0
        %v1994 = vmin.f32 %v1986, 6.0
        %v1995 = vmin.f32 %v1987, 6.0
        %v1996 = vmin.f32 %v1988, 6.0
        %v1997 = vmin.f32 %v1989, 6.0
        %v1998 = vmin.f32 %v1990, 6.0
        %v1999 = vmul.f32 %v947, %v1998
        %v2000 = vmul.f32 %v951, %v1991
        %v2001 = vmul.f32 %v955, %v1992
        %v2002 = vmul.f32 %v959, %v1993
        %v2003 = vmul.f32 %v963, %v1994
        %v2004 = vmul.f32 %v967, %v1995
        %v2005 = vmul.f32 %v971, %v1996
        %v2006 = vmul.f32 %v975, %v1997
        %v2007 = vmul.f32 %v987, %v1992
        %v2008 = vmul.f32 %v991, %v1993
        %v2009 = vmul.f32 %v995, %v1994
        %v2010 = vmul.f32 %v999, %v1995
        %v2011 = vmul.f32 %v1003, %v1996
        %v2012 = vmul.f32 %v1007, %v1997
        %v2013 = vmul.f32 %v1011, %v1998
        %v2014 = vmul.f32 %v1015, %v1991
        %2023 = vrot.lane.b32.xlu0 %v1991, 24
        %v2024 = vpop.permute.xlu0 %2023
        %2025 = vrot.lane.b32.xlu0 %v1992, 24
        %v2026 = vpop.permute.xlu0 %2025
        %2027 = vrot.lane.b32.xlu0 %v1993, 24
        %v2028 = vpop.permute.xlu0 %2027
        %2029 = vrot.lane.b32.xlu0 %v1994, 24
        %v2030 = vpop.permute.xlu0 %2029
        %2031 = vrot.lane.b32.xlu0 %v1995, 24
        %v2032 = vpop.permute.xlu0 %2031
        %2033 = vrot.lane.b32.xlu0 %v1996, 24
        %v2034 = vpop.permute.xlu0 %2033
        %2035 = vrot.lane.b32.xlu0 %v1997, 24
        %v2036 = vpop.permute.xlu0 %2035
        %2037 = vrot.lane.b32.xlu0 %v1998, 24
        %v2038 = vpop.permute.xlu0 %2037
        %2055 = vrot.lane.b32.xlu0 %v2007, 48
        %v2056 = vpop.permute.xlu0 %2055
        %2057 = vrot.lane.b32.xlu0 %v2008, 48
        %v2058 = vpop.permute.xlu0 %2057
        %2059 = vrot.lane.b32.xlu0 %v2009, 48
        %v2060 = vpop.permute.xlu0 %2059
        %2061 = vrot.lane.b32.xlu0 %v2010, 48
        %v2062 = vpop.permute.xlu0 %2061
        %2063 = vrot.lane.b32.xlu0 %v2011, 48
        %v2064 = vpop.permute.xlu0 %2063
        %2065 = vrot.lane.b32.xlu0 %v2012, 48
        %v2066 = vpop.permute.xlu0 %2065
        %2067 = vrot.lane.b32.xlu0 %v2013, 48
        %v2068 = vpop.permute.xlu0 %2067
        %2069 = vrot.lane.b32.xlu0 %v2014, 48
        %v2070 = vpop.permute.xlu0 %2069
        %vm2079 = vcmask 195584
        %v2080 = vsel %vm2079, %v1999, %v2024
        %v2081 = vsel %vm2079, %v2000, %v2026
        %v2082 = vsel %vm2079, %v2001, %v2028
        %v2083 = vsel %vm2079, %v2002, %v2030
        %v2084 = vsel %vm2079, %v2003, %v2032
        %v2085 = vsel %vm2079, %v2004, %v2034
        %v2086 = vsel %vm2079, %v2005, %v2036
        %v2087 = vsel %vm2079, %v2006, %v2038
        %v2088 = vsel %vm776, %v2080, %v2056
        %v2089 = vsel %vm776, %v2081, %v2058
        %v2090 = vsel %vm776, %v2082, %v2060
        %v2091 = vsel %vm776, %v2083, %v2062
        %v2092 = vsel %vm776, %v2084, %v2064
        %v2093 = vsel %vm776, %v2085, %v2066
        %v2094 = vsel %vm776, %v2086, %v2068
        %v2095 = vsel %vm776, %v2087, %v2070
        %v2096 = vpack.c.bf16 %v2089, %v2088
        %v2097 = vpack.c.bf16 %v2091, %v2090
        %v2098 = vpack.c.bf16 %v2093, %v2092
        %v2099 = vpack.c.bf16 %v2095, %v2094
        %v2100 = vld [vmem:[%s6] sm:$0xf]
        %v2101 = vld [vmem:[%s6 + $0x4] sm:$0xf]
        %v2102 = vld [vmem:[%s6 + $0x8] sm:$0xf]
        %v2103 = vld [vmem:[%s6 + $0xc] sm:$0xf]
        %v2104 = vld [vmem:[%s6 + $0x10] sm:$0xf]
        %v2105 = vld [vmem:[%s6 + $0x14] sm:$0xf]
        %v2106 = vld [vmem:[%s6 + $0x18] sm:$0xf]
        %v2107 = vld [vmem:[%s6 + $0x1c] sm:$0xf]
        %v2108 = vld [vmem:[%s6 + $0x20] sm:$0xf]
        %v2118 = vunpack.c.l.b16 %v2100
        %v2119 = vunpack.c.l.b16 %v2101
        %v2120 = vunpack.c.l.b16 %v2102
        %v2121 = vunpack.c.l.b16 %v2103
        %v2122 = vunpack.c.l.b16 %v2104
        %v2123 = vunpack.c.l.b16 %v2105
        %v2124 = vunpack.c.l.b16 %v2106
        %v2125 = vunpack.c.l.b16 %v2107
        %v2126 = vunpack.c.l.b16 %v2108
        %v2127 = vpack.c.b16 %v2119, %v2118
        %v2128 = vpack.c.b16 %v2121, %v2120
        %v2129 = vpack.c.b16 %v2123, %v2122
        %v2130 = vpack.c.b16 %v2125, %v2124
        %v2131 = vpack.c.b16 %v2126, %v2126
        %vm2136 = vcmask 588800
        %v2138 = vsel %vm2136, %v2096, 0
        %v2141 = vsel %vm2136, %v2097, 0
        %v2144 = vsel %vm2136, %v2098, 0
        %v2147 = vsel %vm2136, %v2099, 0
        %vm2149 = vcmask 1043456
        %v2151 = vsel %vm2149, %v2131, 0
        %2153 = vmatprep.subr.bf16.mxu0 0
        %2154 = vmatpush1.bf16.msra.mxu0 %v2127
        %2155 = vmatprep.subr.bf16.mxu0 0
        %2156 = vmatpush1.bf16.msra.mxu0 %v2128
        %2157 = vmatprep.subr.bf16.mxu0 0
        %2158 = vmatpush1.bf16.msra.mxu0 %v2129
        %2159 = vmatprep.subr.bf16.mxu0 0
        %2160 = vmatpush1.bf16.msra.mxu0 %v2130
        %2161 = vmatprep.subr.bf16.mxu0 0
        %2162 = vmatpush1.bf16.msra.mxu0 %v2151
        %2163 = vmatprep.subr.bf16.mxu0 0
        %2164 = vmatpush1.bf16.msra.mxu0 0
        %2165 = vmatprep.subr.bf16.mxu0 0
        %2166 = vmatpush1.bf16.msra.mxu0 0
        %2167 = vmatprep.subr.bf16.mxu0 0
        %2168 = vmatpush1.bf16.msra.mxu0 0
        %2169 = vmatprep.subr.bf16.mxu0 0
        %2170 = vmatpush1.bf16.msra.mxu0 0
        %2171 = vmatprep.subr.bf16.mxu0 0
        %2172 = vmatpush1.bf16.msra.mxu0 0
        %2173 = vmatprep.subr.bf16.mxu0 0
        %2174 = vmatpush1.bf16.msra.mxu0 0
        %2175 = vmatprep.subr.bf16.mxu0 0
        %2176 = vmatpush1.bf16.msra.mxu0 0
        %2177 = vmatprep.subr.bf16.mxu0 0
        %2178 = vmatpush1.bf16.msra.mxu0 0
        %2179 = vmatprep.subr.bf16.mxu0 0
        %2180 = vmatpush1.bf16.msra.mxu0 0
        %2181 = vmatprep.subr.bf16.mxu0 0
        %2182 = vmatpush1.bf16.msra.mxu0 0
        %2183 = vmatprep.subr.bf16.mxu0 0
        %2184 = vmatpush1.bf16.msra.mxu0 0
        %2185 = vmatprep.mubr.bf16.mxu0 0
        %2186 = vmatmul.mubr.bf16.gmra.mrb[0].mxu0 %v2138
        %v2187 = vpop.f32.mrb[0].mxu0
        %v2188 = vadd.f32 0.0, %v2187
        %v2189 = vpop.f32.mrb[0].mxu0
        %v2190 = vpop.f32.mrb[0].mxu0
        %v2191 = vadd.f32 0.0, %v2190
        %v2192 = vpop.f32.mrb[0].mxu0
        %2193 = vmatprep.mubr.bf16.mxu0 0
        %2194 = vmatmul.mubr.bf16.gmra.mrb[0].mxu0 %v2141
        %v2195 = vpop.f32.mrb[0].mxu0
        %v2196 = vadd.f32 0.0, %v2195
        %v2197 = vpop.f32.mrb[0].mxu0
        %v2198 = vpop.f32.mrb[0].mxu0
        %v2199 = vadd.f32 0.0, %v2198
        %v2200 = vpop.f32.mrb[0].mxu0
        %2201 = vmatprep.mubr.bf16.mxu0 0
        %2202 = vmatmul.mubr.bf16.gmra.mrb[0].mxu0 %v2144
        %v2203 = vpop.f32.mrb[0].mxu0
        %v2204 = vadd.f32 0.0, %v2203
        %v2205 = vpop.f32.mrb[0].mxu0
        %v2206 = vpop.f32.mrb[0].mxu0
        %v2207 = vadd.f32 0.0, %v2206
        %v2208 = vpop.f32.mrb[0].mxu0
        %2209 = vmatprep.mubr.bf16.mxu0 0
        %2210 = vmatmul.mubr.bf16.gmra.mrb[0].mxu0 %v2147
        %v2211 = vpop.f32.mrb[0].mxu0
        %v2212 = vadd.f32 0.0, %v2211
        %v2213 = vpop.f32.mrb[0].mxu0
        %v2214 = vpop.f32.mrb[0].mxu0
        %v2215 = vadd.f32 0.0, %v2214
        %v2216 = vpop.f32.mrb[0].mxu0
        %2217 = vdwg.mxu0
        %v2218 = vld [vmem:[%s9] sm:$0x5]
        %v2220 = vlaneseq
        %v2221 = vshrl.u32 %v2220, 7
        %v2222 = vsub.s32 0, %v2221
        %v2223 = vrot.slane %v2218, %v2222
        %v2224 = vlaneseq
        %v2225 = vshrl.u32 %v2224, 7
        %v2226 = vsub.s32 2, %v2225
        %v2227 = vrot.slane %v2218, %v2226
        %v2230 = vlaneseq
        %v2231 = vshrl.u32 %v2230, 7
        %v2232 = vsub.s32 0, %v2231
        %v2233 = vrot.slane %v2223, %v2232
        %v2234 = vlaneseq
        %v2235 = vshrl.u32 %v2234, 7
        %v2236 = vsub.s32 0, %v2235
        %v2237 = vrot.slane %v2227, %v2236
        %2240 = vrot.lane.b32.xlu0 %v2233, 8
        %v2241 = vpop.permute.xlu0 %2240
        %2242 = vrot.lane.b32.xlu0 %v2237, 8
        %v2243 = vpop.permute.xlu0 %2242
        %vm2244 = vcmask 64512
        %v2245 = vsel %vm2244, %v2241, %v2243
        %v2247 = vmul.f32 %v2188, %v2245
        %v2248 = vmul.f32 %v2191, %v2245
        %v2249 = vmul.f32 %v2196, %v2245
        %v2250 = vmul.f32 %v2199, %v2245
        %v2251 = vmul.f32 %v2204, %v2245
        %v2252 = vmul.f32 %v2207, %v2245
        %v2253 = vmul.f32 %v2212, %v2245
        %v2254 = vmul.f32 %v2215, %v2245
        %v2255 = vld [vmem:[%s9 + $0x1] sm:$0x5]
        %v2257 = vlaneseq
        %v2258 = vshrl.u32 %v2257, 7
        %v2259 = vsub.s32 0, %v2258
        %v2260 = vrot.slane %v2255, %v2259
        %v2261 = vlaneseq
        %v2262 = vshrl.u32 %v2261, 7
        %v2263 = vsub.s32 2, %v2262
        %v2264 = vrot.slane %v2255, %v2263
        %v2267 = vlaneseq
        %v2268 = vshrl.u32 %v2267, 7
        %v2269 = vsub.s32 0, %v2268
        %v2270 = vrot.slane %v2260, %v2269
        %v2271 = vlaneseq
        %v2272 = vshrl.u32 %v2271, 7
        %v2273 = vsub.s32 0, %v2272
        %v2274 = vrot.slane %v2264, %v2273
        %2277 = vrot.lane.b32.xlu0 %v2270, 8
        %v2278 = vpop.permute.xlu0 %2277
        %2279 = vrot.lane.b32.xlu0 %v2274, 8
        %v2280 = vpop.permute.xlu0 %2279
        %v2281 = vsel %vm2244, %v2278, %v2280
        %v2283 = vadd.f32 %v2247, %v2281
        %v2284 = vadd.f32 %v2248, %v2281
        %v2285 = vadd.f32 %v2249, %v2281
        %v2286 = vadd.f32 %v2250, %v2281
        %v2287 = vadd.f32 %v2251, %v2281
        %v2288 = vadd.f32 %v2252, %v2281
        %v2289 = vadd.f32 %v2253, %v2281
        %v2290 = vadd.f32 %v2254, %v2281
        %v2291 = vmax.f32 %v2283, 0.0
        %v2292 = vmax.f32 %v2284, 0.0
        %v2293 = vmax.f32 %v2285, 0.0
        %v2294 = vmax.f32 %v2286, 0.0
        %v2295 = vmax.f32 %v2287, 0.0
        %v2296 = vmax.f32 %v2288, 0.0
        %v2297 = vmax.f32 %v2289, 0.0
        %v2298 = vmax.f32 %v2290, 0.0
        %v2299 = vmin.f32 %v2291, 6.0
        %v2300 = vmin.f32 %v2292, 6.0
        %v2301 = vmin.f32 %v2293, 6.0
        %v2302 = vmin.f32 %v2294, 6.0
        %v2303 = vmin.f32 %v2295, 6.0
        %v2304 = vmin.f32 %v2296, 6.0
        %v2305 = vmin.f32 %v2297, 6.0
        %v2306 = vmin.f32 %v2298, 6.0
        %2315 = vrot.lane.b32.xlu0 %v2299, 64
        %v2316 = vpop.permute.xlu0 %2315
        %2317 = vrot.lane.b32.xlu0 %v2300, 64
        %v2318 = vpop.permute.xlu0 %2317
        %2319 = vrot.lane.b32.xlu0 %v2301, 64
        %v2320 = vpop.permute.xlu0 %2319
        %2321 = vrot.lane.b32.xlu0 %v2302, 64
        %v2322 = vpop.permute.xlu0 %2321
        %2323 = vrot.lane.b32.xlu0 %v2303, 64
        %v2324 = vpop.permute.xlu0 %2323
        %2325 = vrot.lane.b32.xlu0 %v2304, 64
        %v2326 = vpop.permute.xlu0 %2325
        %2327 = vrot.lane.b32.xlu0 %v2305, 64
        %v2328 = vpop.permute.xlu0 %2327
        %2329 = vrot.lane.b32.xlu0 %v2306, 64
        %v2330 = vpop.permute.xlu0 %2329
        %vm2339 = vcmask 720384
        %2340 = vst.msk [vmem:[%s353] sm:$0xff] %vm2339, %v2316
        %2341 = vst.msk [vmem:[%s353 + $0x8] sm:$0xff] %vm2339, %v2318
        %2342 = vst.msk [vmem:[%s353 + $0x10] sm:$0xff] %vm2339, %v2320
        %2343 = vst.msk [vmem:[%s353 + $0x18] sm:$0xff] %vm2339, %v2322
        %2344 = vst.msk [vmem:[%s353 + $0x20] sm:$0xff] %vm2339, %v2324
        %2345 = vst.msk [vmem:[%s353 + $0x28] sm:$0xff] %vm2339, %v2326
        %2346 = vst.msk [vmem:[%s353 + $0x30] sm:$0xff] %vm2339, %v2328
        %2347 = vst.msk [vmem:[%s353 + $0x38] sm:$0xff] %vm2339, %v2330
        %v2348 = vrot.slane %v1991, 7
        %v2349 = vrot.slane %v1992, 7
        %v2350 = vrot.slane %v1993, 7
        %v2351 = vrot.slane %v1994, 7
        %v2352 = vrot.slane %v1995, 7
        %v2353 = vrot.slane %v1996, 7
        %v2354 = vrot.slane %v1997, 7
        %v2355 = vrot.slane %v1998, 7
        %v2356 = vsel %vm585, %v2354, %v2355
        %v2357 = vsel %vm585, %v2353, %v2354
        %v2358 = vsel %vm585, %v2352, %v2353
        %v2359 = vsel %vm585, %v2351, %v2352
        %v2360 = vsel %vm585, %v2350, %v2351
        %v2361 = vsel %vm585, %v2349, %v2350
        %v2362 = vsel %vm585, %v2348, %v2349
        %v2363 = vsel %vm585, %v2355, %v2348
        %v2364 = vmul.f32 %v597, %v2363
        %v2365 = vmul.f32 %v602, %v2362
        %v2366 = vmul.f32 %v607, %v2361
        %v2367 = vmul.f32 %v612, %v2360
        %v2368 = vmul.f32 %v617, %v2359
        %v2369 = vmul.f32 %v622, %v2358
        %v2370 = vmul.f32 %v627, %v2357
        %v2371 = vmul.f32 %v632, %v2356
        %v2372 = vrot.slane %v1991, 1
        %v2373 = vrot.slane %v1992, 1
        %v2374 = vrot.slane %v1993, 1
        %v2375 = vrot.slane %v1994, 1
        %v2376 = vrot.slane %v1995, 1
        %v2377 = vrot.slane %v1996, 1
        %v2378 = vrot.slane %v1997, 1
        %v2379 = vrot.slane %v1998, 1
        %v2380 = vsel %vm650, %v2378, %v2379
        %v2381 = vsel %vm650, %v2377, %v2378
        %v2382 = vsel %vm650, %v2376, %v2377
        %v2383 = vsel %vm650, %v2375, %v2376
        %v2384 = vsel %vm650, %v2374, %v2375
        %v2385 = vsel %vm650, %v2373, %v2374
        %v2386 = vsel %vm650, %v2372, %v2373
        %v2387 = vsel %vm650, %v2379, %v2372
        %v2388 = vmul.f32 %v661, %v2386
        %v2389 = vmul.f32 %v665, %v2385
        %v2390 = vmul.f32 %v669, %v2384
        %v2391 = vmul.f32 %v673, %v2383
        %v2392 = vmul.f32 %v677, %v2382
        %v2393 = vmul.f32 %v681, %v2381
        %v2394 = vmul.f32 %v685, %v2380
        %v2395 = vmul.f32 %v689, %v2387
        %2404 = vrot.lane.b32.xlu0 %v2388, 48
        %v2405 = vpop.permute.xlu0 %2404
        %2406 = vrot.lane.b32.xlu0 %v2389, 48
        %v2407 = vpop.permute.xlu0 %2406
        %2408 = vrot.lane.b32.xlu0 %v2390, 48
        %v2409 = vpop.permute.xlu0 %2408
        %2410 = vrot.lane.b32.xlu0 %v2391, 48
        %v2411 = vpop.permute.xlu0 %2410
        %2412 = vrot.lane.b32.xlu0 %v2392, 48
        %v2413 = vpop.permute.xlu0 %2412
        %2414 = vrot.lane.b32.xlu0 %v2393, 48
        %v2415 = vpop.permute.xlu0 %2414
        %2416 = vrot.lane.b32.xlu0 %v2394, 48
        %v2417 = vpop.permute.xlu0 %2416
        %2418 = vrot.lane.b32.xlu0 %v2395, 48
        %v2419 = vpop.permute.xlu0 %2418
        %v2428 = vsel %vm2079, %v2364, %v2024
        %v2429 = vsel %vm2079, %v2365, %v2026
        %v2430 = vsel %vm2079, %v2366, %v2028
        %v2431 = vsel %vm2079, %v2367, %v2030
        %v2432 = vsel %vm2079, %v2368, %v2032
        %v2433 = vsel %vm2079, %v2369, %v2034
        %v2434 = vsel %vm2079, %v2370, %v2036
        %v2435 = vsel %vm2079, %v2371, %v2038
        %v2436 = vsel %vm776, %v2428, %v2405
        %v2437 = vsel %vm776, %v2429, %v2407
        %v2438 = vsel %vm776, %v2430, %v2409
        %v2439 = vsel %vm776, %v2431, %v2411
        %v2440 = vsel %vm776, %v2432, %v2413
        %v2441 = vsel %vm776, %v2433, %v2415
        %v2442 = vsel %vm776, %v2434, %v2417
        %v2443 = vsel %vm776, %v2435, %v2419
        %v2444 = vpack.c.bf16 %v2437, %v2436
        %v2445 = vpack.c.bf16 %v2439, %v2438
        %v2446 = vpack.c.bf16 %v2441, %v2440
        %v2447 = vpack.c.bf16 %v2443, %v2442
        %v2448 = vld [vmem:[%s7] sm:$0xf]
        %v2449 = vld [vmem:[%s7 + $0x4] sm:$0xf]
        %v2450 = vld [vmem:[%s7 + $0x8] sm:$0xf]
        %v2451 = vld [vmem:[%s7 + $0xc] sm:$0xf]
        %v2452 = vld [vmem:[%s7 + $0x10] sm:$0xf]
        %v2453 = vld [vmem:[%s7 + $0x14] sm:$0xf]
        %v2454 = vld [vmem:[%s7 + $0x18] sm:$0xf]
        %v2455 = vld [vmem:[%s7 + $0x1c] sm:$0xf]
        %v2456 = vld [vmem:[%s7 + $0x20] sm:$0xf]
        %v2466 = vunpack.c.l.b16 %v2448
        %v2467 = vunpack.c.l.b16 %v2449
        %v2468 = vunpack.c.l.b16 %v2450
        %v2469 = vunpack.c.l.b16 %v2451
        %v2470 = vunpack.c.l.b16 %v2452
        %v2471 = vunpack.c.l.b16 %v2453
        %v2472 = vunpack.c.l.b16 %v2454
        %v2473 = vunpack.c.l.b16 %v2455
        %v2474 = vunpack.c.l.b16 %v2456
        %v2475 = vpack.c.b16 %v2467, %v2466
        %v2476 = vpack.c.b16 %v2469, %v2468
        %v2477 = vpack.c.b16 %v2471, %v2470
        %v2478 = vpack.c.b16 %v2473, %v2472
        %v2479 = vpack.c.b16 %v2474, %v2474
        %v2485 = vsel %vm2136, %v2444, 0
        %v2488 = vsel %vm2136, %v2445, 0
        %v2491 = vsel %vm2136, %v2446, 0
        %v2494 = vsel %vm2136, %v2447, 0
        %v2497 = vsel %vm2149, %v2479, 0
        %2499 = vmatprep.subr.bf16.mxu0 0
        %2500 = vmatpush1.bf16.msra.mxu0 %v2475
        %2501 = vmatprep.subr.bf16.mxu0 0
        %2502 = vmatpush1.bf16.msra.mxu0 %v2476
        %2503 = vmatprep.subr.bf16.mxu0 0
        %2504 = vmatpush1.bf16.msra.mxu0 %v2477
        %2505 = vmatprep.subr.bf16.mxu0 0
        %2506 = vmatpush1.bf16.msra.mxu0 %v2478
        %2507 = vmatprep.subr.bf16.mxu0 0
        %2508 = vmatpush1.bf16.msra.mxu0 %v2497
        %2509 = vmatprep.subr.bf16.mxu0 0
        %2510 = vmatpush1.bf16.msra.mxu0 0
        %2511 = vmatprep.subr.bf16.mxu0 0
        %2512 = vmatpush1.bf16.msra.mxu0 0
        %2513 = vmatprep.subr.bf16.mxu0 0
        %2514 = vmatpush1.bf16.msra.mxu0 0
        %2515 = vmatprep.subr.bf16.mxu0 0
        %2516 = vmatpush1.bf16.msra.mxu0 0
        %2517 = vmatprep.subr.bf16.mxu0 0
        %2518 = vmatpush1.bf16.msra.mxu0 0
        %2519 = vmatprep.subr.bf16.mxu0 0
        %2520 = vmatpush1.bf16.msra.mxu0 0
        %2521 = vmatprep.subr.bf16.mxu0 0
        %2522 = vmatpush1.bf16.msra.mxu0 0
        %2523 = vmatprep.subr.bf16.mxu0 0
        %2524 = vmatpush1.bf16.msra.mxu0 0
        %2525 = vmatprep.subr.bf16.mxu0 0
        %2526 = vmatpush1.bf16.msra.mxu0 0
        %2527 = vmatprep.subr.bf16.mxu0 0
        %2528 = vmatpush1.bf16.msra.mxu0 0
        %2529 = vmatprep.subr.bf16.mxu0 0
        %2530 = vmatpush1.bf16.msra.mxu0 0
        %2531 = vmatprep.mubr.bf16.mxu0 0
        %2532 = vmatmul.mubr.bf16.gmra.mrb[0].mxu0 %v2485
        %v2533 = vpop.f32.mrb[0].mxu0
        %v2534 = vadd.f32 0.0, %v2533
        %v2535 = vpop.f32.mrb[0].mxu0
        %v2536 = vpop.f32.mrb[0].mxu0
        %v2537 = vadd.f32 0.0, %v2536
        %v2538 = vpop.f32.mrb[0].mxu0
        %2539 = vmatprep.mubr.bf16.mxu0 0
        %2540 = vmatmul.mubr.bf16.gmra.mrb[0].mxu0 %v2488
        %v2541 = vpop.f32.mrb[0].mxu0
        %v2542 = vadd.f32 0.0, %v2541
        %v2543 = vpop.f32.mrb[0].mxu0
        %v2544 = vpop.f32.mrb[0].mxu0
        %v2545 = vadd.f32 0.0, %v2544
        %v2546 = vpop.f32.mrb[0].mxu0
        %2547 = vmatprep.mubr.bf16.mxu0 0
        %2548 = vmatmul.mubr.bf16.gmra.mrb[0].mxu0 %v2491
        %v2549 = vpop.f32.mrb[0].mxu0
        %v2550 = vadd.f32 0.0, %v2549
        %v2551 = vpop.f32.mrb[0].mxu0
        %v2552 = vpop.f32.mrb[0].mxu0
        %v2553 = vadd.f32 0.0, %v2552
        %v2554 = vpop.f32.mrb[0].mxu0
        %2555 = vmatprep.mubr.bf16.mxu0 0
        %2556 = vmatmul.mubr.bf16.gmra.mrb[0].mxu0 %v2494
        %v2557 = vpop.f32.mrb[0].mxu0
        %v2558 = vadd.f32 0.0, %v2557
        %v2559 = vpop.f32.mrb[0].mxu0
        %v2560 = vpop.f32.mrb[0].mxu0
        %v2561 = vadd.f32 0.0, %v2560
        %v2562 = vpop.f32.mrb[0].mxu0
        %2563 = vdwg.mxu0
        %v2564 = vld [vmem:[%s9 + $0x2] sm:$0x1]
        %v2565 = vlaneseq
        %v2566 = vshrl.u32 %v2565, 7
        %v2567 = vsub.s32 0, %v2566
        %v2568 = vrot.slane %v2564, %v2567
        %2570 = vrot.lane.b32.xlu0 %v2568, 112
        %v2571 = vpop.permute.xlu0 %2570
        %v2573 = vmul.f32 %v2534, %v2571
        %v2574 = vmul.f32 %v2537, %v2571
        %v2575 = vmul.f32 %v2542, %v2571
        %v2576 = vmul.f32 %v2545, %v2571
        %v2577 = vmul.f32 %v2550, %v2571
        %v2578 = vmul.f32 %v2553, %v2571
        %v2579 = vmul.f32 %v2558, %v2571
        %v2580 = vmul.f32 %v2561, %v2571
        %v2581 = vld [vmem:[%s9 + $0x3] sm:$0x1]
        %v2582 = vlaneseq
        %v2583 = vshrl.u32 %v2582, 7
        %v2584 = vsub.s32 0, %v2583
        %v2585 = vrot.slane %v2581, %v2584
        %2587 = vrot.lane.b32.xlu0 %v2585, 112
        %v2588 = vpop.permute.xlu0 %2587
        %v2590 = vadd.f32 %v2573, %v2588
        %v2591 = vadd.f32 %v2574, %v2588
        %v2592 = vadd.f32 %v2575, %v2588
        %v2593 = vadd.f32 %v2576, %v2588
        %v2594 = vadd.f32 %v2577, %v2588
        %v2595 = vadd.f32 %v2578, %v2588
        %v2596 = vadd.f32 %v2579, %v2588
        %v2597 = vadd.f32 %v2580, %v2588
        %v2598 = vmax.f32 %v2590, 0.0
        %v2599 = vmax.f32 %v2591, 0.0
        %v2600 = vmax.f32 %v2592, 0.0
        %v2601 = vmax.f32 %v2593, 0.0
        %v2602 = vmax.f32 %v2594, 0.0
        %v2603 = vmax.f32 %v2595, 0.0
        %v2604 = vmax.f32 %v2596, 0.0
        %v2605 = vmax.f32 %v2597, 0.0
        %v2606 = vmin.f32 %v2598, 6.0
        %v2607 = vmin.f32 %v2599, 6.0
        %v2608 = vmin.f32 %v2600, 6.0
        %v2609 = vmin.f32 %v2601, 6.0
        %v2610 = vmin.f32 %v2602, 6.0
        %v2611 = vmin.f32 %v2603, 6.0
        %v2612 = vmin.f32 %v2604, 6.0
        %v2613 = vmin.f32 %v2605, 6.0
        %2622 = vrot.lane.b32.xlu0 %v2606, 88
        %v2623 = vpop.permute.xlu0 %2622
        %2624 = vrot.lane.b32.xlu0 %v2607, 88
        %v2625 = vpop.permute.xlu0 %2624
        %2626 = vrot.lane.b32.xlu0 %v2608, 88
        %v2627 = vpop.permute.xlu0 %2626
        %2628 = vrot.lane.b32.xlu0 %v2609, 88
        %v2629 = vpop.permute.xlu0 %2628
        %2630 = vrot.lane.b32.xlu0 %v2610, 88
        %v2631 = vpop.permute.xlu0 %2630
        %2632 = vrot.lane.b32.xlu0 %v2611, 88
        %v2633 = vpop.permute.xlu0 %2632
        %2634 = vrot.lane.b32.xlu0 %v2612, 88
        %v2635 = vpop.permute.xlu0 %2634
        %2636 = vrot.lane.b32.xlu0 %v2613, 88
        %v2637 = vpop.permute.xlu0 %2636
        %vm2646 = vcmask 917184
        %2647 = vst.msk [vmem:[%s353] sm:$0xff] %vm2646, %v2623
        %2648 = vst.msk [vmem:[%s353 + $0x8] sm:$0xff] %vm2646, %v2625
        %2649 = vst.msk [vmem:[%s353 + $0x10] sm:$0xff] %vm2646, %v2627
        %2650 = vst.msk [vmem:[%s353 + $0x18] sm:$0xff] %vm2646, %v2629
        %2651 = vst.msk [vmem:[%s353 + $0x20] sm:$0xff] %vm2646, %v2631
        %2652 = vst.msk [vmem:[%s353 + $0x28] sm:$0xff] %vm2646, %v2633
        %2653 = vst.msk [vmem:[%s353 + $0x30] sm:$0xff] %vm2646, %v2635
        %2654 = vst.msk [vmem:[%s353 + $0x38] sm:$0xff] %vm2646, %v2637
        %vm2655 = vcmp.gt.f32.partialorder %v370, 0.0
        %vm2656 = vcmp.gt.f32.partialorder %v371, 0.0
        %vm2657 = vcmp.gt.f32.partialorder %v372, 0.0
        %vm2658 = vcmp.gt.f32.partialorder %v373, 0.0
        %vm2659 = vcmp.gt.f32.partialorder %v374, 0.0
        %vm2660 = vcmp.gt.f32.partialorder %v375, 0.0
        %vm2661 = vcmp.gt.f32.partialorder %v376, 0.0
        %vm2662 = vcmp.gt.f32.partialorder %v377, 0.0
        %v2663 = vrot.slane %v362, 7
        %v2664 = vrot.slane %v363, 7
        %v2665 = vrot.slane %v364, 7
        %v2666 = vrot.slane %v365, 7
        %v2667 = vrot.slane %v366, 7
        %v2668 = vrot.slane %v367, 7
        %v2669 = vrot.slane %v368, 7
        %v2670 = vrot.slane %v369, 7
        %v2671 = vsel %vm585, %v2669, %v2670
        %v2672 = vsel %vm585, %v2668, %v2669
        %v2673 = vsel %vm585, %v2667, %v2668
        %v2674 = vsel %vm585, %v2666, %v2667
        %v2675 = vsel %vm585, %v2665, %v2666
        %v2676 = vsel %vm585, %v2664, %v2665
        %v2677 = vsel %vm585, %v2663, %v2664
        %v2678 = vsel %vm585, %v2670, %v2663
        %v2679 = vsel %vm2655, 1, 0
        %v2680 = vsel %vm2656, 1, 0
        %v2681 = vsel %vm2657, 1, 0
        %v2682 = vsel %vm2658, 1, 0
        %v2683 = vsel %vm2659, 1, 0
        %v2684 = vsel %vm2660, 1, 0
        %v2685 = vsel %vm2661, 1, 0
        %v2686 = vsel %vm2662, 1, 0
        %2687 = vset.pattern.permute.xlu0 0
        %2688 = vperm.xlu0 %2687, %v2679
        %v2689 = vpop.permute.xlu0 %2688
        %2690 = vset.pattern.permute.xlu0 0
        %2691 = vperm.xlu0 %2690, %v2680
        %v2692 = vpop.permute.xlu0 %2691
        %2693 = vset.pattern.permute.xlu0 0
        %2694 = vperm.xlu0 %2693, %v2681
        %v2695 = vpop.permute.xlu0 %2694
        %2696 = vset.pattern.permute.xlu0 0
        %2697 = vperm.xlu0 %2696, %v2682
        %v2698 = vpop.permute.xlu0 %2697
        %2699 = vset.pattern.permute.xlu0 0
        %2700 = vperm.xlu0 %2699, %v2683
        %v2701 = vpop.permute.xlu0 %2700
        %2702 = vset.pattern.permute.xlu0 0
        %2703 = vperm.xlu0 %2702, %v2684
        %v2704 = vpop.permute.xlu0 %2703
        %2705 = vset.pattern.permute.xlu0 0
        %2706 = vperm.xlu0 %2705, %v2685
        %v2707 = vpop.permute.xlu0 %2706
        %2708 = vset.pattern.permute.xlu0 0
        %2709 = vperm.xlu0 %2708, %v2686
        %v2710 = vpop.permute.xlu0 %2709
        %vm2711 = vcmp.eq.s32.totalorder %v2689, 1
        %vm2712 = vcmp.eq.s32.totalorder %v2692, 1
        %vm2713 = vcmp.eq.s32.totalorder %v2695, 1
        %vm2714 = vcmp.eq.s32.totalorder %v2698, 1
        %vm2715 = vcmp.eq.s32.totalorder %v2701, 1
        %vm2716 = vcmp.eq.s32.totalorder %v2704, 1
        %vm2717 = vcmp.eq.s32.totalorder %v2707, 1
        %vm2718 = vcmp.eq.s32.totalorder %v2710, 1
        %v2719 = vsel %vm2711, %v2671, -1e+30
        %v2720 = vsel %vm2712, %v2678, -1e+30
        %v2721 = vsel %vm2713, %v2677, -1e+30
        %v2722 = vsel %vm2714, %v2676, -1e+30
        %v2723 = vsel %vm2715, %v2675, -1e+30
        %v2724 = vsel %vm2716, %v2674, -1e+30
        %v2725 = vsel %vm2717, %v2673, -1e+30
        %v2726 = vsel %vm2718, %v2672, -1e+30
        %v2727 = vmax.f32 %v362, %v2719
        %v2728 = vmax.f32 %v363, %v2720
        %v2729 = vmax.f32 %v364, %v2721
        %v2730 = vmax.f32 %v365, %v2722
        %v2731 = vmax.f32 %v366, %v2723
        %v2732 = vmax.f32 %v367, %v2724
        %v2733 = vmax.f32 %v368, %v2725
        %v2734 = vmax.f32 %v369, %v2726
        %2735 = vset.pattern.permute.xlu0 1
        %2736 = vperm.xlu0 %2735, %v2679
        %v2737 = vpop.permute.xlu0 %2736
        %2738 = vset.pattern.permute.xlu0 1
        %2739 = vperm.xlu0 %2738, %v2680
        %v2740 = vpop.permute.xlu0 %2739
        %2741 = vset.pattern.permute.xlu0 1
        %2742 = vperm.xlu0 %2741, %v2681
        %v2743 = vpop.permute.xlu0 %2742
        %2744 = vset.pattern.permute.xlu0 1
        %2745 = vperm.xlu0 %2744, %v2682
        %v2746 = vpop.permute.xlu0 %2745
        %2747 = vset.pattern.permute.xlu0 1
        %2748 = vperm.xlu0 %2747, %v2683
        %v2749 = vpop.permute.xlu0 %2748
        %2750 = vset.pattern.permute.xlu0 1
        %2751 = vperm.xlu0 %2750, %v2684
        %v2752 = vpop.permute.xlu0 %2751
        %2753 = vset.pattern.permute.xlu0 1
        %2754 = vperm.xlu0 %2753, %v2685
        %v2755 = vpop.permute.xlu0 %2754
        %2756 = vset.pattern.permute.xlu0 1
        %2757 = vperm.xlu0 %2756, %v2686
        %v2758 = vpop.permute.xlu0 %2757
        %vm2759 = vcmp.eq.s32.totalorder %v2737, 1
        %vm2760 = vcmp.eq.s32.totalorder %v2740, 1
        %vm2761 = vcmp.eq.s32.totalorder %v2743, 1
        %vm2762 = vcmp.eq.s32.totalorder %v2746, 1
        %vm2763 = vcmp.eq.s32.totalorder %v2749, 1
        %vm2764 = vcmp.eq.s32.totalorder %v2752, 1
        %vm2765 = vcmp.eq.s32.totalorder %v2755, 1
        %vm2766 = vcmp.eq.s32.totalorder %v2758, 1
        %v2767 = vsel %vm2759, %v369, -1e+30
        %v2768 = vsel %vm2760, %v362, -1e+30
        %v2769 = vsel %vm2761, %v363, -1e+30
        %v2770 = vsel %vm2762, %v364, -1e+30
        %v2771 = vsel %vm2763, %v365, -1e+30
        %v2772 = vsel %vm2764, %v366, -1e+30
        %v2773 = vsel %vm2765, %v367, -1e+30
        %v2774 = vsel %vm2766, %v368, -1e+30
        %v2775 = vmax.f32 %v2727, %v2767
        %v2776 = vmax.f32 %v2728, %v2768
        %v2777 = vmax.f32 %v2729, %v2769
        %v2778 = vmax.f32 %v2730, %v2770
        %v2779 = vmax.f32 %v2731, %v2771
        %v2780 = vmax.f32 %v2732, %v2772
        %v2781 = vmax.f32 %v2733, %v2773
        %v2782 = vmax.f32 %v2734, %v2774
        %v2783 = vrot.slane %v362, 1
        %v2784 = vrot.slane %v363, 1
        %v2785 = vrot.slane %v364, 1
        %v2786 = vrot.slane %v365, 1
        %v2787 = vrot.slane %v366, 1
        %v2788 = vrot.slane %v367, 1
        %v2789 = vrot.slane %v368, 1
        %v2790 = vrot.slane %v369, 1
        %v2791 = vsel %vm650, %v2789, %v2790
        %v2792 = vsel %vm650, %v2788, %v2789
        %v2793 = vsel %vm650, %v2787, %v2788
        %v2794 = vsel %vm650, %v2786, %v2787
        %v2795 = vsel %vm650, %v2785, %v2786
        %v2796 = vsel %vm650, %v2784, %v2785
        %v2797 = vsel %vm650, %v2783, %v2784
        %v2798 = vsel %vm650, %v2790, %v2783
        %2799 = vset.pattern.permute.xlu0 2
        %2800 = vperm.xlu0 %2799, %v2679
        %v2801 = vpop.permute.xlu0 %2800
        %2802 = vset.pattern.permute.xlu0 2
        %2803 = vperm.xlu0 %2802, %v2680
        %v2804 = vpop.permute.xlu0 %2803
        %2805 = vset.pattern.permute.xlu0 2
        %2806 = vperm.xlu0 %2805, %v2681
        %v2807 = vpop.permute.xlu0 %2806
        %2808 = vset.pattern.permute.xlu0 2
        %2809 = vperm.xlu0 %2808, %v2682
        %v2810 = vpop.permute.xlu0 %2809
        %2811 = vset.pattern.permute.xlu0 2
        %2812 = vperm.xlu0 %2811, %v2683
        %v2813 = vpop.permute.xlu0 %2812
        %2814 = vset.pattern.permute.xlu0 2
        %2815 = vperm.xlu0 %2814, %v2684
        %v2816 = vpop.permute.xlu0 %2815
        %2817 = vset.pattern.permute.xlu0 2
        %2818 = vperm.xlu0 %2817, %v2685
        %v2819 = vpop.permute.xlu0 %2818
        %2820 = vset.pattern.permute.xlu0 2
        %2821 = vperm.xlu0 %2820, %v2686
        %v2822 = vpop.permute.xlu0 %2821
        %vm2823 = vcmp.eq.s32.totalorder %v2801, 1
        %vm2824 = vcmp.eq.s32.totalorder %v2804, 1
        %vm2825 = vcmp.eq.s32.totalorder %v2807, 1
        %vm2826 = vcmp.eq.s32.totalorder %v2810, 1
        %vm2827 = vcmp.eq.s32.totalorder %v2813, 1
        %vm2828 = vcmp.eq.s32.totalorder %v2816, 1
        %vm2829 = vcmp.eq.s32.totalorder %v2819, 1
        %vm2830 = vcmp.eq.s32.totalorder %v2822, 1
        %v2831 = vsel %vm2823, %v2798, -1e+30
        %v2832 = vsel %vm2824, %v2797, -1e+30
        %v2833 = vsel %vm2825, %v2796, -1e+30
        %v2834 = vsel %vm2826, %v2795, -1e+30
        %v2835 = vsel %vm2827, %v2794, -1e+30
        %v2836 = vsel %vm2828, %v2793, -1e+30
        %v2837 = vsel %vm2829, %v2792, -1e+30
        %v2838 = vsel %vm2830, %v2791, -1e+30
        %v2839 = vmax.f32 %v2775, %v2831
        %v2840 = vmax.f32 %v2776, %v2832
        %v2841 = vmax.f32 %v2777, %v2833
        %v2842 = vmax.f32 %v2778, %v2834
        %v2843 = vmax.f32 %v2779, %v2835
        %v2844 = vmax.f32 %v2780, %v2836
        %v2845 = vmax.f32 %v2781, %v2837
        %v2846 = vmax.f32 %v2782, %v2838
        %2847 = vset.pattern.permute.xlu0 3
        %2848 = vperm.xlu0 %2847, %v2679
        %v2849 = vpop.permute.xlu0 %2848
        %2850 = vset.pattern.permute.xlu0 3
        %2851 = vperm.xlu0 %2850, %v2680
        %v2852 = vpop.permute.xlu0 %2851
        %2853 = vset.pattern.permute.xlu0 3
        %2854 = vperm.xlu0 %2853, %v2681
        %v2855 = vpop.permute.xlu0 %2854
        %2856 = vset.pattern.permute.xlu0 3
        %2857 = vperm.xlu0 %2856, %v2682
        %v2858 = vpop.permute.xlu0 %2857
        %2859 = vset.pattern.permute.xlu0 3
        %2860 = vperm.xlu0 %2859, %v2683
        %v2861 = vpop.permute.xlu0 %2860
        %2862 = vset.pattern.permute.xlu0 3
        %2863 = vperm.xlu0 %2862, %v2684
        %v2864 = vpop.permute.xlu0 %2863
        %2865 = vset.pattern.permute.xlu0 3
        %2866 = vperm.xlu0 %2865, %v2685
        %v2867 = vpop.permute.xlu0 %2866
        %2868 = vset.pattern.permute.xlu0 3
        %2869 = vperm.xlu0 %2868, %v2686
        %v2870 = vpop.permute.xlu0 %2869
        %vm2871 = vcmp.eq.s32.totalorder %v2849, 1
        %vm2872 = vcmp.eq.s32.totalorder %v2852, 1
        %vm2873 = vcmp.eq.s32.totalorder %v2855, 1
        %vm2874 = vcmp.eq.s32.totalorder %v2858, 1
        %vm2875 = vcmp.eq.s32.totalorder %v2861, 1
        %vm2876 = vcmp.eq.s32.totalorder %v2864, 1
        %vm2877 = vcmp.eq.s32.totalorder %v2867, 1
        %vm2878 = vcmp.eq.s32.totalorder %v2870, 1
        %v2879 = vsel %vm2871, %v2678, -1e+30
        %v2880 = vsel %vm2872, %v2677, -1e+30
        %v2881 = vsel %vm2873, %v2676, -1e+30
        %v2882 = vsel %vm2874, %v2675, -1e+30
        %v2883 = vsel %vm2875, %v2674, -1e+30
        %v2884 = vsel %vm2876, %v2673, -1e+30
        %v2885 = vsel %vm2877, %v2672, -1e+30
        %v2886 = vsel %vm2878, %v2671, -1e+30
        %v2887 = vmax.f32 %v2839, %v2879
        %v2888 = vmax.f32 %v2840, %v2880
        %v2889 = vmax.f32 %v2841, %v2881
        %v2890 = vmax.f32 %v2842, %v2882
        %v2891 = vmax.f32 %v2843, %v2883
        %v2892 = vmax.f32 %v2844, %v2884
        %v2893 = vmax.f32 %v2845, %v2885
        %v2894 = vmax.f32 %v2846, %v2886
        %2895 = vset.pattern.permute.xlu0 4
        %2896 = vperm.xlu0 %2895, %v2679
        %v2897 = vpop.permute.xlu0 %2896
        %2898 = vset.pattern.permute.xlu0 4
        %2899 = vperm.xlu0 %2898, %v2680
        %v2900 = vpop.permute.xlu0 %2899
        %2901 = vset.pattern.permute.xlu0 4
        %2902 = vperm.xlu0 %2901, %v2681
        %v2903 = vpop.permute.xlu0 %2902
        %2904 = vset.pattern.permute.xlu0 4
        %2905 = vperm.xlu0 %2904, %v2682
        %v2906 = vpop.permute.xlu0 %2905
        %2907 = vset.pattern.permute.xlu0 4
        %2908 = vperm.xlu0 %2907, %v2683
        %v2909 = vpop.permute.xlu0 %2908
        %2910 = vset.pattern.permute.xlu0 4
        %2911 = vperm.xlu0 %2910, %v2684
        %v2912 = vpop.permute.xlu0 %2911
        %2913 = vset.pattern.permute.xlu0 4
        %2914 = vperm.xlu0 %2913, %v2685
        %v2915 = vpop.permute.xlu0 %2914
        %2916 = vset.pattern.permute.xlu0 4
        %2917 = vperm.xlu0 %2916, %v2686
        %v2918 = vpop.permute.xlu0 %2917
        %vm2919 = vcmp.eq.s32.totalorder %v2897, 1
        %vm2920 = vcmp.eq.s32.totalorder %v2900, 1
        %vm2921 = vcmp.eq.s32.totalorder %v2903, 1
        %vm2922 = vcmp.eq.s32.totalorder %v2906, 1
        %vm2923 = vcmp.eq.s32.totalorder %v2909, 1
        %vm2924 = vcmp.eq.s32.totalorder %v2912, 1
        %vm2925 = vcmp.eq.s32.totalorder %v2915, 1
        %vm2926 = vcmp.eq.s32.totalorder %v2918, 1
        %v2927 = vsel %vm2919, %v2797, -1e+30
        %v2928 = vsel %vm2920, %v2796, -1e+30
        %v2929 = vsel %vm2921, %v2795, -1e+30
        %v2930 = vsel %vm2922, %v2794, -1e+30
        %v2931 = vsel %vm2923, %v2793, -1e+30
        %v2932 = vsel %vm2924, %v2792, -1e+30
        %v2933 = vsel %vm2925, %v2791, -1e+30
        %v2934 = vsel %vm2926, %v2798, -1e+30
        %v2935 = vmax.f32 %v2887, %v2927
        %v2936 = vmax.f32 %v2888, %v2928
        %v2937 = vmax.f32 %v2889, %v2929
        %v2938 = vmax.f32 %v2890, %v2930
        %v2939 = vmax.f32 %v2891, %v2931
        %v2940 = vmax.f32 %v2892, %v2932
        %v2941 = vmax.f32 %v2893, %v2933
        %v2942 = vmax.f32 %v2894, %v2934
        %2943 = vset.pattern.permute.xlu0 5
        %2944 = vperm.xlu0 %2943, %v2679
        %v2945 = vpop.permute.xlu0 %2944
        %2946 = vset.pattern.permute.xlu0 5
        %2947 = vperm.xlu0 %2946, %v2680
        %v2948 = vpop.permute.xlu0 %2947
        %2949 = vset.pattern.permute.xlu0 5
        %2950 = vperm.xlu0 %2949, %v2681
        %v2951 = vpop.permute.xlu0 %2950
        %2952 = vset.pattern.permute.xlu0 5
        %2953 = vperm.xlu0 %2952, %v2682
        %v2954 = vpop.permute.xlu0 %2953
        %2955 = vset.pattern.permute.xlu0 5
        %2956 = vperm.xlu0 %2955, %v2683
        %v2957 = vpop.permute.xlu0 %2956
        %2958 = vset.pattern.permute.xlu0 5
        %2959 = vperm.xlu0 %2958, %v2684
        %v2960 = vpop.permute.xlu0 %2959
        %2961 = vset.pattern.permute.xlu0 5
        %2962 = vperm.xlu0 %2961, %v2685
        %v2963 = vpop.permute.xlu0 %2962
        %2964 = vset.pattern.permute.xlu0 5
        %2965 = vperm.xlu0 %2964, %v2686
        %v2966 = vpop.permute.xlu0 %2965
        %vm2967 = vcmp.eq.s32.totalorder %v2945, 1
        %vm2968 = vcmp.eq.s32.totalorder %v2948, 1
        %vm2969 = vcmp.eq.s32.totalorder %v2951, 1
        %vm2970 = vcmp.eq.s32.totalorder %v2954, 1
        %vm2971 = vcmp.eq.s32.totalorder %v2957, 1
        %vm2972 = vcmp.eq.s32.totalorder %v2960, 1
        %vm2973 = vcmp.eq.s32.totalorder %v2963, 1
        %vm2974 = vcmp.eq.s32.totalorder %v2966, 1
        %v2975 = vsel %vm2967, %v2677, -1e+30
        %v2976 = vsel %vm2968, %v2676, -1e+30
        %v2977 = vsel %vm2969, %v2675, -1e+30
        %v2978 = vsel %vm2970, %v2674, -1e+30
        %v2979 = vsel %vm2971, %v2673, -1e+30
        %v2980 = vsel %vm2972, %v2672, -1e+30
        %v2981 = vsel %vm2973, %v2671, -1e+30
        %v2982 = vsel %vm2974, %v2678, -1e+30
        %v2983 = vmax.f32 %v2935, %v2975
        %v2984 = vmax.f32 %v2936, %v2976
        %v2985 = vmax.f32 %v2937, %v2977
        %v2986 = vmax.f32 %v2938, %v2978
        %v2987 = vmax.f32 %v2939, %v2979
        %v2988 = vmax.f32 %v2940, %v2980
        %v2989 = vmax.f32 %v2941, %v2981
        %v2990 = vmax.f32 %v2942, %v2982
        %2991 = vset.pattern.permute.xlu0 6
        %2992 = vperm.xlu0 %2991, %v2679
        %v2993 = vpop.permute.xlu0 %2992
        %2994 = vset.pattern.permute.xlu0 6
        %2995 = vperm.xlu0 %2994, %v2680
        %v2996 = vpop.permute.xlu0 %2995
        %2997 = vset.pattern.permute.xlu0 6
        %2998 = vperm.xlu0 %2997, %v2681
        %v2999 = vpop.permute.xlu0 %2998
        %3000 = vset.pattern.permute.xlu0 6
        %3001 = vperm.xlu0 %3000, %v2682
        %v3002 = vpop.permute.xlu0 %3001
        %3003 = vset.pattern.permute.xlu0 6
        %3004 = vperm.xlu0 %3003, %v2683
        %v3005 = vpop.permute.xlu0 %3004
        %3006 = vset.pattern.permute.xlu0 6
        %3007 = vperm.xlu0 %3006, %v2684
        %v3008 = vpop.permute.xlu0 %3007
        %3009 = vset.pattern.permute.xlu0 6
        %3010 = vperm.xlu0 %3009, %v2685
        %v3011 = vpop.permute.xlu0 %3010
        %3012 = vset.pattern.permute.xlu0 6
        %3013 = vperm.xlu0 %3012, %v2686
        %v3014 = vpop.permute.xlu0 %3013
        %vm3015 = vcmp.eq.s32.totalorder %v2993, 1
        %vm3016 = vcmp.eq.s32.totalorder %v2996, 1
        %vm3017 = vcmp.eq.s32.totalorder %v2999, 1
        %vm3018 = vcmp.eq.s32.totalorder %v3002, 1
        %vm3019 = vcmp.eq.s32.totalorder %v3005, 1
        %vm3020 = vcmp.eq.s32.totalorder %v3008, 1
        %vm3021 = vcmp.eq.s32.totalorder %v3011, 1
        %vm3022 = vcmp.eq.s32.totalorder %v3014, 1
        %v3023 = vsel %vm3015, %v363, -1e+30
        %v3024 = vsel %vm3016, %v364, -1e+30
        %v3025 = vsel %vm3017, %v365, -1e+30
        %v3026 = vsel %vm3018, %v366, -1e+30
        %v3027 = vsel %vm3019, %v367, -1e+30
        %v3028 = vsel %vm3020, %v368, -1e+30
        %v3029 = vsel %vm3021, %v369, -1e+30
        %v3030 = vsel %vm3022, %v362, -1e+30
        %v3031 = vmax.f32 %v2983, %v3023
        %v3032 = vmax.f32 %v2984, %v3024
        %v3033 = vmax.f32 %v2985, %v3025
        %v3034 = vmax.f32 %v2986, %v3026
        %v3035 = vmax.f32 %v2987, %v3027
        %v3036 = vmax.f32 %v2988, %v3028
        %v3037 = vmax.f32 %v2989, %v3029
        %v3038 = vmax.f32 %v2990, %v3030
        %3039 = vset.pattern.permute.xlu0 7
        %3040 = vperm.xlu0 %3039, %v2679
        %v3041 = vpop.permute.xlu0 %3040
        %3042 = vset.pattern.permute.xlu0 7
        %3043 = vperm.xlu0 %3042, %v2680
        %v3044 = vpop.permute.xlu0 %3043
        %3045 = vset.pattern.permute.xlu0 7
        %3046 = vperm.xlu0 %3045, %v2681
        %v3047 = vpop.permute.xlu0 %3046
        %3048 = vset.pattern.permute.xlu0 7
        %3049 = vperm.xlu0 %3048, %v2682
        %v3050 = vpop.permute.xlu0 %3049
        %3051 = vset.pattern.permute.xlu0 7
        %3052 = vperm.xlu0 %3051, %v2683
        %v3053 = vpop.permute.xlu0 %3052
        %3054 = vset.pattern.permute.xlu0 7
        %3055 = vperm.xlu0 %3054, %v2684
        %v3056 = vpop.permute.xlu0 %3055
        %3057 = vset.pattern.permute.xlu0 7
        %3058 = vperm.xlu0 %3057, %v2685
        %v3059 = vpop.permute.xlu0 %3058
        %3060 = vset.pattern.permute.xlu0 7
        %3061 = vperm.xlu0 %3060, %v2686
        %v3062 = vpop.permute.xlu0 %3061
        %vm3063 = vcmp.eq.s32.totalorder %v3041, 1
        %vm3064 = vcmp.eq.s32.totalorder %v3044, 1
        %vm3065 = vcmp.eq.s32.totalorder %v3047, 1
        %vm3066 = vcmp.eq.s32.totalorder %v3050, 1
        %vm3067 = vcmp.eq.s32.totalorder %v3053, 1
        %vm3068 = vcmp.eq.s32.totalorder %v3056, 1
        %vm3069 = vcmp.eq.s32.totalorder %v3059, 1
        %vm3070 = vcmp.eq.s32.totalorder %v3062, 1
        %v3071 = vsel %vm3063, %v2796, -1e+30
        %v3072 = vsel %vm3064, %v2795, -1e+30
        %v3073 = vsel %vm3065, %v2794, -1e+30
        %v3074 = vsel %vm3066, %v2793, -1e+30
        %v3075 = vsel %vm3067, %v2792, -1e+30
        %v3076 = vsel %vm3068, %v2791, -1e+30
        %v3077 = vsel %vm3069, %v2798, -1e+30
        %v3078 = vsel %vm3070, %v2797, -1e+30
        %v3079 = vmax.f32 %v3031, %v3071
        %v3080 = vmax.f32 %v3032, %v3072
        %v3081 = vmax.f32 %v3033, %v3073
        %v3082 = vmax.f32 %v3034, %v3074
        %v3083 = vmax.f32 %v3035, %v3075
        %v3084 = vmax.f32 %v3036, %v3076
        %v3085 = vmax.f32 %v3037, %v3077
        %v3086 = vmax.f32 %v3038, %v3078
        %v3087 = vpack.c.bf16 %v3080, %v3079
        %v3088 = vpack.c.bf16 %v3082, %v3081
        %v3089 = vpack.c.bf16 %v3084, %v3083
        %v3090 = vpack.c.bf16 %v3086, %v3085
        %v3091 = vld [vmem:[%s8] sm:$0xf]
        %v3092 = vld [vmem:[%s8 + $0x4] sm:$0xf]
        %v3093 = vld [vmem:[%s8 + $0x8] sm:$0xf]
        %v3094 = vld [vmem:[%s8 + $0xc] sm:$0xf]
        %v3095 = vld [vmem:[%s8 + $0x10] sm:$0xf]
        %v3096 = vld [vmem:[%s8 + $0x14] sm:$0xf]
        %v3097 = vld [vmem:[%s8 + $0x18] sm:$0xf]
        %v3098 = vld [vmem:[%s8 + $0x1c] sm:$0xf]
        %v3107 = vunpack.c.l.b16 %v3091
        %v3108 = vunpack.c.l.b16 %v3092
        %v3109 = vunpack.c.l.b16 %v3093
        %v3110 = vunpack.c.l.b16 %v3094
        %v3111 = vunpack.c.l.b16 %v3095
        %v3112 = vunpack.c.l.b16 %v3096
        %v3113 = vunpack.c.l.b16 %v3097
        %v3114 = vunpack.c.l.b16 %v3098
        %v3115 = vpack.c.b16 %v3108, %v3107
        %v3116 = vpack.c.b16 %v3110, %v3109
        %v3117 = vpack.c.b16 %v3112, %v3111
        %v3118 = vpack.c.b16 %v3114, %v3113
        %v3124 = vsel %vm414, %v3087, 0
        %v3127 = vsel %vm414, %v3088, 0
        %v3130 = vsel %vm414, %v3089, 0
        %v3133 = vsel %vm414, %v3090, 0
        %3135 = vmatprep.subr.bf16.mxu0 0
        %3136 = vmatpush1.bf16.msra.mxu0 %v3115
        %3137 = vmatprep.subr.bf16.mxu0 0
        %3138 = vmatpush1.bf16.msra.mxu0 %v3116
        %3139 = vmatprep.subr.bf16.mxu0 0
        %3140 = vmatpush1.bf16.msra.mxu0 %v3117
        %3141 = vmatprep.subr.bf16.mxu0 0
        %3142 = vmatpush1.bf16.msra.mxu0 %v3118
        %3143 = vmatprep.subr.bf16.mxu0 0
        %3144 = vmatpush1.bf16.msra.mxu0 0
        %3145 = vmatprep.subr.bf16.mxu0 0
        %3146 = vmatpush1.bf16.msra.mxu0 0
        %3147 = vmatprep.subr.bf16.mxu0 0
        %3148 = vmatpush1.bf16.msra.mxu0 0
        %3149 = vmatprep.subr.bf16.mxu0 0
        %3150 = vmatpush1.bf16.msra.mxu0 0
        %3151 = vmatprep.subr.bf16.mxu0 0
        %3152 = vmatpush1.bf16.msra.mxu0 0
        %3153 = vmatprep.subr.bf16.mxu0 0
        %3154 = vmatpush1.bf16.msra.mxu0 0
        %3155 = vmatprep.subr.bf16.mxu0 0
        %3156 = vmatpush1.bf16.msra.mxu0 0
        %3157 = vmatprep.subr.bf16.mxu0 0
        %3158 = vmatpush1.bf16.msra.mxu0 0
        %3159 = vmatprep.subr.bf16.mxu0 0
        %3160 = vmatpush1.bf16.msra.mxu0 0
        %3161 = vmatprep.subr.bf16.mxu0 0
        %3162 = vmatpush1.bf16.msra.mxu0 0
        %3163 = vmatprep.subr.bf16.mxu0 0
        %3164 = vmatpush1.bf16.msra.mxu0 0
        %3165 = vmatprep.subr.bf16.mxu0 0
        %3166 = vmatpush1.bf16.msra.mxu0 0
        %3167 = vmatprep.mubr.bf16.mxu0 0
        %3168 = vmatmul.mubr.bf16.gmra.mrb[0].mxu0 %v3124
        %v3169 = vpop.f32.mrb[0].mxu0
        %v3170 = vadd.f32 0.0, %v3169
        %v3171 = vpop.f32.mrb[0].mxu0
        %v3172 = vpop.f32.mrb[0].mxu0
        %v3173 = vadd.f32 0.0, %v3172
        %v3174 = vpop.f32.mrb[0].mxu0
        %3175 = vmatprep.mubr.bf16.mxu0 0
        %3176 = vmatmul.mubr.bf16.gmra.mrb[0].mxu0 %v3127
        %v3177 = vpop.f32.mrb[0].mxu0
        %v3178 = vadd.f32 0.0, %v3177
        %v3179 = vpop.f32.mrb[0].mxu0
        %v3180 = vpop.f32.mrb[0].mxu0
        %v3181 = vadd.f32 0.0, %v3180
        %v3182 = vpop.f32.mrb[0].mxu0
        %3183 = vmatprep.mubr.bf16.mxu0 0
        %3184 = vmatmul.mubr.bf16.gmra.mrb[0].mxu0 %v3130
        %v3185 = vpop.f32.mrb[0].mxu0
        %v3186 = vadd.f32 0.0, %v3185
        %v3187 = vpop.f32.mrb[0].mxu0
        %v3188 = vpop.f32.mrb[0].mxu0
        %v3189 = vadd.f32 0.0, %v3188
        %v3190 = vpop.f32.mrb[0].mxu0
        %3191 = vmatprep.mubr.bf16.mxu0 0
        %3192 = vmatmul.mubr.bf16.gmra.mrb[0].mxu0 %v3133
        %v3193 = vpop.f32.mrb[0].mxu0
        %v3194 = vadd.f32 0.0, %v3193
        %v3195 = vpop.f32.mrb[0].mxu0
        %v3196 = vpop.f32.mrb[0].mxu0
        %v3197 = vadd.f32 0.0, %v3196
        %v3198 = vpop.f32.mrb[0].mxu0
        %3199 = vdwg.mxu0
        %v3200 = vld [vmem:[%s9 + $0x2] sm:$0x1]
        %v3201 = vlaneseq
        %v3202 = vshrl.u32 %v3201, 7
        %v3203 = vsub.s32 0, %v3202
        %v3204 = vrot.slane %v3200, %v3203
        %3206 = vrot.lane.b32.xlu0 %v3204, 88
        %v3207 = vpop.permute.xlu0 %3206
        %v3209 = vmul.f32 %v3170, %v3207
        %v3210 = vmul.f32 %v3173, %v3207
        %v3211 = vmul.f32 %v3178, %v3207
        %v3212 = vmul.f32 %v3181, %v3207
        %v3213 = vmul.f32 %v3186, %v3207
        %v3214 = vmul.f32 %v3189, %v3207
        %v3215 = vmul.f32 %v3194, %v3207
        %v3216 = vmul.f32 %v3197, %v3207
        %v3217 = vld [vmem:[%s9 + $0x3] sm:$0x1]
        %v3218 = vlaneseq
        %v3219 = vshrl.u32 %v3218, 7
        %v3220 = vsub.s32 0, %v3219
        %v3221 = vrot.slane %v3217, %v3220
        %3223 = vrot.lane.b32.xlu0 %v3221, 88
        %v3224 = vpop.permute.xlu0 %3223
        %v3226 = vadd.f32 %v3209, %v3224
        %v3227 = vadd.f32 %v3210, %v3224
        %v3228 = vadd.f32 %v3211, %v3224
        %v3229 = vadd.f32 %v3212, %v3224
        %v3230 = vadd.f32 %v3213, %v3224
        %v3231 = vadd.f32 %v3214, %v3224
        %v3232 = vadd.f32 %v3215, %v3224
        %v3233 = vadd.f32 %v3216, %v3224
        %v3234 = vmax.f32 %v3226, 0.0
        %v3235 = vmax.f32 %v3227, 0.0
        %v3236 = vmax.f32 %v3228, 0.0
        %v3237 = vmax.f32 %v3229, 0.0
        %v3238 = vmax.f32 %v3230, 0.0
        %v3239 = vmax.f32 %v3231, 0.0
        %v3240 = vmax.f32 %v3232, 0.0
        %v3241 = vmax.f32 %v3233, 0.0
        %v3242 = vmin.f32 %v3234, 6.0
        %v3243 = vmin.f32 %v3235, 6.0
        %v3244 = vmin.f32 %v3236, 6.0
        %v3245 = vmin.f32 %v3237, 6.0
        %v3246 = vmin.f32 %v3238, 6.0
        %v3247 = vmin.f32 %v3239, 6.0
        %v3248 = vmin.f32 %v3240, 6.0
        %v3249 = vmin.f32 %v3241, 6.0
        %3258 = vrot.lane.b32.xlu0 %v3242, 112
        %v3259 = vpop.permute.xlu0 %3258
        %3260 = vrot.lane.b32.xlu0 %v3243, 112
        %v3261 = vpop.permute.xlu0 %3260
        %3262 = vrot.lane.b32.xlu0 %v3244, 112
        %v3263 = vpop.permute.xlu0 %3262
        %3264 = vrot.lane.b32.xlu0 %v3245, 112
        %v3265 = vpop.permute.xlu0 %3264
        %3266 = vrot.lane.b32.xlu0 %v3246, 112
        %v3267 = vpop.permute.xlu0 %3266
        %3268 = vrot.lane.b32.xlu0 %v3247, 112
        %v3269 = vpop.permute.xlu0 %3268
        %3270 = vrot.lane.b32.xlu0 %v3248, 112
        %v3271 = vpop.permute.xlu0 %3270
        %3272 = vrot.lane.b32.xlu0 %v3249, 112
        %v3273 = vpop.permute.xlu0 %3272
        %vm3282 = vcmask 1048448
        %3283 = vst.msk [vmem:[%s353] sm:$0xff] %vm3282, %v3259
        %3284 = vst.msk [vmem:[%s353 + $0x8] sm:$0xff] %vm3282, %v3261
        %3285 = vst.msk [vmem:[%s353 + $0x10] sm:$0xff] %vm3282, %v3263
        %3286 = vst.msk [vmem:[%s353 + $0x18] sm:$0xff] %vm3282, %v3265
        %3287 = vst.msk [vmem:[%s353 + $0x20] sm:$0xff] %vm3282, %v3267
        %3288 = vst.msk [vmem:[%s353 + $0x28] sm:$0xff] %vm3282, %v3269
        %3289 = vst.msk [vmem:[%s353 + $0x30] sm:$0xff] %vm3282, %v3271
        %3290 = vst.msk [vmem:[%s353 + $0x38] sm:$0xff] %vm3282, %v3273
        %s3291 = sand.u32 %s247, 1
        %s3292 = scalar_lea.sflag [#allocation3], %s3291
        %s3293 = sand.u32 %s247, 1
        %s3294 = smul.addr %s3293, 64
        %s3295 = scalar_lea.vmem [#allocation2], %s3294
        // Predicated region
        $region61: #{tpu_custom_call.1} parent=59 // pred_check
          %p3296 = pneg %p257
        $region62: #{tpu_custom_call.1} parent=59 // pred_check_branch
          %3298 = sbr.rel (%p3296) target = $region64
        $region63: #{tpu_custom_call.1} parent=59 // pred_region
          %s3299 = smul.u32 8, %s24
          %s3301 = ssub.s32 1024, 1024
          %3302 = vsyncadd %s3292, %s3301
          %s3303 = smul.addr %s3299, 128
          %s3304 = scalar_lea.hbm %s10, %s3303
          %s3305 = sshll.u32 %s3295, 4
          %s3306 = int_to_ptr.vmem [resolvable:$true] %s3305
          %3311 = dma.vmem_to_hbm [thread:$0]  %s3306, 1024, %s3304, %s3292, 128, 128, 8
        $region64: #{tpu_custom_call.1} parent=59 // pred_fallthru
          _
      $region60: #{tpu_custom_call.1} parent=5 // pred_fallthru
        _
      %p3312 = scmp.le.s32.totalorder 2, %s19
      // Predicated region
      $region65: #{tpu_custom_call.1} parent=5 // pred_check
        %p3313 = pneg %p3312
      $region66: #{tpu_custom_call.1} parent=5 // pred_check_branch
        %3315 = sbr.rel (%p3313) target = $region68
      $region67: #{tpu_custom_call.1} parent=5 // pred_region
        %s3316 = ssub.s32 %s19, 2
        // Predicated region
        $region69: #{tpu_custom_call.1} parent=67 // pred_check
          %p3317 = pneg %p263
        $region70: #{tpu_custom_call.1} parent=67 // pred_check_branch
          %3319 = sbr.rel (%p3317) target = $region72
        $region71: #{tpu_custom_call.1} parent=67 // pred_region
          %s3320 = sand.u32 %s248, 1
          %s3321 = scalar_lea.sflag [#allocation3], %s3320
          %s3322 = sand.u32 %s248, 1
          %s3323 = smul.addr %s3322, 64
          %s3324 = scalar_lea.vmem [#allocation2], %s3323
          %3325 = dma.done %s3321, 1024
        $region72: #{tpu_custom_call.1} parent=67 // pred_fallthru
          _
      $region68: #{tpu_custom_call.1} parent=5 // pred_fallthru
        _
    $region6: #{tpu_custom_call.1} parent=1 // loop_footer
      %s23 = sadd.s32 1, %s19
    $region7: #{tpu_custom_call.1} parent=1 // loop_footer_branch
      %18 = sbr.rel target = $region3
    $region8: #{tpu_custom_call.1} parent=1 // loop_exit
      _
    %3326 = vsyncpa [#allocation3], 1
    %s3327 = scalar_lea.sflag [#allocation3], 1
    %3328 = vsyncpa %s3327, 1

</llo_original>
